<compile_context>
chip_gen: v7x
topology: tpu7x:2x2x1
jax: 0.10.0
libtpu: 0.0.40
codegen_flags: <defaults>
</compile_context>

<pallas_src>
import jax
import jax.numpy as jnp
from jax.experimental import pallas as pl
from jax.experimental.pallas import tpu as pltpu

TM = 256        # row tile: matches the 256x256 MXU on v6e/v7x; fine on v5e too
CVIT_PAD = 256  # vit channels padded to a common 256 so per-branch weights stack


# ---------------------------------------------------------------------------
# Pallas kernel:  out = swish(conv @ Wc[b] + vit @ Wv[b] + bias[b]) + conv
# (one 256-row pixel tile per grid step; b = branch id from scalar prefetch)
# ---------------------------------------------------------------------------
def _fused_kernel(bid_ref, conv_ref, vit_ref, wc_ref, wv_ref, b_ref, o_ref):
    del bid_ref                                   # only used by the index_maps
    conv = conv_ref[...]                          # [TM, 512] f32 (exact residual path)
    z = jnp.dot(conv.astype(jnp.bfloat16), wc_ref[0],
                preferred_element_type=jnp.float32)
    z = z + jnp.dot(vit_ref[...].astype(jnp.bfloat16), wv_ref[0],
                    preferred_element_type=jnp.float32)
    z = z + b_ref[0]                              # folded conv-bias + BN shift (f32)
    y = z * jax.nn.sigmoid(z)                     # Swish in f32 (EUP)
    o_ref[...] = (y + conv).astype(o_ref.dtype)   # residual add in f32


def fused_decoder(conv_all, vit_all, wc_all, wv_all, b_all, branch_ids):
    """conv_all:[Mp,512]f32  vit_all:[Mp,256]f32  wc:[3,512,512]bf16
    wv:[3,256,512]bf16  b:[3,1,512]f32  branch_ids:[Mp//TM]i32  -> [Mp,512]f32."""
    mp, cconv = conv_all.shape
    cvit = vit_all.shape[1]
    cout = wc_all.shape[2]
    return pl.pallas_call(
        _fused_kernel,
        out_shape=jax.ShapeDtypeStruct((mp, cout), jnp.float32),
        grid_spec=pltpu.PrefetchScalarGridSpec(
            num_scalar_prefetch=1,
            grid=(mp // TM,),
            in_specs=[
                pl.BlockSpec((TM, cconv), lambda i, bid: (i, 0)),              # conv rows
                pl.BlockSpec((TM, cvit), lambda i, bid: (i, 0)),               # vit rows
                pl.BlockSpec((1, cconv, cout), lambda i, bid: (bid[i], 0, 0)),  # Wc[b]
                pl.BlockSpec((1, cvit, cout), lambda i, bid: (bid[i], 0, 0)),   # Wv[b]
                pl.BlockSpec((1, 1, cout), lambda i, bid: (bid[i], 0, 0)),      # bias[b]
            ],
            out_specs=pl.BlockSpec((TM, cout), lambda i, bid: (i, 0)),
        ),
        compiler_params=pltpu.CompilerParams(
            dimension_semantics=("parallel",)),
    )(branch_ids, conv_all, vit_all, wc_all, wv_all, b_all)


# ---------------------------------------------------------------------------
# Plain-JAX glue
# ---------------------------------------------------------------------------
def nearest_resize_nchw(x, out_h, out_w):
    """F.interpolate(x, size=(out_h, out_w)) with default mode='nearest' (floor)."""
    _, _, h, w = x.shape
    hi = (jnp.arange(out_h) * h) // out_h
    wi = (jnp.arange(out_w) * w) // out_w
    return x[:, :, hi][:, :, :, wi]


def _flatten_nhwc(x):
    n, c, h, w = x.shape
    return jnp.transpose(x, (0, 2, 3, 1)).reshape(n * h * w, c)


def fold_conv_bn(conv_w, conv_b, gamma, beta, mean, var, eps=1e-5):
    """conv_w:[Cin,Cout].  Fold eval-mode BN into the 1x1 conv."""
    scale = gamma / jnp.sqrt(var + eps)
    return conv_w * scale[None, :], (conv_b - mean) * scale + beta


@jax.jit
def _forward(params, conv21, conv31, conv41, vit1, vit2, vit3):
    wc_all, wv_all, b_all = params
    # branch order matches the stacked weights: 0 -> out1, 1 -> out2, 2 -> out3
    branches = ((conv41, vit1), (conv31, vit2), (conv21, vit3))

    conv_rows, vit_rows, bids, metas = [], [], [], []
    for bidx, (cf, vf) in enumerate(branches):
        n, c, h, w = cf.shape
        m = n * h * w
        m_pad = ((m + TM - 1) // TM) * TM
        cflat = _flatten_nhwc(cf)                                   # [m, 512] f32
        vflat = _flatten_nhwc(nearest_resize_nchw(vf, h, w))        # [m, cvit] f32
        conv_rows.append(jnp.pad(cflat, ((0, m_pad - m), (0, 0))))
        vit_rows.append(jnp.pad(vflat, ((0, m_pad - m),
                                        (0, CVIT_PAD - vflat.shape[1]))))
        bids.extend([bidx] * (m_pad // TM))
        metas.append((n, c, h, w, m, m_pad))

    conv_all = jnp.concatenate(conv_rows, axis=0)
    vit_all = jnp.concatenate(vit_rows, axis=0)
    branch_ids = jnp.asarray(bids, dtype=jnp.int32)

    out_all = fused_decoder(conv_all, vit_all, wc_all, wv_all, b_all, branch_ids)

    outs, off = [], 0
    for n, c, h, w, m, m_pad in metas:
        o = out_all[off:off + m].reshape(n, h, w, c).transpose(0, 3, 1, 2)
        outs.append(o)
        off += m_pad
    return [outs[2], outs[1], outs[0]]          # [out3, out2, out1]


class FPNDecoderV2Pallas:
    """JAX/Pallas port of FPNDecoderV2 (feat_chs[6] == 512, eval-mode BN)."""

    COUT = 512
    CVITS = (256, 128, 64)      # channels of vit1 / vit2 / vit3

    def __init__(self, key):
        def make_branch(k, cin, cout=self.COUT):
            k1, k2, k3, k4, k5 = jax.random.split(k, 5)
            conv_w = 0.02 * jax.random.normal(k1, (cin, cout), jnp.float32)
            conv_b = 0.02 * jax.random.normal(k2, (cout,), jnp.float32)
            gamma = 1.0 + 0.1 * jax.random.normal(k3, (cout,), jnp.float32)
            beta = 0.1 * jax.random.normal(k4, (cout,), jnp.float32)
            mean = 0.1 * jax.random.normal(k5, (cout,), jnp.float32)
            var = jnp.ones((cout,), jnp.float32)
            return fold_conv_bn(conv_w, conv_b, gamma, beta, mean, var)

        ws, bs = [], []
        for k, cvit in zip(jax.random.split(key, 3), self.CVITS):
            w, b = make_branch(k, self.COUT + cvit)
            ws.append(w)
            bs.append(b)
        self.ws, self.bs = ws, bs        # full-precision folded params (for reference)

        # Stacked bf16 weights for the merged kernel; vit rows zero-padded to 256.
        wc_all = jnp.stack([w[: self.COUT] for w in ws]).astype(jnp.bfloat16)
        wv_all = jnp.stack([
            jnp.pad(w[self.COUT:],
                    ((0, CVIT_PAD - (w.shape[0] - self.COUT)), (0, 0)))
            for w in ws]).astype(jnp.bfloat16)
        b_all = jnp.stack(bs).reshape(3, 1, self.COUT)
        self.params = (wc_all, wv_all, b_all)

    def __call__(self, conv21, conv31, conv41, vit1, vit2, vit3):
        return _forward(self.params, conv21, conv31, conv41, vit1, vit2, vit3)


# ---------------------------------------------------------------------------
# Pure-JAX f32 reference (same eval-mode BN fold) for the correctness check.
# ---------------------------------------------------------------------------
def _ref_branch(conv_feat, vit_feat, w, b):
    n, c, h, wd = conv_feat.shape
    vit_r = nearest_resize_nchw(vit_feat, h, wd)
    x = jnp.concatenate([conv_feat, vit_r], axis=1)
    xf = jnp.transpose(x, (0, 2, 3, 1)).reshape(-1, x.shape[1])
    z = xf @ w + b
    y = z * jax.nn.sigmoid(z)
    return y.reshape(n, h, wd, -1).transpose(0, 3, 1, 2) + conv_feat


if __name__ == "__main__":
    key = jax.random.PRNGKey(0)
    k_params, k_in = jax.random.split(key)
    ks = jax.random.split(k_in, 6)

    N = 2
    # FPN-style features (512 ch each) + ViT features (256/128/64 ch) -> concat
    # channels 768 / 640 / 576 as required by the 1x1 convs.
    conv21 = jax.random.normal(ks[0], (N, 512, 16, 16), jnp.float32)
    conv31 = jax.random.normal(ks[1], (N, 512, 8, 8), jnp.float32)
    conv41 = jax.random.normal(ks[2], (N, 512, 4, 4), jnp.float32)
    vit1 = jax.random.normal(ks[3], (N, 256, 3, 3), jnp.float32)
    vit2 = jax.random.normal(ks[4], (N, 128, 3, 3), jnp.float32)
    vit3 = jax.random.normal(ks[5], (N, 64, 3, 3), jnp.float32)

    model = FPNDecoderV2Pallas(k_params)
    outs = model(conv21, conv31, conv41, vit1, vit2, vit3)
    outs = jax.block_until_ready(outs)

    # Residual path is exact f32 now; only the bf16-rounded matmul operands
    # contribute error, so the tolerance is tightened vs. the previous version.
    refs = [
        _ref_branch(conv21, vit3, model.ws[2], model.bs[2]),
        _ref_branch(conv31, vit2, model.ws[1], model.bs[1]),
        _ref_branch(conv41, vit1, model.ws[0], model.bs[0]),
    ]
    for o, r in zip(outs, refs):
        assert o.shape == r.shape and o.dtype == r.dtype
        err = float(jnp.max(jnp.abs(o - r)))
        assert jnp.allclose(o, r, atol=1e-2, rtol=1e-2), err

    print("KERNEL_OK")
</pallas_src>

<mosaic_0001>
module attributes {stable_mosaic.version = 11 : i64} {
  func.func @_fused_kernel(%arg0: i32, %arg1: memref<4xi32, #tpu.memory_space<smem>>, %arg2: memref<256x512xf32, #tpu.memory_space<vmem>>, %arg3: memref<256x256xf32, #tpu.memory_space<vmem>>, %arg4: memref<1x512x512xbf16, #tpu.memory_space<vmem>>, %arg5: memref<1x256x512xbf16, #tpu.memory_space<vmem>>, %arg6: memref<1x1x512xf32, #tpu.memory_space<vmem>>, %arg7: memref<256x512xf32, #tpu.memory_space<vmem>>) attributes {dimension_semantics = [#tpu.dimension_semantics<parallel>], iteration_bounds = array<i64: 4>, scalar_prefetch = 1 : i64, scratch_operands = 0 : i64, tpu.core_type = #tpu.core_type<tc>, window_params = [{transform_indices = @transform_0, window_bounds = array<i64: 256, 512>}, {transform_indices = @transform_1, window_bounds = array<i64: 256, 256>}, {transform_indices = @transform_2, window_bounds = array<i64: 1, 512, 512>}, {transform_indices = @transform_3, window_bounds = array<i64: 1, 256, 512>}, {transform_indices = @transform_4, window_bounds = array<i64: 1, 1, 512>}, {transform_indices = @transform_5, window_bounds = array<i64: 256, 512>}]} {
    %c0 = arith.constant 0 : index
    %c0_0 = arith.constant 0 : index
    %0 = vector.load %arg2[%c0, %c0_0] : memref<256x512xf32, #tpu.memory_space<vmem>>, vector<256x512xf32>
    %1 = arith.truncf %0 : vector<256x512xf32> to vector<256x512xbf16>
    %c0_1 = arith.constant 0 : index
    %c0_2 = arith.constant 0 : index
    %c0_3 = arith.constant 0 : index
    %2 = vector.load %arg4[%c0_1, %c0_2, %c0_3] : memref<1x512x512xbf16, #tpu.memory_space<vmem>>, vector<1x512x512xbf16>
    %3 = vector.shape_cast %2 : vector<1x512x512xbf16> to vector<512x512xbf16>
    %cst = arith.constant dense<0.000000e+00> : vector<256x512xf32>
    %4 = tpu.matmul %1, %3, %cst {dimension_numbers = #tpu.dot_dimension_numbers<[1], [0], [0], [1], [0, 0, 1, 1], [], []>} : vector<256x512xbf16>, vector<512x512xbf16>, vector<256x512xf32> -> vector<256x512xf32>
    %c0_4 = arith.constant 0 : index
    %c0_5 = arith.constant 0 : index
    %5 = vector.load %arg3[%c0_4, %c0_5] : memref<256x256xf32, #tpu.memory_space<vmem>>, vector<256x256xf32>
    %6 = arith.truncf %5 : vector<256x256xf32> to vector<256x256xbf16>
    %c0_6 = arith.constant 0 : index
    %c0_7 = arith.constant 0 : index
    %c0_8 = arith.constant 0 : index
    %7 = vector.load %arg5[%c0_6, %c0_7, %c0_8] : memref<1x256x512xbf16, #tpu.memory_space<vmem>>, vector<1x256x512xbf16>
    %8 = vector.shape_cast %7 : vector<1x256x512xbf16> to vector<256x512xbf16>
    %cst_9 = arith.constant dense<0.000000e+00> : vector<256x512xf32>
    %9 = tpu.matmul %6, %8, %cst_9 {dimension_numbers = #tpu.dot_dimension_numbers<[1], [0], [0], [1], [0, 0, 1, 1], [], []>} : vector<256x256xbf16>, vector<256x512xbf16>, vector<256x512xf32> -> vector<256x512xf32>
    %10 = arith.addf %4, %9 : vector<256x512xf32>
    %c0_10 = arith.constant 0 : index
    %c0_11 = arith.constant 0 : index
    %c0_12 = arith.constant 0 : index
    %11 = vector.load %arg6[%c0_10, %c0_11, %c0_12] : memref<1x1x512xf32, #tpu.memory_space<vmem>>, vector<1x1x512xf32>
    %12 = vector.shape_cast %11 : vector<1x1x512xf32> to vector<1x512xf32>
    %13 = vector.broadcast %12 : vector<1x512xf32> to vector<256x512xf32>
    %14 = arith.addf %10, %13 : vector<256x512xf32>
    %15 = arith.negf %14 : vector<256x512xf32>
    %16 = math.exp %15 : vector<256x512xf32>
    %cst_13 = arith.constant 1.000000e+00 : f32
    %17 = vector.broadcast %cst_13 : f32 to vector<256x512xf32>
    %18 = arith.addf %17, %16 : vector<256x512xf32>
    %19 = arith.divf %17, %18 : vector<256x512xf32>
    %20 = arith.mulf %14, %19 : vector<256x512xf32>
    %21 = arith.addf %20, %0 : vector<256x512xf32>
    %c0_14 = arith.constant 0 : index
    %c0_15 = arith.constant 0 : index
    %22 = vector.load %arg7[%c0_14, %c0_15] : memref<256x512xf32, #tpu.memory_space<vmem>>, vector<256x512xf32>
    tpu.vector_store %arg7[%c0_14, %c0_15], %21 {strides = array<i32>} : memref<256x512xf32, #tpu.memory_space<vmem>>, vector<256x512xf32>,
    return
  }
  func.func @transform_0(%arg0: i32, %arg1: memref<4xi32, #tpu.memory_space<smem>>) -> (i32, i32) {
    %c0_i32 = arith.constant 0 : i32
    %c0_i32_0 = arith.constant 0 : i32
    return %arg0, %c0_i32 : i32, i32
  }
  func.func @transform_1(%arg0: i32, %arg1: memref<4xi32, #tpu.memory_space<smem>>) -> (i32, i32) {
    %c0_i32 = arith.constant 0 : i32
    %c0_i32_0 = arith.constant 0 : i32
    return %arg0, %c0_i32 : i32, i32
  }
  func.func @transform_2(%arg0: i32, %arg1: memref<4xi32, #tpu.memory_space<smem>>) -> (i32, i32, i32) {
    %0 = arith.index_cast %arg0 : i32 to index
    %1 = memref.load %arg1[%0] : memref<4xi32, #tpu.memory_space<smem>>
    %c0_i32 = arith.constant 0 : i32
    %c0_i32_0 = arith.constant 0 : i32
    %c0_i32_1 = arith.constant 0 : i32
    return %1, %c0_i32, %c0_i32_0 : i32, i32, i32
  }
  func.func @transform_3(%arg0: i32, %arg1: memref<4xi32, #tpu.memory_space<smem>>) -> (i32, i32, i32) {
    %0 = arith.index_cast %arg0 : i32 to index
    %1 = memref.load %arg1[%0] : memref<4xi32, #tpu.memory_space<smem>>
    %c0_i32 = arith.constant 0 : i32
    %c0_i32_0 = arith.constant 0 : i32
    %c0_i32_1 = arith.constant 0 : i32
    return %1, %c0_i32, %c0_i32_0 : i32, i32, i32
  }
  func.func @transform_4(%arg0: i32, %arg1: memref<4xi32, #tpu.memory_space<smem>>) -> (i32, i32, i32) {
    %0 = arith.index_cast %arg0 : i32 to index
    %1 = memref.load %arg1[%0] : memref<4xi32, #tpu.memory_space<smem>>
    %c0_i32 = arith.constant 0 : i32
    %c0_i32_0 = arith.constant 0 : i32
    %c0_i32_1 = arith.constant 0 : i32
    return %1, %c0_i32, %c0_i32_0 : i32, i32, i32
  }
  func.func @transform_5(%arg0: i32, %arg1: memref<4xi32, #tpu.memory_space<smem>>) -> (i32, i32) {
    %c0_i32 = arith.constant 0 : i32
    %c0_i32_0 = arith.constant 0 : i32
    return %arg0, %c0_i32 : i32, i32
  }
}

</mosaic_0001>

<llo_original>
// kernel: _forward.1
$region0: #{_forward.1}
  #allocation0 [shape = 'u32[]', space=smem, size = 0x4, offset = 0x4, fixed_abs, tag = 'smem constant byte address 0x4 - core index']
  #allocation1 [shape = 'u32[144,128]{1,0:T(1,128)}', space=vmem, size = 0x12000, scoped, tag = 'internal scratch']
  #allocation2 [shape = 's32[1]{0}', space=sflag, size = 0x4, scoped, tag = 'scoped memory for _forward.1']
  #allocation3 [shape = 'u8[512]{0}', space=smem, size = 0x200, scoped, tag = 'prefetched SMEM operand 0']
  %s0 = inlined_call_operand.vmem [shape: s32[4], index: 0, kind: input, shape index: {}]
  %s1 = inlined_call_operand.vmem [shape: f32[1024,512], index: 1, kind: input, shape index: {}]
  %s2 = inlined_call_operand.vmem [shape: f32[1024,256], index: 2, kind: input, shape index: {}]
  %s3 = inlined_call_operand.vmem [shape: bf16[3,512,512], index: 3, kind: input, shape index: {}]
  %s4 = inlined_call_operand.vmem [shape: bf16[3,256,512], index: 4, kind: input, shape index: {}]
  %s5 = inlined_call_operand.vmem [shape: f32[3,1,512], index: 5, kind: input, shape index: {}]
  %s6 = inlined_call_operand.vmem [shape: f32[1024,512], index: 6, kind: output, shape index: {}]
  %s7 = sld [smem:[#allocation0]]
  $region53: #{_forward.1} parent=0
    _
  %s9 = ssub.s32 1, %s7
  %s10 = scalar_select 0, %s9, %s7
  %s11 = sshll.u32 %s0, 4
  %s12 = int_to_ptr.vmem [resolvable:$true] %s11
  %14 = dma.vmem_to_smem %s12, 16, [#allocation3], [#allocation2]
  %15 = dma.done [#allocation2], 16
  %16 = sfence
  loop: start=0, step=1, limit=6
  $region2: #{_forward.1} parent=0 // loop_pre_header
    _
  $region3: #{_forward.1} parent=0 // loop_header
    %s18 = sphi 0, %s22
    %p19 = scmp.ge.s32.totalorder %s18, 6
    %s28 = sphi 0, %s30
    %s31 = sphi 0, %s28
    %s32 = sphi 0, %s31
    %s48 = sphi 0, %s32
    %s54 = sphi 0, %s56
    %s57 = sphi 0, %s54
    %s58 = sphi 0, %s57
    %s74 = sphi 0, %s58
    %s82 = sphi 0, %s84
    %s85 = sphi 0, %s82
    %s86 = sphi 0, %s85
    %s102 = sphi 0, %s86
    %s110 = sphi 0, %s112
    %s113 = sphi 0, %s110
    %s114 = sphi 0, %s113
    %s130 = sphi 0, %s114
    %s138 = sphi 0, %s140
    %s141 = sphi 0, %s138
    %s142 = sphi 0, %s141
    %s158 = sphi 0, %s142
    %s164 = sphi 0, %s166
    %s167 = sphi 0, %s164
    %s168 = sphi 0, %s167
    %s184 = sphi 0, %s168
  $region4: #{_forward.1} parent=0 // loop_header_branch
    %21 = sbr.rel (%p19) target = $region8
  $region5: #{_forward.1} parent=0 // loop_body
    %s23 = ssub.s32 %s18, 1
    %s24 = ssub.s32 %s18, 2
    %s25 = sadd.s32 %s18, 1
    %s26 = ssub.s32 %s18, %s25
    %p27 = scmp.eq.s32.totalorder %s26, 0
    %s29 = sadd.s32 %s28, 1
    %s30 = scalar_select %p27, %s28, %s29
    %p33 = pneg %p27
    %p34 = scmp.eq.s32.totalorder %s18, 3
    %p35 = por %p33, %p34
    %p36 = scmp.ne.s32.totalorder %s28, %s31
    %p37 = scmp.eq.s32.totalorder %s18, 0
    %p38 = por %p36, %p37
    %p39 = scmp.ne.s32.totalorder %s28, %s31
    %p40 = scmp.eq.s32.totalorder %s23, 3
    %p41 = por %p39, %p40
    %p42 = scmp.ne.s32.totalorder %s31, %s32
    %p43 = scmp.eq.s32.totalorder %s23, 0
    %p44 = por %p42, %p43
    %p45 = scmp.ne.s32.totalorder %s31, %s32
    %p46 = scmp.eq.s32.totalorder %s24, 3
    %p47 = por %p45, %p46
    %p49 = scmp.ne.s32.totalorder %s32, %s48
    %p50 = scmp.eq.s32.totalorder %s24, 0
    %p51 = por %p49, %p50
    %s52 = ssub.s32 %s18, %s25
    %p53 = scmp.eq.s32.totalorder %s52, 0
    %s55 = sadd.s32 %s54, 1
    %s56 = scalar_select %p53, %s54, %s55
    %p59 = pneg %p53
    %p60 = scmp.eq.s32.totalorder %s18, 3
    %p61 = por %p59, %p60
    %p62 = scmp.ne.s32.totalorder %s54, %s57
    %p63 = scmp.eq.s32.totalorder %s18, 0
    %p64 = por %p62, %p63
    %p65 = scmp.ne.s32.totalorder %s54, %s57
    %p66 = scmp.eq.s32.totalorder %s23, 3
    %p67 = por %p65, %p66
    %p68 = scmp.ne.s32.totalorder %s57, %s58
    %p69 = scmp.eq.s32.totalorder %s23, 0
    %p70 = por %p68, %p69
    %p71 = scmp.ne.s32.totalorder %s57, %s58
    %p72 = scmp.eq.s32.totalorder %s24, 3
    %p73 = por %p71, %p72
    %p75 = scmp.ne.s32.totalorder %s58, %s74
    %p76 = scmp.eq.s32.totalorder %s24, 0
    %p77 = por %p75, %p76
    %s78 = sld [smem:[#allocation3 + %s18]]
    %s79 = sld [smem:[#allocation3 + %s25]]
    %s80 = ssub.s32 %s78, %s79
    %p81 = scmp.eq.s32.totalorder %s80, 0
    %s83 = sadd.s32 %s82, 1
    %s84 = scalar_select %p81, %s82, %s83
    %p87 = pneg %p81
    %p88 = scmp.eq.s32.totalorder %s18, 3
    %p89 = por %p87, %p88
    %p90 = scmp.ne.s32.totalorder %s82, %s85
    %p91 = scmp.eq.s32.totalorder %s18, 0
    %p92 = por %p90, %p91
    %p93 = scmp.ne.s32.totalorder %s82, %s85
    %p94 = scmp.eq.s32.totalorder %s23, 3
    %p95 = por %p93, %p94
    %p96 = scmp.ne.s32.totalorder %s85, %s86
    %p97 = scmp.eq.s32.totalorder %s23, 0
    %p98 = por %p96, %p97
    %p99 = scmp.ne.s32.totalorder %s85, %s86
    %p100 = scmp.eq.s32.totalorder %s24, 3
    %p101 = por %p99, %p100
    %p103 = scmp.ne.s32.totalorder %s86, %s102
    %p104 = scmp.eq.s32.totalorder %s24, 0
    %p105 = por %p103, %p104
    %s106 = sld [smem:[#allocation3 + %s18]]
    %s107 = sld [smem:[#allocation3 + %s25]]
    %s108 = ssub.s32 %s106, %s107
    %p109 = scmp.eq.s32.totalorder %s108, 0
    %s111 = sadd.s32 %s110, 1
    %s112 = scalar_select %p109, %s110, %s111
    %p115 = pneg %p109
    %p116 = scmp.eq.s32.totalorder %s18, 3
    %p117 = por %p115, %p116
    %p118 = scmp.ne.s32.totalorder %s110, %s113
    %p119 = scmp.eq.s32.totalorder %s18, 0
    %p120 = por %p118, %p119
    %p121 = scmp.ne.s32.totalorder %s110, %s113
    %p122 = scmp.eq.s32.totalorder %s23, 3
    %p123 = por %p121, %p122
    %p124 = scmp.ne.s32.totalorder %s113, %s114
    %p125 = scmp.eq.s32.totalorder %s23, 0
    %p126 = por %p124, %p125
    %p127 = scmp.ne.s32.totalorder %s113, %s114
    %p128 = scmp.eq.s32.totalorder %s24, 3
    %p129 = por %p127, %p128
    %p131 = scmp.ne.s32.totalorder %s114, %s130
    %p132 = scmp.eq.s32.totalorder %s24, 0
    %p133 = por %p131, %p132
    %s134 = sld [smem:[#allocation3 + %s18]]
    %s135 = sld [smem:[#allocation3 + %s25]]
    %s136 = ssub.s32 %s134, %s135
    %p137 = scmp.eq.s32.totalorder %s136, 0
    %s139 = sadd.s32 %s138, 1
    %s140 = scalar_select %p137, %s138, %s139
    %p143 = pneg %p137
    %p144 = scmp.eq.s32.totalorder %s18, 3
    %p145 = por %p143, %p144
    %p146 = scmp.ne.s32.totalorder %s138, %s141
    %p147 = scmp.eq.s32.totalorder %s18, 0
    %p148 = por %p146, %p147
    %p149 = scmp.ne.s32.totalorder %s138, %s141
    %p150 = scmp.eq.s32.totalorder %s23, 3
    %p151 = por %p149, %p150
    %p152 = scmp.ne.s32.totalorder %s141, %s142
    %p153 = scmp.eq.s32.totalorder %s23, 0
    %p154 = por %p152, %p153
    %p155 = scmp.ne.s32.totalorder %s141, %s142
    %p156 = scmp.eq.s32.totalorder %s24, 3
    %p157 = por %p155, %p156
    %p159 = scmp.ne.s32.totalorder %s142, %s158
    %p160 = scmp.eq.s32.totalorder %s24, 0
    %p161 = por %p159, %p160
    %s162 = ssub.s32 %s18, %s25
    %p163 = scmp.eq.s32.totalorder %s162, 0
    %s165 = sadd.s32 %s164, 1
    %s166 = scalar_select %p163, %s164, %s165
    %p169 = pneg %p163
    %p170 = scmp.eq.s32.totalorder %s18, 3
    %p171 = por %p169, %p170
    %p172 = scmp.ne.s32.totalorder %s164, %s167
    %p173 = scmp.eq.s32.totalorder %s18, 0
    %p174 = por %p172, %p173
    %p175 = scmp.ne.s32.totalorder %s164, %s167
    %p176 = scmp.eq.s32.totalorder %s23, 3
    %p177 = por %p175, %p176
    %p178 = scmp.ne.s32.totalorder %s167, %s168
    %p179 = scmp.eq.s32.totalorder %s23, 0
    %p180 = por %p178, %p179
    %p181 = scmp.ne.s32.totalorder %s167, %s168
    %p182 = scmp.eq.s32.totalorder %s24, 3
    %p183 = por %p181, %p182
    %p185 = scmp.ne.s32.totalorder %s168, %s184
    %p186 = scmp.eq.s32.totalorder %s24, 0
    %p187 = por %p185, %p186
    %p188 = scmp.le.s32.totalorder 1, %s18
    %p189 = scmp.lt.s32.totalorder %s18, 5
    %p190 = pnand %p188, %p189
    %p191 = pneg %p190
    // Predicated region
    $region9: #{_forward.1} parent=5 // pred_check
      _
    $region10: #{_forward.1} parent=5 // pred_check_branch
      %193 = sbr.rel (%p190) target = $region12
    $region11: #{_forward.1} parent=5 // pred_region
      %s194 = ssub.s32 %s18, 1
    $region12: #{_forward.1} parent=5 // pred_fallthru
      _
    %p195 = scmp.lt.s32.totalorder %s18, 4
    // Predicated region
    $region13: #{_forward.1} parent=5 // pred_check
      %p196 = pneg %p195
    $region14: #{_forward.1} parent=5 // pred_check_branch
      %198 = sbr.rel (%p196) target = $region16
    $region15: #{_forward.1} parent=5 // pred_region
      // Predicated region
      $region17: #{_forward.1} parent=15 // pred_check
        %p199 = pneg %p38
      $region18: #{_forward.1} parent=15 // pred_check_branch
        %201 = sbr.rel (%p199) target = $region20
      $region19: #{_forward.1} parent=15 // pred_region
        %s202 = smul.u32 32, %s18
        %p203 = scmp.lt.s32.totalorder %s202, 127
        %s204 = scalar_select %p203, %s202, 127
        %s205 = smul.addr %s204, 4
        %s206 = smul.addr %s205, 8
        %s207 = scalar_lea.vmem %s1, %s206
        %s208 = smul.u32 32, %s18
      $region20: #{_forward.1} parent=15 // pred_fallthru
        _
      // Predicated region
      $region21: #{_forward.1} parent=15 // pred_check
        %p209 = pneg %p64
      $region22: #{_forward.1} parent=15 // pred_check_branch
        %211 = sbr.rel (%p209) target = $region24
      $region23: #{_forward.1} parent=15 // pred_region
        %s212 = smul.u32 32, %s18
        %p213 = scmp.lt.s32.totalorder %s212, 127
        %s214 = scalar_select %p213, %s212, 127
        %s215 = smul.addr %s214, 2
        %s216 = smul.addr %s215, 8
        %s217 = scalar_lea.vmem %s2, %s216
        %s218 = smul.u32 32, %s18
      $region24: #{_forward.1} parent=15 // pred_fallthru
        _
      // Predicated region
      $region25: #{_forward.1} parent=15 // pred_check
        %p219 = pneg %p92
      $region26: #{_forward.1} parent=15 // pred_check_branch
        %221 = sbr.rel (%p219) target = $region28
      $region27: #{_forward.1} parent=15 // pred_region
        %s222 = sld [smem:[#allocation3 + %s18]]
        %p223 = scmp.lt.s32.totalorder %s222, 2
        %s224 = scalar_select %p223, %s222, 2
        %s225 = smul.addr %s224, 256
        %s226 = smul.addr %s225, 4
        %s227 = scalar_lea.vmem %s3, %s226
        %s228 = sld [smem:[#allocation3 + %s18]]
      $region28: #{_forward.1} parent=15 // pred_fallthru
        _
      // Predicated region
      $region29: #{_forward.1} parent=15 // pred_check
        %p229 = pneg %p120
      $region30: #{_forward.1} parent=15 // pred_check_branch
        %231 = sbr.rel (%p229) target = $region32
      $region31: #{_forward.1} parent=15 // pred_region
        %s232 = sld [smem:[#allocation3 + %s18]]
        %p233 = scmp.lt.s32.totalorder %s232, 2
        %s234 = scalar_select %p233, %s232, 2
        %s235 = smul.addr %s234, 128
        %s236 = smul.addr %s235, 4
        %s237 = scalar_lea.vmem %s4, %s236
        %s238 = sld [smem:[#allocation3 + %s18]]
      $region32: #{_forward.1} parent=15 // pred_fallthru
        _
      // Predicated region
      $region33: #{_forward.1} parent=15 // pred_check
        %p239 = pneg %p148
      $region34: #{_forward.1} parent=15 // pred_check_branch
        %241 = sbr.rel (%p239) target = $region36
      $region35: #{_forward.1} parent=15 // pred_region
        %s242 = sld [smem:[#allocation3 + %s18]]
        %p243 = scmp.lt.s32.totalorder %s242, 2
        %s244 = scalar_select %p243, %s242, 2
        %s245 = smul.addr %s244, 4
        %s246 = scalar_lea.vmem %s5, %s245
        %s247 = sld [smem:[#allocation3 + %s18]]
      $region36: #{_forward.1} parent=15 // pred_fallthru
        _
    $region16: #{_forward.1} parent=5 // pred_fallthru
      _
    %p248 = scmp.le.s32.totalorder 1, %s18
    %p249 = scmp.lt.s32.totalorder %s18, 5
    %p250 = pnand %p248, %p249
    %p251 = pneg %p250
    // Predicated region
    $region37: #{_forward.1} parent=5 // pred_check
      _
    $region38: #{_forward.1} parent=5 // pred_check_branch
      %253 = sbr.rel (%p250) target = $region40
    $region39: #{_forward.1} parent=5 // pred_region
      %s254 = ssub.s32 %s18, 1
      %s255 = smul.u32 32, %s23
      %p256 = scmp.lt.s32.totalorder %s255, 127
      %s257 = scalar_select %p256, %s255, 127
      %s258 = smul.addr %s257, 4
      %s259 = smul.addr %s258, 8
      %s260 = scalar_lea.vmem %s1, %s259
      %p261 = pneg %p44
      %p262 = pneg %p41
      %s263 = smul.u32 32, %s23
      %p264 = scmp.lt.s32.totalorder %s263, 127
      %s265 = scalar_select %p264, %s263, 127
      %s266 = smul.addr %s265, 2
      %s267 = smul.addr %s266, 8
      %s268 = scalar_lea.vmem %s2, %s267
      %p269 = pneg %p70
      %p270 = pneg %p67
      %s271 = sld [smem:[#allocation3 + %s23]]
      %p272 = scmp.lt.s32.totalorder %s271, 2
      %s273 = scalar_select %p272, %s271, 2
      %s274 = smul.addr %s273, 256
      %s275 = smul.addr %s274, 4
      %s276 = scalar_lea.vmem %s3, %s275
      %p277 = pneg %p98
      %p278 = pneg %p95
      %s279 = sld [smem:[#allocation3 + %s23]]
      %p280 = scmp.lt.s32.totalorder %s279, 2
      %s281 = scalar_select %p280, %s279, 2
      %s282 = smul.addr %s281, 128
      %s283 = smul.addr %s282, 4
      %s284 = scalar_lea.vmem %s4, %s283
      %p285 = pneg %p126
      %p286 = pneg %p123
      %s287 = sld [smem:[#allocation3 + %s23]]
      %p288 = scmp.lt.s32.totalorder %s287, 2
      %s289 = scalar_select %p288, %s287, 2
      %s290 = smul.addr %s289, 4
      %s291 = scalar_lea.vmem %s5, %s290
      %p292 = pneg %p154
      %p293 = pneg %p151
      %p294 = pneg %p180
      %p295 = pneg %p177
      %s296 = smul.u32 32, %s23
      %p297 = scmp.lt.s32.totalorder %s296, 127
      %s298 = scalar_select %p297, %s296, 127
      %s299 = smul.addr %s298, 4
      %s300 = smul.addr %s299, 8
      %s301 = scalar_lea.vmem %s6, %s300
      %s302 = smul.u32 32, %s23
      %p303 = scmp.lt.s32.totalorder %s302, 127
      %s304 = scalar_select %p303, %s302, 127
      %s305 = smul.addr %s304, 4
      %s306 = smul.addr %s305, 8
      %s307 = scalar_lea.vmem %s1, %s306
      %s308 = smul.u32 32, %s23
      %s309 = smul.u32 32, %s23
      %p310 = scmp.lt.s32.totalorder %s309, 127
      %s311 = scalar_select %p310, %s309, 127
      %s312 = smul.addr %s311, 2
      %s313 = smul.addr %s312, 8
      %s314 = scalar_lea.vmem %s2, %s313
      %s315 = smul.u32 32, %s23
      %s316 = sld [smem:[#allocation3 + %s23]]
      %p317 = scmp.lt.s32.totalorder %s316, 2
      %s318 = scalar_select %p317, %s316, 2
      %s319 = smul.addr %s318, 256
      %s320 = smul.addr %s319, 4
      %s321 = scalar_lea.vmem %s3, %s320
      %s322 = sld [smem:[#allocation3 + %s23]]
      %s323 = sld [smem:[#allocation3 + %s23]]
      %p324 = scmp.lt.s32.totalorder %s323, 2
      %s325 = scalar_select %p324, %s323, 2
      %s326 = smul.addr %s325, 128
      %s327 = smul.addr %s326, 4
      %s328 = scalar_lea.vmem %s4, %s327
      %s329 = sld [smem:[#allocation3 + %s23]]
      %s330 = sld [smem:[#allocation3 + %s23]]
      %p331 = scmp.lt.s32.totalorder %s330, 2
      %s332 = scalar_select %p331, %s330, 2
      %s333 = smul.addr %s332, 4
      %s334 = scalar_lea.vmem %s5, %s333
      %s335 = sld [smem:[#allocation3 + %s23]]
      %s336 = smul.u32 32, %s23
      %p337 = scmp.lt.s32.totalorder %s336, 127
      %s338 = scalar_select %p337, %s336, 127
      %s339 = smul.addr %s338, 4
      %s340 = smul.addr %s339, 8
      %s341 = scalar_lea.vmem %s6, %s340
      %s342 = smul.u32 32, %s23
      %v343 = vld [vmem:[%s307] sm:$0xff]
      %v344 = vld [vmem:[%s307 + $0x8] sm:$0xff]
      %v345 = vld [vmem:[%s307 + $0x10] sm:$0xff]
      %v346 = vld [vmem:[%s307 + $0x18] sm:$0xff]
      %v347 = vld [vmem:[%s307 + $0x20] sm:$0xff]
      %v348 = vld [vmem:[%s307 + $0x28] sm:$0xff]
      %v349 = vld [vmem:[%s307 + $0x30] sm:$0xff]
      %v350 = vld [vmem:[%s307 + $0x38] sm:$0xff]
      %v351 = vld [vmem:[%s307 + $0x40] sm:$0xff]
      %v352 = vld [vmem:[%s307 + $0x48] sm:$0xff]
      %v353 = vld [vmem:[%s307 + $0x50] sm:$0xff]
      %v354 = vld [vmem:[%s307 + $0x58] sm:$0xff]
      %v355 = vld [vmem:[%s307 + $0x60] sm:$0xff]
      %v356 = vld [vmem:[%s307 + $0x68] sm:$0xff]
      %v357 = vld [vmem:[%s307 + $0x70] sm:$0xff]
      %v358 = vld [vmem:[%s307 + $0x78] sm:$0xff]
      %v359 = vld [vmem:[%s307 + $0x80] sm:$0xff]
      %v360 = vld [vmem:[%s307 + $0x88] sm:$0xff]
      %v361 = vld [vmem:[%s307 + $0x90] sm:$0xff]
      %v362 = vld [vmem:[%s307 + $0x98] sm:$0xff]
      %v363 = vld [vmem:[%s307 + $0xa0] sm:$0xff]
      %v364 = vld [vmem:[%s307 + $0xa8] sm:$0xff]
      %v365 = vld [vmem:[%s307 + $0xb0] sm:$0xff]
      %v366 = vld [vmem:[%s307 + $0xb8] sm:$0xff]
      %v367 = vld [vmem:[%s307 + $0xc0] sm:$0xff]
      %v368 = vld [vmem:[%s307 + $0xc8] sm:$0xff]
      %v369 = vld [vmem:[%s307 + $0xd0] sm:$0xff]
      %v370 = vld [vmem:[%s307 + $0xd8] sm:$0xff]
      %v371 = vld [vmem:[%s307 + $0xe0] sm:$0xff]
      %v372 = vld [vmem:[%s307 + $0xe8] sm:$0xff]
      %v373 = vld [vmem:[%s307 + $0xf0] sm:$0xff]
      %v374 = vld [vmem:[%s307 + $0xf8] sm:$0xff]
      %v375 = vld [vmem:[%s307 + $0x100] sm:$0xff]
      %v376 = vld [vmem:[%s307 + $0x108] sm:$0xff]
      %v377 = vld [vmem:[%s307 + $0x110] sm:$0xff]
      %v378 = vld [vmem:[%s307 + $0x118] sm:$0xff]
      %v379 = vld [vmem:[%s307 + $0x120] sm:$0xff]
      %v380 = vld [vmem:[%s307 + $0x128] sm:$0xff]
      %v381 = vld [vmem:[%s307 + $0x130] sm:$0xff]
      %v382 = vld [vmem:[%s307 + $0x138] sm:$0xff]
      %v383 = vld [vmem:[%s307 + $0x140] sm:$0xff]
      %v384 = vld [vmem:[%s307 + $0x148] sm:$0xff]
      %v385 = vld [vmem:[%s307 + $0x150] sm:$0xff]
      %v386 = vld [vmem:[%s307 + $0x158] sm:$0xff]
      %v387 = vld [vmem:[%s307 + $0x160] sm:$0xff]
      %v388 = vld [vmem:[%s307 + $0x168] sm:$0xff]
      %v389 = vld [vmem:[%s307 + $0x170] sm:$0xff]
      %v390 = vld [vmem:[%s307 + $0x178] sm:$0xff]
      %v391 = vld [vmem:[%s307 + $0x180] sm:$0xff]
      %v392 = vld [vmem:[%s307 + $0x188] sm:$0xff]
      %v393 = vld [vmem:[%s307 + $0x190] sm:$0xff]
      %v394 = vld [vmem:[%s307 + $0x198] sm:$0xff]
      %v395 = vld [vmem:[%s307 + $0x1a0] sm:$0xff]
      %v396 = vld [vmem:[%s307 + $0x1a8] sm:$0xff]
      %v397 = vld [vmem:[%s307 + $0x1b0] sm:$0xff]
      %v398 = vld [vmem:[%s307 + $0x1b8] sm:$0xff]
      %v399 = vld [vmem:[%s307 + $0x1c0] sm:$0xff]
      %v400 = vld [vmem:[%s307 + $0x1c8] sm:$0xff]
      %v401 = vld [vmem:[%s307 + $0x1d0] sm:$0xff]
      %v402 = vld [vmem:[%s307 + $0x1d8] sm:$0xff]
      %v403 = vld [vmem:[%s307 + $0x1e0] sm:$0xff]
      %v404 = vld [vmem:[%s307 + $0x1e8] sm:$0xff]
      %v405 = vld [vmem:[%s307 + $0x1f0] sm:$0xff]
      %v406 = vld [vmem:[%s307 + $0x1f8] sm:$0xff]
      %v407 = vld [vmem:[%s307 + $0x200] sm:$0xff]
      %v408 = vld [vmem:[%s307 + $0x208] sm:$0xff]
      %v409 = vld [vmem:[%s307 + $0x210] sm:$0xff]
      %v410 = vld [vmem:[%s307 + $0x218] sm:$0xff]
      %v411 = vld [vmem:[%s307 + $0x220] sm:$0xff]
      %v412 = vld [vmem:[%s307 + $0x228] sm:$0xff]
      %v413 = vld [vmem:[%s307 + $0x230] sm:$0xff]
      %v414 = vld [vmem:[%s307 + $0x238] sm:$0xff]
      %v415 = vld [vmem:[%s307 + $0x240] sm:$0xff]
      %v416 = vld [vmem:[%s307 + $0x248] sm:$0xff]
      %v417 = vld [vmem:[%s307 + $0x250] sm:$0xff]
      %v418 = vld [vmem:[%s307 + $0x258] sm:$0xff]
      %v419 = vld [vmem:[%s307 + $0x260] sm:$0xff]
      %v420 = vld [vmem:[%s307 + $0x268] sm:$0xff]
      %v421 = vld [vmem:[%s307 + $0x270] sm:$0xff]
      %v422 = vld [vmem:[%s307 + $0x278] sm:$0xff]
      %v423 = vld [vmem:[%s307 + $0x280] sm:$0xff]
      %v424 = vld [vmem:[%s307 + $0x288] sm:$0xff]
      %v425 = vld [vmem:[%s307 + $0x290] sm:$0xff]
      %v426 = vld [vmem:[%s307 + $0x298] sm:$0xff]
      %v427 = vld [vmem:[%s307 + $0x2a0] sm:$0xff]
      %v428 = vld [vmem:[%s307 + $0x2a8] sm:$0xff]
      %v429 = vld [vmem:[%s307 + $0x2b0] sm:$0xff]
      %v430 = vld [vmem:[%s307 + $0x2b8] sm:$0xff]
      %v431 = vld [vmem:[%s307 + $0x2c0] sm:$0xff]
      %v432 = vld [vmem:[%s307 + $0x2c8] sm:$0xff]
      %v433 = vld [vmem:[%s307 + $0x2d0] sm:$0xff]
      %v434 = vld [vmem:[%s307 + $0x2d8] sm:$0xff]
      %v435 = vld [vmem:[%s307 + $0x2e0] sm:$0xff]
      %v436 = vld [vmem:[%s307 + $0x2e8] sm:$0xff]
      %v437 = vld [vmem:[%s307 + $0x2f0] sm:$0xff]
      %v438 = vld [vmem:[%s307 + $0x2f8] sm:$0xff]
      %v439 = vld [vmem:[%s307 + $0x300] sm:$0xff]
      %v440 = vld [vmem:[%s307 + $0x308] sm:$0xff]
      %v441 = vld [vmem:[%s307 + $0x310] sm:$0xff]
      %v442 = vld [vmem:[%s307 + $0x318] sm:$0xff]
      %v443 = vld [vmem:[%s307 + $0x320] sm:$0xff]
      %v444 = vld [vmem:[%s307 + $0x328] sm:$0xff]
      %v445 = vld [vmem:[%s307 + $0x330] sm:$0xff]
      %v446 = vld [vmem:[%s307 + $0x338] sm:$0xff]
      %v447 = vld [vmem:[%s307 + $0x340] sm:$0xff]
      %v448 = vld [vmem:[%s307 + $0x348] sm:$0xff]
      %v449 = vld [vmem:[%s307 + $0x350] sm:$0xff]
      %v450 = vld [vmem:[%s307 + $0x358] sm:$0xff]
      %v451 = vld [vmem:[%s307 + $0x360] sm:$0xff]
      %v452 = vld [vmem:[%s307 + $0x368] sm:$0xff]
      %v453 = vld [vmem:[%s307 + $0x370] sm:$0xff]
      %v454 = vld [vmem:[%s307 + $0x378] sm:$0xff]
      %v455 = vld [vmem:[%s307 + $0x380] sm:$0xff]
      %v456 = vld [vmem:[%s307 + $0x388] sm:$0xff]
      %v457 = vld [vmem:[%s307 + $0x390] sm:$0xff]
      %v458 = vld [vmem:[%s307 + $0x398] sm:$0xff]
      %v459 = vld [vmem:[%s307 + $0x3a0] sm:$0xff]
      %v460 = vld [vmem:[%s307 + $0x3a8] sm:$0xff]
      %v461 = vld [vmem:[%s307 + $0x3b0] sm:$0xff]
      %v462 = vld [vmem:[%s307 + $0x3b8] sm:$0xff]
      %v463 = vld [vmem:[%s307 + $0x3c0] sm:$0xff]
      %v464 = vld [vmem:[%s307 + $0x3c8] sm:$0xff]
      %v465 = vld [vmem:[%s307 + $0x3d0] sm:$0xff]
      %v466 = vld [vmem:[%s307 + $0x3d8] sm:$0xff]
      %v467 = vld [vmem:[%s307 + $0x3e0] sm:$0xff]
      %v468 = vld [vmem:[%s307 + $0x3e8] sm:$0xff]
      %v469 = vld [vmem:[%s307 + $0x3f0] sm:$0xff]
      %v470 = vld [vmem:[%s307 + $0x3f8] sm:$0xff]
      %v471 = vpack.c.bf16 %v347, %v343
      %v472 = vpack.c.bf16 %v348, %v344
      %v473 = vpack.c.bf16 %v349, %v345
      %v474 = vpack.c.bf16 %v350, %v346
      %v475 = vpack.c.bf16 %v355, %v351
      %v476 = vpack.c.bf16 %v356, %v352
      %v477 = vpack.c.bf16 %v357, %v353
      %v478 = vpack.c.bf16 %v358, %v354
      %v479 = vpack.c.bf16 %v363, %v359
      %v480 = vpack.c.bf16 %v364, %v360
      %v481 = vpack.c.bf16 %v365, %v361
      %v482 = vpack.c.bf16 %v366, %v362
      %v483 = vpack.c.bf16 %v371, %v367
      %v484 = vpack.c.bf16 %v372, %v368
      %v485 = vpack.c.bf16 %v373, %v369
      %v486 = vpack.c.bf16 %v374, %v370
      %v487 = vpack.c.bf16 %v379, %v375
      %v488 = vpack.c.bf16 %v380, %v376
      %v489 = vpack.c.bf16 %v381, %v377
      %v490 = vpack.c.bf16 %v382, %v378
      %v491 = vpack.c.bf16 %v387, %v383
      %v492 = vpack.c.bf16 %v388, %v384
      %v493 = vpack.c.bf16 %v389, %v385
      %v494 = vpack.c.bf16 %v390, %v386
      %v495 = vpack.c.bf16 %v395, %v391
      %v496 = vpack.c.bf16 %v396, %v392
      %v497 = vpack.c.bf16 %v397, %v393
      %v498 = vpack.c.bf16 %v398, %v394
      %v499 = vpack.c.bf16 %v403, %v399
      %v500 = vpack.c.bf16 %v404, %v400
      %v501 = vpack.c.bf16 %v405, %v401
      %v502 = vpack.c.bf16 %v406, %v402
      %v503 = vpack.c.bf16 %v411, %v407
      %v504 = vpack.c.bf16 %v412, %v408
      %v505 = vpack.c.bf16 %v413, %v409
      %v506 = vpack.c.bf16 %v414, %v410
      %v507 = vpack.c.bf16 %v419, %v415
      %v508 = vpack.c.bf16 %v420, %v416
      %v509 = vpack.c.bf16 %v421, %v417
      %v510 = vpack.c.bf16 %v422, %v418
      %v511 = vpack.c.bf16 %v427, %v423
      %v512 = vpack.c.bf16 %v428, %v424
      %v513 = vpack.c.bf16 %v429, %v425
      %v514 = vpack.c.bf16 %v430, %v426
      %v515 = vpack.c.bf16 %v435, %v431
      %v516 = vpack.c.bf16 %v436, %v432
      %v517 = vpack.c.bf16 %v437, %v433
      %v518 = vpack.c.bf16 %v438, %v434
      %v519 = vpack.c.bf16 %v443, %v439
      %v520 = vpack.c.bf16 %v444, %v440
      %v521 = vpack.c.bf16 %v445, %v441
      %v522 = vpack.c.bf16 %v446, %v442
      %v523 = vpack.c.bf16 %v451, %v447
      %v524 = vpack.c.bf16 %v452, %v448
      %v525 = vpack.c.bf16 %v453, %v449
      %v526 = vpack.c.bf16 %v454, %v450
      %v527 = vpack.c.bf16 %v459, %v455
      %v528 = vpack.c.bf16 %v460, %v456
      %v529 = vpack.c.bf16 %v461, %v457
      %v530 = vpack.c.bf16 %v462, %v458
      %v531 = vpack.c.bf16 %v467, %v463
      %v532 = vpack.c.bf16 %v468, %v464
      %v533 = vpack.c.bf16 %v469, %v465
      %v534 = vpack.c.bf16 %v470, %v466
      %v535 = vld [vmem:[%s321] sm:$0xff]
      %v536 = vld [vmem:[%s321 + $0x8] sm:$0xff]
      %v537 = vld [vmem:[%s321 + $0x10] sm:$0xff]
      %v538 = vld [vmem:[%s321 + $0x18] sm:$0xff]
      %v539 = vld [vmem:[%s321 + $0x20] sm:$0xff]
      %v540 = vld [vmem:[%s321 + $0x28] sm:$0xff]
      %v541 = vld [vmem:[%s321 + $0x30] sm:$0xff]
      %v542 = vld [vmem:[%s321 + $0x38] sm:$0xff]
      %v543 = vld [vmem:[%s321 + $0x40] sm:$0xff]
      %v544 = vld [vmem:[%s321 + $0x48] sm:$0xff]
      %v545 = vld [vmem:[%s321 + $0x50] sm:$0xff]
      %v546 = vld [vmem:[%s321 + $0x58] sm:$0xff]
      %v547 = vld [vmem:[%s321 + $0x60] sm:$0xff]
      %v548 = vld [vmem:[%s321 + $0x68] sm:$0xff]
      %v549 = vld [vmem:[%s321 + $0x70] sm:$0xff]
      %v550 = vld [vmem:[%s321 + $0x78] sm:$0xff]
      %v551 = vld [vmem:[%s321 + $0x80] sm:$0xff]
      %v552 = vld [vmem:[%s321 + $0x88] sm:$0xff]
      %v553 = vld [vmem:[%s321 + $0x90] sm:$0xff]
      %v554 = vld [vmem:[%s321 + $0x98] sm:$0xff]
      %v555 = vld [vmem:[%s321 + $0xa0] sm:$0xff]
      %v556 = vld [vmem:[%s321 + $0xa8] sm:$0xff]
      %v557 = vld [vmem:[%s321 + $0xb0] sm:$0xff]
      %v558 = vld [vmem:[%s321 + $0xb8] sm:$0xff]
      %v559 = vld [vmem:[%s321 + $0xc0] sm:$0xff]
      %v560 = vld [vmem:[%s321 + $0xc8] sm:$0xff]
      %v561 = vld [vmem:[%s321 + $0xd0] sm:$0xff]
      %v562 = vld [vmem:[%s321 + $0xd8] sm:$0xff]
      %v563 = vld [vmem:[%s321 + $0xe0] sm:$0xff]
      %v564 = vld [vmem:[%s321 + $0xe8] sm:$0xff]
      %v565 = vld [vmem:[%s321 + $0xf0] sm:$0xff]
      %v566 = vld [vmem:[%s321 + $0xf8] sm:$0xff]
      %v567 = vld [vmem:[%s321 + $0x100] sm:$0xff]
      %v568 = vld [vmem:[%s321 + $0x108] sm:$0xff]
      %v569 = vld [vmem:[%s321 + $0x110] sm:$0xff]
      %v570 = vld [vmem:[%s321 + $0x118] sm:$0xff]
      %v571 = vld [vmem:[%s321 + $0x120] sm:$0xff]
      %v572 = vld [vmem:[%s321 + $0x128] sm:$0xff]
      %v573 = vld [vmem:[%s321 + $0x130] sm:$0xff]
      %v574 = vld [vmem:[%s321 + $0x138] sm:$0xff]
      %v575 = vld [vmem:[%s321 + $0x140] sm:$0xff]
      %v576 = vld [vmem:[%s321 + $0x148] sm:$0xff]
      %v577 = vld [vmem:[%s321 + $0x150] sm:$0xff]
      %v578 = vld [vmem:[%s321 + $0x158] sm:$0xff]
      %v579 = vld [vmem:[%s321 + $0x160] sm:$0xff]
      %v580 = vld [vmem:[%s321 + $0x168] sm:$0xff]
      %v581 = vld [vmem:[%s321 + $0x170] sm:$0xff]
      %v582 = vld [vmem:[%s321 + $0x178] sm:$0xff]
      %v583 = vld [vmem:[%s321 + $0x180] sm:$0xff]
      %v584 = vld [vmem:[%s321 + $0x188] sm:$0xff]
      %v585 = vld [vmem:[%s321 + $0x190] sm:$0xff]
      %v586 = vld [vmem:[%s321 + $0x198] sm:$0xff]
      %v587 = vld [vmem:[%s321 + $0x1a0] sm:$0xff]
      %v588 = vld [vmem:[%s321 + $0x1a8] sm:$0xff]
      %v589 = vld [vmem:[%s321 + $0x1b0] sm:$0xff]
      %v590 = vld [vmem:[%s321 + $0x1b8] sm:$0xff]
      %v591 = vld [vmem:[%s321 + $0x1c0] sm:$0xff]
      %v592 = vld [vmem:[%s321 + $0x1c8] sm:$0xff]
      %v593 = vld [vmem:[%s321 + $0x1d0] sm:$0xff]
      %v594 = vld [vmem:[%s321 + $0x1d8] sm:$0xff]
      %v595 = vld [vmem:[%s321 + $0x1e0] sm:$0xff]
      %v596 = vld [vmem:[%s321 + $0x1e8] sm:$0xff]
      %v597 = vld [vmem:[%s321 + $0x1f0] sm:$0xff]
      %v598 = vld [vmem:[%s321 + $0x1f8] sm:$0xff]
      %v599 = vld [vmem:[%s321 + $0x200] sm:$0xff]
      %v600 = vld [vmem:[%s321 + $0x208] sm:$0xff]
      %v601 = vld [vmem:[%s321 + $0x210] sm:$0xff]
      %v602 = vld [vmem:[%s321 + $0x218] sm:$0xff]
      %v603 = vld [vmem:[%s321 + $0x220] sm:$0xff]
      %v604 = vld [vmem:[%s321 + $0x228] sm:$0xff]
      %v605 = vld [vmem:[%s321 + $0x230] sm:$0xff]
      %v606 = vld [vmem:[%s321 + $0x238] sm:$0xff]
      %v607 = vld [vmem:[%s321 + $0x240] sm:$0xff]
      %v608 = vld [vmem:[%s321 + $0x248] sm:$0xff]
      %v609 = vld [vmem:[%s321 + $0x250] sm:$0xff]
      %v610 = vld [vmem:[%s321 + $0x258] sm:$0xff]
      %v611 = vld [vmem:[%s321 + $0x260] sm:$0xff]
      %v612 = vld [vmem:[%s321 + $0x268] sm:$0xff]
      %v613 = vld [vmem:[%s321 + $0x270] sm:$0xff]
      %v614 = vld [vmem:[%s321 + $0x278] sm:$0xff]
      %v615 = vld [vmem:[%s321 + $0x280] sm:$0xff]
      %v616 = vld [vmem:[%s321 + $0x288] sm:$0xff]
      %v617 = vld [vmem:[%s321 + $0x290] sm:$0xff]
      %v618 = vld [vmem:[%s321 + $0x298] sm:$0xff]
      %v619 = vld [vmem:[%s321 + $0x2a0] sm:$0xff]
      %v620 = vld [vmem:[%s321 + $0x2a8] sm:$0xff]
      %v621 = vld [vmem:[%s321 + $0x2b0] sm:$0xff]
      %v622 = vld [vmem:[%s321 + $0x2b8] sm:$0xff]
      %v623 = vld [vmem:[%s321 + $0x2c0] sm:$0xff]
      %v624 = vld [vmem:[%s321 + $0x2c8] sm:$0xff]
      %v625 = vld [vmem:[%s321 + $0x2d0] sm:$0xff]
      %v626 = vld [vmem:[%s321 + $0x2d8] sm:$0xff]
      %v627 = vld [vmem:[%s321 + $0x2e0] sm:$0xff]
      %v628 = vld [vmem:[%s321 + $0x2e8] sm:$0xff]
      %v629 = vld [vmem:[%s321 + $0x2f0] sm:$0xff]
      %v630 = vld [vmem:[%s321 + $0x2f8] sm:$0xff]
      %v631 = vld [vmem:[%s321 + $0x300] sm:$0xff]
      %v632 = vld [vmem:[%s321 + $0x308] sm:$0xff]
      %v633 = vld [vmem:[%s321 + $0x310] sm:$0xff]
      %v634 = vld [vmem:[%s321 + $0x318] sm:$0xff]
      %v635 = vld [vmem:[%s321 + $0x320] sm:$0xff]
      %v636 = vld [vmem:[%s321 + $0x328] sm:$0xff]
      %v637 = vld [vmem:[%s321 + $0x330] sm:$0xff]
      %v638 = vld [vmem:[%s321 + $0x338] sm:$0xff]
      %v639 = vld [vmem:[%s321 + $0x340] sm:$0xff]
      %v640 = vld [vmem:[%s321 + $0x348] sm:$0xff]
      %v641 = vld [vmem:[%s321 + $0x350] sm:$0xff]
      %v642 = vld [vmem:[%s321 + $0x358] sm:$0xff]
      %v643 = vld [vmem:[%s321 + $0x360] sm:$0xff]
      %v644 = vld [vmem:[%s321 + $0x368] sm:$0xff]
      %v645 = vld [vmem:[%s321 + $0x370] sm:$0xff]
      %v646 = vld [vmem:[%s321 + $0x378] sm:$0xff]
      %v647 = vld [vmem:[%s321 + $0x380] sm:$0xff]
      %v648 = vld [vmem:[%s321 + $0x388] sm:$0xff]
      %v649 = vld [vmem:[%s321 + $0x390] sm:$0xff]
      %v650 = vld [vmem:[%s321 + $0x398] sm:$0xff]
      %v651 = vld [vmem:[%s321 + $0x3a0] sm:$0xff]
      %v652 = vld [vmem:[%s321 + $0x3a8] sm:$0xff]
      %v653 = vld [vmem:[%s321 + $0x3b0] sm:$0xff]
      %v654 = vld [vmem:[%s321 + $0x3b8] sm:$0xff]
      %v655 = vld [vmem:[%s321 + $0x3c0] sm:$0xff]
      %v656 = vld [vmem:[%s321 + $0x3c8] sm:$0xff]
      %v657 = vld [vmem:[%s321 + $0x3d0] sm:$0xff]
      %v658 = vld [vmem:[%s321 + $0x3d8] sm:$0xff]
      %v659 = vld [vmem:[%s321 + $0x3e0] sm:$0xff]
      %v660 = vld [vmem:[%s321 + $0x3e8] sm:$0xff]
      %v661 = vld [vmem:[%s321 + $0x3f0] sm:$0xff]
      %v662 = vld [vmem:[%s321 + $0x3f8] sm:$0xff]
      %v663 = vld [vmem:[%s314] sm:$0xff]
      %v664 = vld [vmem:[%s314 + $0x8] sm:$0xff]
      %v665 = vld [vmem:[%s314 + $0x10] sm:$0xff]
      %v666 = vld [vmem:[%s314 + $0x18] sm:$0xff]
      %v667 = vld [vmem:[%s314 + $0x20] sm:$0xff]
      %v668 = vld [vmem:[%s314 + $0x28] sm:$0xff]
      %v669 = vld [vmem:[%s314 + $0x30] sm:$0xff]
      %v670 = vld [vmem:[%s314 + $0x38] sm:$0xff]
      %v671 = vld [vmem:[%s314 + $0x40] sm:$0xff]
      %v672 = vld [vmem:[%s314 + $0x48] sm:$0xff]
      %v673 = vld [vmem:[%s314 + $0x50] sm:$0xff]
      %v674 = vld [vmem:[%s314 + $0x58] sm:$0xff]
      %v675 = vld [vmem:[%s314 + $0x60] sm:$0xff]
      %v676 = vld [vmem:[%s314 + $0x68] sm:$0xff]
      %v677 = vld [vmem:[%s314 + $0x70] sm:$0xff]
      %v678 = vld [vmem:[%s314 + $0x78] sm:$0xff]
      %v679 = vld [vmem:[%s314 + $0x80] sm:$0xff]
      %v680 = vld [vmem:[%s314 + $0x88] sm:$0xff]
      %v681 = vld [vmem:[%s314 + $0x90] sm:$0xff]
      %v682 = vld [vmem:[%s314 + $0x98] sm:$0xff]
      %v683 = vld [vmem:[%s314 + $0xa0] sm:$0xff]
      %v684 = vld [vmem:[%s314 + $0xa8] sm:$0xff]
      %v685 = vld [vmem:[%s314 + $0xb0] sm:$0xff]
      %v686 = vld [vmem:[%s314 + $0xb8] sm:$0xff]
      %v687 = vld [vmem:[%s314 + $0xc0] sm:$0xff]
      %v688 = vld [vmem:[%s314 + $0xc8] sm:$0xff]
      %v689 = vld [vmem:[%s314 + $0xd0] sm:$0xff]
      %v690 = vld [vmem:[%s314 + $0xd8] sm:$0xff]
      %v691 = vld [vmem:[%s314 + $0xe0] sm:$0xff]
      %v692 = vld [vmem:[%s314 + $0xe8] sm:$0xff]
      %v693 = vld [vmem:[%s314 + $0xf0] sm:$0xff]
      %v694 = vld [vmem:[%s314 + $0xf8] sm:$0xff]
      %v695 = vld [vmem:[%s314 + $0x100] sm:$0xff]
      %v696 = vld [vmem:[%s314 + $0x108] sm:$0xff]
      %v697 = vld [vmem:[%s314 + $0x110] sm:$0xff]
      %v698 = vld [vmem:[%s314 + $0x118] sm:$0xff]
      %v699 = vld [vmem:[%s314 + $0x120] sm:$0xff]
      %v700 = vld [vmem:[%s314 + $0x128] sm:$0xff]
      %v701 = vld [vmem:[%s314 + $0x130] sm:$0xff]
      %v702 = vld [vmem:[%s314 + $0x138] sm:$0xff]
      %v703 = vld [vmem:[%s314 + $0x140] sm:$0xff]
      %v704 = vld [vmem:[%s314 + $0x148] sm:$0xff]
      %v705 = vld [vmem:[%s314 + $0x150] sm:$0xff]
      %v706 = vld [vmem:[%s314 + $0x158] sm:$0xff]
      %v707 = vld [vmem:[%s314 + $0x160] sm:$0xff]
      %v708 = vld [vmem:[%s314 + $0x168] sm:$0xff]
      %v709 = vld [vmem:[%s314 + $0x170] sm:$0xff]
      %v710 = vld [vmem:[%s314 + $0x178] sm:$0xff]
      %v711 = vld [vmem:[%s314 + $0x180] sm:$0xff]
      %v712 = vld [vmem:[%s314 + $0x188] sm:$0xff]
      %v713 = vld [vmem:[%s314 + $0x190] sm:$0xff]
      %v714 = vld [vmem:[%s314 + $0x198] sm:$0xff]
      %v715 = vld [vmem:[%s314 + $0x1a0] sm:$0xff]
      %v716 = vld [vmem:[%s314 + $0x1a8] sm:$0xff]
      %v717 = vld [vmem:[%s314 + $0x1b0] sm:$0xff]
      %v718 = vld [vmem:[%s314 + $0x1b8] sm:$0xff]
      %v719 = vld [vmem:[%s314 + $0x1c0] sm:$0xff]
      %v720 = vld [vmem:[%s314 + $0x1c8] sm:$0xff]
      %v721 = vld [vmem:[%s314 + $0x1d0] sm:$0xff]
      %v722 = vld [vmem:[%s314 + $0x1d8] sm:$0xff]
      %v723 = vld [vmem:[%s314 + $0x1e0] sm:$0xff]
      %v724 = vld [vmem:[%s314 + $0x1e8] sm:$0xff]
      %v725 = vld [vmem:[%s314 + $0x1f0] sm:$0xff]
      %v726 = vld [vmem:[%s314 + $0x1f8] sm:$0xff]
      %v727 = vpack.c.bf16 %v665, %v663
      %v728 = vpack.c.bf16 %v666, %v664
      %v729 = vpack.c.bf16 %v669, %v667
      %v730 = vpack.c.bf16 %v670, %v668
      %v731 = vpack.c.bf16 %v673, %v671
      %v732 = vpack.c.bf16 %v674, %v672
      %v733 = vpack.c.bf16 %v677, %v675
      %v734 = vpack.c.bf16 %v678, %v676
      %v735 = vpack.c.bf16 %v681, %v679
      %v736 = vpack.c.bf16 %v682, %v680
      %v737 = vpack.c.bf16 %v685, %v683
      %v738 = vpack.c.bf16 %v686, %v684
      %v739 = vpack.c.bf16 %v689, %v687
      %v740 = vpack.c.bf16 %v690, %v688
      %v741 = vpack.c.bf16 %v693, %v691
      %v742 = vpack.c.bf16 %v694, %v692
      %v743 = vpack.c.bf16 %v697, %v695
      %v744 = vpack.c.bf16 %v698, %v696
      %v745 = vpack.c.bf16 %v701, %v699
      %v746 = vpack.c.bf16 %v702, %v700
      %v747 = vpack.c.bf16 %v705, %v703
      %v748 = vpack.c.bf16 %v706, %v704
      %v749 = vpack.c.bf16 %v709, %v707
      %v750 = vpack.c.bf16 %v710, %v708
      %v751 = vpack.c.bf16 %v713, %v711
      %v752 = vpack.c.bf16 %v714, %v712
      %v753 = vpack.c.bf16 %v717, %v715
      %v754 = vpack.c.bf16 %v718, %v716
      %v755 = vpack.c.bf16 %v721, %v719
      %v756 = vpack.c.bf16 %v722, %v720
      %v757 = vpack.c.bf16 %v725, %v723
      %v758 = vpack.c.bf16 %v726, %v724
      %v759 = vld [vmem:[%s328] sm:$0xff]
      %v760 = vld [vmem:[%s328 + $0x8] sm:$0xff]
      %v761 = vld [vmem:[%s328 + $0x10] sm:$0xff]
      %v762 = vld [vmem:[%s328 + $0x18] sm:$0xff]
      %v763 = vld [vmem:[%s328 + $0x20] sm:$0xff]
      %v764 = vld [vmem:[%s328 + $0x28] sm:$0xff]
      %v765 = vld [vmem:[%s328 + $0x30] sm:$0xff]
      %v766 = vld [vmem:[%s328 + $0x38] sm:$0xff]
      %v767 = vld [vmem:[%s328 + $0x40] sm:$0xff]
      %v768 = vld [vmem:[%s328 + $0x48] sm:$0xff]
      %v769 = vld [vmem:[%s328 + $0x50] sm:$0xff]
      %v770 = vld [vmem:[%s328 + $0x58] sm:$0xff]
      %v771 = vld [vmem:[%s328 + $0x60] sm:$0xff]
      %v772 = vld [vmem:[%s328 + $0x68] sm:$0xff]
      %v773 = vld [vmem:[%s328 + $0x70] sm:$0xff]
      %v774 = vld [vmem:[%s328 + $0x78] sm:$0xff]
      %v775 = vld [vmem:[%s328 + $0x80] sm:$0xff]
      %v776 = vld [vmem:[%s328 + $0x88] sm:$0xff]
      %v777 = vld [vmem:[%s328 + $0x90] sm:$0xff]
      %v778 = vld [vmem:[%s328 + $0x98] sm:$0xff]
      %v779 = vld [vmem:[%s328 + $0xa0] sm:$0xff]
      %v780 = vld [vmem:[%s328 + $0xa8] sm:$0xff]
      %v781 = vld [vmem:[%s328 + $0xb0] sm:$0xff]
      %v782 = vld [vmem:[%s328 + $0xb8] sm:$0xff]
      %v783 = vld [vmem:[%s328 + $0xc0] sm:$0xff]
      %v784 = vld [vmem:[%s328 + $0xc8] sm:$0xff]
      %v785 = vld [vmem:[%s328 + $0xd0] sm:$0xff]
      %v786 = vld [vmem:[%s328 + $0xd8] sm:$0xff]
      %v787 = vld [vmem:[%s328 + $0xe0] sm:$0xff]
      %v788 = vld [vmem:[%s328 + $0xe8] sm:$0xff]
      %v789 = vld [vmem:[%s328 + $0xf0] sm:$0xff]
      %v790 = vld [vmem:[%s328 + $0xf8] sm:$0xff]
      %v791 = vld [vmem:[%s328 + $0x100] sm:$0xff]
      %v792 = vld [vmem:[%s328 + $0x108] sm:$0xff]
      %v793 = vld [vmem:[%s328 + $0x110] sm:$0xff]
      %v794 = vld [vmem:[%s328 + $0x118] sm:$0xff]
      %v795 = vld [vmem:[%s328 + $0x120] sm:$0xff]
      %v796 = vld [vmem:[%s328 + $0x128] sm:$0xff]
      %v797 = vld [vmem:[%s328 + $0x130] sm:$0xff]
      %v798 = vld [vmem:[%s328 + $0x138] sm:$0xff]
      %v799 = vld [vmem:[%s328 + $0x140] sm:$0xff]
      %v800 = vld [vmem:[%s328 + $0x148] sm:$0xff]
      %v801 = vld [vmem:[%s328 + $0x150] sm:$0xff]
      %v802 = vld [vmem:[%s328 + $0x158] sm:$0xff]
      %v803 = vld [vmem:[%s328 + $0x160] sm:$0xff]
      %v804 = vld [vmem:[%s328 + $0x168] sm:$0xff]
      %v805 = vld [vmem:[%s328 + $0x170] sm:$0xff]
      %v806 = vld [vmem:[%s328 + $0x178] sm:$0xff]
      %v807 = vld [vmem:[%s328 + $0x180] sm:$0xff]
      %v808 = vld [vmem:[%s328 + $0x188] sm:$0xff]
      %v809 = vld [vmem:[%s328 + $0x190] sm:$0xff]
      %v810 = vld [vmem:[%s328 + $0x198] sm:$0xff]
      %v811 = vld [vmem:[%s328 + $0x1a0] sm:$0xff]
      %v812 = vld [vmem:[%s328 + $0x1a8] sm:$0xff]
      %v813 = vld [vmem:[%s328 + $0x1b0] sm:$0xff]
      %v814 = vld [vmem:[%s328 + $0x1b8] sm:$0xff]
      %v815 = vld [vmem:[%s328 + $0x1c0] sm:$0xff]
      %v816 = vld [vmem:[%s328 + $0x1c8] sm:$0xff]
      %v817 = vld [vmem:[%s328 + $0x1d0] sm:$0xff]
      %v818 = vld [vmem:[%s328 + $0x1d8] sm:$0xff]
      %v819 = vld [vmem:[%s328 + $0x1e0] sm:$0xff]
      %v820 = vld [vmem:[%s328 + $0x1e8] sm:$0xff]
      %v821 = vld [vmem:[%s328 + $0x1f0] sm:$0xff]
      %v822 = vld [vmem:[%s328 + $0x1f8] sm:$0xff]
      %v887 = vunpack.c.l.b16 %v759
      %v888 = vunpack.c.h.b16 %v759
      %v889 = vunpack.c.l.b16 %v760
      %v890 = vunpack.c.h.b16 %v760
      %v891 = vunpack.c.l.b16 %v761
      %v892 = vunpack.c.h.b16 %v761
      %v893 = vunpack.c.l.b16 %v762
      %v894 = vunpack.c.h.b16 %v762
      %v895 = vunpack.c.l.b16 %v763
      %v896 = vunpack.c.h.b16 %v763
      %v897 = vunpack.c.l.b16 %v764
      %v898 = vunpack.c.h.b16 %v764
      %v899 = vunpack.c.l.b16 %v765
      %v900 = vunpack.c.h.b16 %v765
      %v901 = vunpack.c.l.b16 %v766
      %v902 = vunpack.c.h.b16 %v766
      %v903 = vunpack.c.l.b16 %v767
      %v904 = vunpack.c.h.b16 %v767
      %v905 = vunpack.c.l.b16 %v768
      %v906 = vunpack.c.h.b16 %v768
      %v907 = vunpack.c.l.b16 %v769
      %v908 = vunpack.c.h.b16 %v769
      %v909 = vunpack.c.l.b16 %v770
      %v910 = vunpack.c.h.b16 %v770
      %v911 = vunpack.c.l.b16 %v771
      %v912 = vunpack.c.h.b16 %v771
      %v913 = vunpack.c.l.b16 %v772
      %v914 = vunpack.c.h.b16 %v772
      %v915 = vunpack.c.l.b16 %v773
      %v916 = vunpack.c.h.b16 %v773
      %v917 = vunpack.c.l.b16 %v774
      %v918 = vunpack.c.h.b16 %v774
      %v919 = vunpack.c.l.b16 %v775
      %v920 = vunpack.c.h.b16 %v775
      %v921 = vunpack.c.l.b16 %v776
      %v922 = vunpack.c.h.b16 %v776
      %v923 = vunpack.c.l.b16 %v777
      %v924 = vunpack.c.h.b16 %v777
      %v925 = vunpack.c.l.b16 %v778
      %v926 = vunpack.c.h.b16 %v778
      %v927 = vunpack.c.l.b16 %v779
      %v928 = vunpack.c.h.b16 %v779
      %v929 = vunpack.c.l.b16 %v780
      %v930 = vunpack.c.h.b16 %v780
      %v931 = vunpack.c.l.b16 %v781
      %v932 = vunpack.c.h.b16 %v781
      %v933 = vunpack.c.l.b16 %v782
      %v934 = vunpack.c.h.b16 %v782
      %v935 = vunpack.c.l.b16 %v783
      %v936 = vunpack.c.h.b16 %v783
      %v937 = vunpack.c.l.b16 %v784
      %v938 = vunpack.c.h.b16 %v784
      %v939 = vunpack.c.l.b16 %v785
      %v940 = vunpack.c.h.b16 %v785
      %v941 = vunpack.c.l.b16 %v786
      %v942 = vunpack.c.h.b16 %v786
      %v943 = vunpack.c.l.b16 %v787
      %v944 = vunpack.c.h.b16 %v787
      %v945 = vunpack.c.l.b16 %v788
      %v946 = vunpack.c.h.b16 %v788
      %v947 = vunpack.c.l.b16 %v789
      %v948 = vunpack.c.h.b16 %v789
      %v949 = vunpack.c.l.b16 %v790
      %v950 = vunpack.c.h.b16 %v790
      %v951 = vunpack.c.l.b16 %v791
      %v952 = vunpack.c.h.b16 %v791
      %v953 = vunpack.c.l.b16 %v792
      %v954 = vunpack.c.h.b16 %v792
      %v955 = vunpack.c.l.b16 %v793
      %v956 = vunpack.c.h.b16 %v793
      %v957 = vunpack.c.l.b16 %v794
      %v958 = vunpack.c.h.b16 %v794
      %v959 = vunpack.c.l.b16 %v795
      %v960 = vunpack.c.h.b16 %v795
      %v961 = vunpack.c.l.b16 %v796
      %v962 = vunpack.c.h.b16 %v796
      %v963 = vunpack.c.l.b16 %v797
      %v964 = vunpack.c.h.b16 %v797
      %v965 = vunpack.c.l.b16 %v798
      %v966 = vunpack.c.h.b16 %v798
      %v967 = vunpack.c.l.b16 %v799
      %v968 = vunpack.c.h.b16 %v799
      %v969 = vunpack.c.l.b16 %v800
      %v970 = vunpack.c.h.b16 %v800
      %v971 = vunpack.c.l.b16 %v801
      %v972 = vunpack.c.h.b16 %v801
      %v973 = vunpack.c.l.b16 %v802
      %v974 = vunpack.c.h.b16 %v802
      %v975 = vunpack.c.l.b16 %v803
      %v976 = vunpack.c.h.b16 %v803
      %v977 = vunpack.c.l.b16 %v804
      %v978 = vunpack.c.h.b16 %v804
      %v979 = vunpack.c.l.b16 %v805
      %v980 = vunpack.c.h.b16 %v805
      %v981 = vunpack.c.l.b16 %v806
      %v982 = vunpack.c.h.b16 %v806
      %v983 = vunpack.c.l.b16 %v807
      %v984 = vunpack.c.h.b16 %v807
      %v985 = vunpack.c.l.b16 %v808
      %v986 = vunpack.c.h.b16 %v808
      %v987 = vunpack.c.l.b16 %v809
      %v988 = vunpack.c.h.b16 %v809
      %v989 = vunpack.c.l.b16 %v810
      %v990 = vunpack.c.h.b16 %v810
      %v991 = vunpack.c.l.b16 %v811
      %v992 = vunpack.c.h.b16 %v811
      %v993 = vunpack.c.l.b16 %v812
      %v994 = vunpack.c.h.b16 %v812
      %v995 = vunpack.c.l.b16 %v813
      %v996 = vunpack.c.h.b16 %v813
      %v997 = vunpack.c.l.b16 %v814
      %v998 = vunpack.c.h.b16 %v814
      %v999 = vunpack.c.l.b16 %v815
      %v1000 = vunpack.c.h.b16 %v815
      %v1001 = vunpack.c.l.b16 %v816
      %v1002 = vunpack.c.h.b16 %v816
      %v1003 = vunpack.c.l.b16 %v817
      %v1004 = vunpack.c.h.b16 %v817
      %v1005 = vunpack.c.l.b16 %v818
      %v1006 = vunpack.c.h.b16 %v818
      %v1007 = vunpack.c.l.b16 %v819
      %v1008 = vunpack.c.h.b16 %v819
      %v1009 = vunpack.c.l.b16 %v820
      %v1010 = vunpack.c.h.b16 %v820
      %v1011 = vunpack.c.l.b16 %v821
      %v1012 = vunpack.c.h.b16 %v821
      %v1013 = vunpack.c.l.b16 %v822
      %v1014 = vunpack.c.h.b16 %v822
      %v1015 = vpack.c.b16 %v891, %v887
      %v1016 = vpack.c.b16 %v892, %v888
      %v1017 = vpack.c.b16 %v893, %v889
      %v1018 = vpack.c.b16 %v894, %v890
      %v1019 = vpack.c.b16 %v899, %v895
      %v1020 = vpack.c.b16 %v900, %v896
      %v1021 = vpack.c.b16 %v901, %v897
      %v1022 = vpack.c.b16 %v902, %v898
      %v1023 = vpack.c.b16 %v907, %v903
      %v1024 = vpack.c.b16 %v908, %v904
      %v1025 = vpack.c.b16 %v909, %v905
      %v1026 = vpack.c.b16 %v910, %v906
      %v1027 = vpack.c.b16 %v915, %v911
      %v1028 = vpack.c.b16 %v916, %v912
      %v1029 = vpack.c.b16 %v917, %v913
      %v1030 = vpack.c.b16 %v918, %v914
      %v1031 = vpack.c.b16 %v923, %v919
      %v1032 = vpack.c.b16 %v924, %v920
      %v1033 = vpack.c.b16 %v925, %v921
      %v1034 = vpack.c.b16 %v926, %v922
      %v1035 = vpack.c.b16 %v931, %v927
      %v1036 = vpack.c.b16 %v932, %v928
      %v1037 = vpack.c.b16 %v933, %v929
      %v1038 = vpack.c.b16 %v934, %v930
      %v1039 = vpack.c.b16 %v939, %v935
      %v1040 = vpack.c.b16 %v940, %v936
      %v1041 = vpack.c.b16 %v941, %v937
      %v1042 = vpack.c.b16 %v942, %v938
      %v1043 = vpack.c.b16 %v947, %v943
      %v1044 = vpack.c.b16 %v948, %v944
      %v1045 = vpack.c.b16 %v949, %v945
      %v1046 = vpack.c.b16 %v950, %v946
      %v1047 = vpack.c.b16 %v955, %v951
      %v1048 = vpack.c.b16 %v956, %v952
      %v1049 = vpack.c.b16 %v957, %v953
      %v1050 = vpack.c.b16 %v958, %v954
      %v1051 = vpack.c.b16 %v963, %v959
      %v1052 = vpack.c.b16 %v964, %v960
      %v1053 = vpack.c.b16 %v965, %v961
      %v1054 = vpack.c.b16 %v966, %v962
      %v1055 = vpack.c.b16 %v971, %v967
      %v1056 = vpack.c.b16 %v972, %v968
      %v1057 = vpack.c.b16 %v973, %v969
      %v1058 = vpack.c.b16 %v974, %v970
      %v1059 = vpack.c.b16 %v979, %v975
      %v1060 = vpack.c.b16 %v980, %v976
      %v1061 = vpack.c.b16 %v981, %v977
      %v1062 = vpack.c.b16 %v982, %v978
      %v1063 = vpack.c.b16 %v987, %v983
      %v1064 = vpack.c.b16 %v988, %v984
      %v1065 = vpack.c.b16 %v989, %v985
      %v1066 = vpack.c.b16 %v990, %v986
      %v1067 = vpack.c.b16 %v995, %v991
      %v1068 = vpack.c.b16 %v996, %v992
      %v1069 = vpack.c.b16 %v997, %v993
      %v1070 = vpack.c.b16 %v998, %v994
      %v1071 = vpack.c.b16 %v1003, %v999
      %v1072 = vpack.c.b16 %v1004, %v1000
      %v1073 = vpack.c.b16 %v1005, %v1001
      %v1074 = vpack.c.b16 %v1006, %v1002
      %v1075 = vpack.c.b16 %v1011, %v1007
      %v1076 = vpack.c.b16 %v1012, %v1008
      %v1077 = vpack.c.b16 %v1013, %v1009
      %v1078 = vpack.c.b16 %v1014, %v1010
      %1143 = vmatprep.subr.bf16.mxu0 %v1016
      %1144 = vmatpush1.bf16.msra.mxu0 %v1015
      %1145 = vmatprep.subr.bf16.mxu0 %v1020
      %1146 = vmatpush1.bf16.msra.mxu0 %v1019
      %1147 = vmatprep.subr.bf16.mxu0 %v1024
      %1148 = vmatpush1.bf16.msra.mxu0 %v1023
      %1149 = vmatprep.subr.bf16.mxu0 %v1028
      %1150 = vmatpush1.bf16.msra.mxu0 %v1027
      %1151 = vmatprep.subr.bf16.mxu0 %v1032
      %1152 = vmatpush1.bf16.msra.mxu0 %v1031
      %1153 = vmatprep.subr.bf16.mxu0 %v1036
      %1154 = vmatpush1.bf16.msra.mxu0 %v1035
      %1155 = vmatprep.subr.bf16.mxu0 %v1040
      %1156 = vmatpush1.bf16.msra.mxu0 %v1039
      %1157 = vmatprep.subr.bf16.mxu0 %v1044
      %1158 = vmatpush1.bf16.msra.mxu0 %v1043
      %1159 = vmatprep.subr.bf16.mxu0 %v1048
      %1160 = vmatpush1.bf16.msra.mxu0 %v1047
      %1161 = vmatprep.subr.bf16.mxu0 %v1052
      %1162 = vmatpush1.bf16.msra.mxu0 %v1051
      %1163 = vmatprep.subr.bf16.mxu0 %v1056
      %1164 = vmatpush1.bf16.msra.mxu0 %v1055
      %1165 = vmatprep.subr.bf16.mxu0 %v1060
      %1166 = vmatpush1.bf16.msra.mxu0 %v1059
      %1167 = vmatprep.subr.bf16.mxu0 %v1064
      %1168 = vmatpush1.bf16.msra.mxu0 %v1063
      %1169 = vmatprep.subr.bf16.mxu0 %v1068
      %1170 = vmatpush1.bf16.msra.mxu0 %v1067
      %1171 = vmatprep.subr.bf16.mxu0 %v1072
      %1172 = vmatpush1.bf16.msra.mxu0 %v1071
      %1173 = vmatprep.subr.bf16.mxu0 %v1076
      %1174 = vmatpush1.bf16.msra.mxu0 %v1075
      %1175 = vmatprep.mubr.bf16.mxu0 %v728
      %1176 = vmatmul.mubr.bf16.gmra.mrb[0].mxu0 %v727
      %v1177 = vpop.f32.mrb[0].mxu0
      %v1178 = vadd.f32 0.0, %v1177
      %v1179 = vpop.f32.mrb[0].mxu0
      %v1180 = vadd.f32 0.0, %v1179
      %v1181 = vpop.f32.mrb[0].mxu0
      %v1182 = vadd.f32 0.0, %v1181
      %v1183 = vpop.f32.mrb[0].mxu0
      %v1184 = vadd.f32 0.0, %v1183
      %1185 = vmatprep.mubr.bf16.mxu0 %v730
      %1186 = vmatmul.mubr.bf16.gmra.mrb[0].mxu0 %v729
      %v1187 = vpop.f32.mrb[0].mxu0
      %v1188 = vadd.f32 0.0, %v1187
      %v1189 = vpop.f32.mrb[0].mxu0
      %v1190 = vadd.f32 0.0, %v1189
      %v1191 = vpop.f32.mrb[0].mxu0
      %v1192 = vadd.f32 0.0, %v1191
      %v1193 = vpop.f32.mrb[0].mxu0
      %v1194 = vadd.f32 0.0, %v1193
      %1195 = vmatprep.mubr.bf16.mxu0 %v732
      %1196 = vmatmul.mubr.bf16.gmra.mrb[0].mxu0 %v731
      %v1197 = vpop.f32.mrb[0].mxu0
      %v1198 = vadd.f32 0.0, %v1197
      %v1199 = vpop.f32.mrb[0].mxu0
      %v1200 = vadd.f32 0.0, %v1199
      %v1201 = vpop.f32.mrb[0].mxu0
      %v1202 = vadd.f32 0.0, %v1201
      %v1203 = vpop.f32.mrb[0].mxu0
      %v1204 = vadd.f32 0.0, %v1203
      %1205 = vmatprep.mubr.bf16.mxu0 %v734
      %1206 = vmatmul.mubr.bf16.gmra.mrb[0].mxu0 %v733
      %v1207 = vpop.f32.mrb[0].mxu0
      %v1208 = vadd.f32 0.0, %v1207
      %v1209 = vpop.f32.mrb[0].mxu0
      %v1210 = vadd.f32 0.0, %v1209
      %v1211 = vpop.f32.mrb[0].mxu0
      %v1212 = vadd.f32 0.0, %v1211
      %v1213 = vpop.f32.mrb[0].mxu0
      %v1214 = vadd.f32 0.0, %v1213
      %1215 = vmatprep.mubr.bf16.mxu0 %v736
      %1216 = vmatmul.mubr.bf16.gmra.mrb[0].mxu0 %v735
      %v1217 = vpop.f32.mrb[0].mxu0
      %v1218 = vadd.f32 0.0, %v1217
      %v1219 = vpop.f32.mrb[0].mxu0
      %v1220 = vadd.f32 0.0, %v1219
      %v1221 = vpop.f32.mrb[0].mxu0
      %v1222 = vadd.f32 0.0, %v1221
      %v1223 = vpop.f32.mrb[0].mxu0
      %v1224 = vadd.f32 0.0, %v1223
      %1225 = vmatprep.mubr.bf16.mxu0 %v738
      %1226 = vmatmul.mubr.bf16.gmra.mrb[0].mxu0 %v737
      %v1227 = vpop.f32.mrb[0].mxu0
      %v1228 = vadd.f32 0.0, %v1227
      %v1229 = vpop.f32.mrb[0].mxu0
      %v1230 = vadd.f32 0.0, %v1229
      %v1231 = vpop.f32.mrb[0].mxu0
      %v1232 = vadd.f32 0.0, %v1231
      %v1233 = vpop.f32.mrb[0].mxu0
      %v1234 = vadd.f32 0.0, %v1233
      %1235 = vmatprep.mubr.bf16.mxu0 %v740
      %1236 = vmatmul.mubr.bf16.gmra.mrb[0].mxu0 %v739
      %v1237 = vpop.f32.mrb[0].mxu0
      %v1238 = vadd.f32 0.0, %v1237
      %v1239 = vpop.f32.mrb[0].mxu0
      %v1240 = vadd.f32 0.0, %v1239
      %v1241 = vpop.f32.mrb[0].mxu0
      %v1242 = vadd.f32 0.0, %v1241
      %v1243 = vpop.f32.mrb[0].mxu0
      %v1244 = vadd.f32 0.0, %v1243
      %1245 = vmatprep.mubr.bf16.mxu0 %v742
      %1246 = vmatmul.mubr.bf16.gmra.mrb[0].mxu0 %v741
      %v1247 = vpop.f32.mrb[0].mxu0
      %v1248 = vadd.f32 0.0, %v1247
      %v1249 = vpop.f32.mrb[0].mxu0
      %v1250 = vadd.f32 0.0, %v1249
      %v1251 = vpop.f32.mrb[0].mxu0
      %v1252 = vadd.f32 0.0, %v1251
      %v1253 = vpop.f32.mrb[0].mxu0
      %v1254 = vadd.f32 0.0, %v1253
      %1255 = vmatprep.mubr.bf16.mxu0 %v744
      %1256 = vmatmul.mubr.bf16.gmra.mrb[0].mxu0 %v743
      %v1257 = vpop.f32.mrb[0].mxu0
      %v1258 = vadd.f32 0.0, %v1257
      %v1259 = vpop.f32.mrb[0].mxu0
      %v1260 = vadd.f32 0.0, %v1259
      %v1261 = vpop.f32.mrb[0].mxu0
      %v1262 = vadd.f32 0.0, %v1261
      %v1263 = vpop.f32.mrb[0].mxu0
      %v1264 = vadd.f32 0.0, %v1263
      %1265 = vmatprep.mubr.bf16.mxu0 %v746
      %1266 = vmatmul.mubr.bf16.gmra.mrb[0].mxu0 %v745
      %v1267 = vpop.f32.mrb[0].mxu0
      %v1268 = vadd.f32 0.0, %v1267
      %v1269 = vpop.f32.mrb[0].mxu0
      %v1270 = vadd.f32 0.0, %v1269
      %v1271 = vpop.f32.mrb[0].mxu0
      %v1272 = vadd.f32 0.0, %v1271
      %v1273 = vpop.f32.mrb[0].mxu0
      %v1274 = vadd.f32 0.0, %v1273
      %1275 = vmatprep.mubr.bf16.mxu0 %v748
      %1276 = vmatmul.mubr.bf16.gmra.mrb[0].mxu0 %v747
      %v1277 = vpop.f32.mrb[0].mxu0
      %v1278 = vadd.f32 0.0, %v1277
      %v1279 = vpop.f32.mrb[0].mxu0
      %v1280 = vadd.f32 0.0, %v1279
      %v1281 = vpop.f32.mrb[0].mxu0
      %v1282 = vadd.f32 0.0, %v1281
      %v1283 = vpop.f32.mrb[0].mxu0
      %v1284 = vadd.f32 0.0, %v1283
      %1285 = vmatprep.mubr.bf16.mxu0 %v750
      %1286 = vmatmul.mubr.bf16.gmra.mrb[0].mxu0 %v749
      %v1287 = vpop.f32.mrb[0].mxu0
      %v1288 = vadd.f32 0.0, %v1287
      %v1289 = vpop.f32.mrb[0].mxu0
      %v1290 = vadd.f32 0.0, %v1289
      %v1291 = vpop.f32.mrb[0].mxu0
      %v1292 = vadd.f32 0.0, %v1291
      %v1293 = vpop.f32.mrb[0].mxu0
      %v1294 = vadd.f32 0.0, %v1293
      %1295 = vmatprep.mubr.bf16.mxu0 %v752
      %1296 = vmatmul.mubr.bf16.gmra.mrb[0].mxu0 %v751
      %v1297 = vpop.f32.mrb[0].mxu0
      %v1298 = vadd.f32 0.0, %v1297
      %v1299 = vpop.f32.mrb[0].mxu0
      %v1300 = vadd.f32 0.0, %v1299
      %v1301 = vpop.f32.mrb[0].mxu0
      %v1302 = vadd.f32 0.0, %v1301
      %v1303 = vpop.f32.mrb[0].mxu0
      %v1304 = vadd.f32 0.0, %v1303
      %1305 = vmatprep.mubr.bf16.mxu0 %v754
      %1306 = vmatmul.mubr.bf16.gmra.mrb[0].mxu0 %v753
      %v1307 = vpop.f32.mrb[0].mxu0
      %v1308 = vadd.f32 0.0, %v1307
      %v1309 = vpop.f32.mrb[0].mxu0
      %v1310 = vadd.f32 0.0, %v1309
      %v1311 = vpop.f32.mrb[0].mxu0
      %v1312 = vadd.f32 0.0, %v1311
      %v1313 = vpop.f32.mrb[0].mxu0
      %v1314 = vadd.f32 0.0, %v1313
      %1315 = vmatprep.mubr.bf16.mxu0 %v756
      %1316 = vmatmul.mubr.bf16.gmra.mrb[0].mxu0 %v755
      %v1317 = vpop.f32.mrb[0].mxu0
      %v1318 = vadd.f32 0.0, %v1317
      %v1319 = vpop.f32.mrb[0].mxu0
      %v1320 = vadd.f32 0.0, %v1319
      %v1321 = vpop.f32.mrb[0].mxu0
      %v1322 = vadd.f32 0.0, %v1321
      %v1323 = vpop.f32.mrb[0].mxu0
      %v1324 = vadd.f32 0.0, %v1323
      %1325 = vmatprep.mubr.bf16.mxu0 %v758
      %1326 = vmatmul.mubr.bf16.gmra.mrb[0].mxu0 %v757
      %v1327 = vpop.f32.mrb[0].mxu0
      %v1328 = vadd.f32 0.0, %v1327
      %v1329 = vpop.f32.mrb[0].mxu0
      %v1330 = vadd.f32 0.0, %v1329
      %v1331 = vpop.f32.mrb[0].mxu0
      %v1332 = vadd.f32 0.0, %v1331
      %v1333 = vpop.f32.mrb[0].mxu0
      %v1334 = vadd.f32 0.0, %v1333
      %1335 = vdwg.mxu0
      %1336 = vmatprep.subr.bf16.mxu0 %v1018
      %1337 = vmatpush1.bf16.msra.mxu0 %v1017
      %1338 = vmatprep.subr.bf16.mxu0 %v1022
      %1339 = vmatpush1.bf16.msra.mxu0 %v1021
      %1340 = vmatprep.subr.bf16.mxu0 %v1026
      %1341 = vmatpush1.bf16.msra.mxu0 %v1025
      %1342 = vmatprep.subr.bf16.mxu0 %v1030
      %1343 = vmatpush1.bf16.msra.mxu0 %v1029
      %1344 = vmatprep.subr.bf16.mxu0 %v1034
      %1345 = vmatpush1.bf16.msra.mxu0 %v1033
      %1346 = vmatprep.subr.bf16.mxu0 %v1038
      %1347 = vmatpush1.bf16.msra.mxu0 %v1037
      %1348 = vmatprep.subr.bf16.mxu0 %v1042
      %1349 = vmatpush1.bf16.msra.mxu0 %v1041
      %1350 = vmatprep.subr.bf16.mxu0 %v1046
      %1351 = vmatpush1.bf16.msra.mxu0 %v1045
      %1352 = vmatprep.subr.bf16.mxu0 %v1050
      %1353 = vmatpush1.bf16.msra.mxu0 %v1049
      %1354 = vmatprep.subr.bf16.mxu0 %v1054
      %1355 = vmatpush1.bf16.msra.mxu0 %v1053
      %1356 = vmatprep.subr.bf16.mxu0 %v1058
      %1357 = vmatpush1.bf16.msra.mxu0 %v1057
      %1358 = vmatprep.subr.bf16.mxu0 %v1062
      %1359 = vmatpush1.bf16.msra.mxu0 %v1061
      %1360 = vmatprep.subr.bf16.mxu0 %v1066
      %1361 = vmatpush1.bf16.msra.mxu0 %v1065
      %1362 = vmatprep.subr.bf16.mxu0 %v1070
      %1363 = vmatpush1.bf16.msra.mxu0 %v1069
      %1364 = vmatprep.subr.bf16.mxu0 %v1074
      %1365 = vmatpush1.bf16.msra.mxu0 %v1073
      %1366 = vmatprep.subr.bf16.mxu0 %v1078
      %1367 = vmatpush1.bf16.msra.mxu0 %v1077
      %1368 = vmatprep.mubr.bf16.mxu0 %v728
      %1369 = vmatmul.mubr.bf16.gmra.mrb[0].mxu0 %v727
      %v1370 = vpop.f32.mrb[0].mxu0
      %v1371 = vadd.f32 0.0, %v1370
      %v1372 = vpop.f32.mrb[0].mxu0
      %v1373 = vadd.f32 0.0, %v1372
      %v1374 = vpop.f32.mrb[0].mxu0
      %v1375 = vadd.f32 0.0, %v1374
      %v1376 = vpop.f32.mrb[0].mxu0
      %v1377 = vadd.f32 0.0, %v1376
      %1378 = vmatprep.mubr.bf16.mxu0 %v730
      %1379 = vmatmul.mubr.bf16.gmra.mrb[0].mxu0 %v729
      %v1380 = vpop.f32.mrb[0].mxu0
      %v1381 = vadd.f32 0.0, %v1380
      %v1382 = vpop.f32.mrb[0].mxu0
      %v1383 = vadd.f32 0.0, %v1382
      %v1384 = vpop.f32.mrb[0].mxu0
      %v1385 = vadd.f32 0.0, %v1384
      %v1386 = vpop.f32.mrb[0].mxu0
      %v1387 = vadd.f32 0.0, %v1386
      %1388 = vmatprep.mubr.bf16.mxu0 %v732
      %1389 = vmatmul.mubr.bf16.gmra.mrb[0].mxu0 %v731
      %v1390 = vpop.f32.mrb[0].mxu0
      %v1391 = vadd.f32 0.0, %v1390
      %v1392 = vpop.f32.mrb[0].mxu0
      %v1393 = vadd.f32 0.0, %v1392
      %v1394 = vpop.f32.mrb[0].mxu0
      %v1395 = vadd.f32 0.0, %v1394
      %v1396 = vpop.f32.mrb[0].mxu0
      %v1397 = vadd.f32 0.0, %v1396
      %1398 = vmatprep.mubr.bf16.mxu0 %v734
      %1399 = vmatmul.mubr.bf16.gmra.mrb[0].mxu0 %v733
      %v1400 = vpop.f32.mrb[0].mxu0
      %v1401 = vadd.f32 0.0, %v1400
      %v1402 = vpop.f32.mrb[0].mxu0
      %v1403 = vadd.f32 0.0, %v1402
      %v1404 = vpop.f32.mrb[0].mxu0
      %v1405 = vadd.f32 0.0, %v1404
      %v1406 = vpop.f32.mrb[0].mxu0
      %v1407 = vadd.f32 0.0, %v1406
      %1408 = vmatprep.mubr.bf16.mxu0 %v736
      %1409 = vmatmul.mubr.bf16.gmra.mrb[0].mxu0 %v735
      %v1410 = vpop.f32.mrb[0].mxu0
      %v1411 = vadd.f32 0.0, %v1410
      %v1412 = vpop.f32.mrb[0].mxu0
      %v1413 = vadd.f32 0.0, %v1412
      %v1414 = vpop.f32.mrb[0].mxu0
      %v1415 = vadd.f32 0.0, %v1414
      %v1416 = vpop.f32.mrb[0].mxu0
      %v1417 = vadd.f32 0.0, %v1416
      %1418 = vmatprep.mubr.bf16.mxu0 %v738
      %1419 = vmatmul.mubr.bf16.gmra.mrb[0].mxu0 %v737
      %v1420 = vpop.f32.mrb[0].mxu0
      %v1421 = vadd.f32 0.0, %v1420
      %v1422 = vpop.f32.mrb[0].mxu0
      %v1423 = vadd.f32 0.0, %v1422
      %v1424 = vpop.f32.mrb[0].mxu0
      %v1425 = vadd.f32 0.0, %v1424
      %v1426 = vpop.f32.mrb[0].mxu0
      %v1427 = vadd.f32 0.0, %v1426
      %1428 = vmatprep.mubr.bf16.mxu0 %v740
      %1429 = vmatmul.mubr.bf16.gmra.mrb[0].mxu0 %v739
      %v1430 = vpop.f32.mrb[0].mxu0
      %v1431 = vadd.f32 0.0, %v1430
      %v1432 = vpop.f32.mrb[0].mxu0
      %v1433 = vadd.f32 0.0, %v1432
      %v1434 = vpop.f32.mrb[0].mxu0
      %v1435 = vadd.f32 0.0, %v1434
      %v1436 = vpop.f32.mrb[0].mxu0
      %v1437 = vadd.f32 0.0, %v1436
      %1438 = vmatprep.mubr.bf16.mxu0 %v742
      %1439 = vmatmul.mubr.bf16.gmra.mrb[0].mxu0 %v741
      %v1440 = vpop.f32.mrb[0].mxu0
      %v1441 = vadd.f32 0.0, %v1440
      %v1442 = vpop.f32.mrb[0].mxu0
      %v1443 = vadd.f32 0.0, %v1442
      %v1444 = vpop.f32.mrb[0].mxu0
      %v1445 = vadd.f32 0.0, %v1444
      %v1446 = vpop.f32.mrb[0].mxu0
      %v1447 = vadd.f32 0.0, %v1446
      %1448 = vmatprep.mubr.bf16.mxu0 %v744
      %1449 = vmatmul.mubr.bf16.gmra.mrb[0].mxu0 %v743
      %v1450 = vpop.f32.mrb[0].mxu0
      %v1451 = vadd.f32 0.0, %v1450
      %v1452 = vpop.f32.mrb[0].mxu0
      %v1453 = vadd.f32 0.0, %v1452
      %v1454 = vpop.f32.mrb[0].mxu0
      %v1455 = vadd.f32 0.0, %v1454
      %v1456 = vpop.f32.mrb[0].mxu0
      %v1457 = vadd.f32 0.0, %v1456
      %1458 = vmatprep.mubr.bf16.mxu0 %v746
      %1459 = vmatmul.mubr.bf16.gmra.mrb[0].mxu0 %v745
      %v1460 = vpop.f32.mrb[0].mxu0
      %v1461 = vadd.f32 0.0, %v1460
      %v1462 = vpop.f32.mrb[0].mxu0
      %v1463 = vadd.f32 0.0, %v1462
      %v1464 = vpop.f32.mrb[0].mxu0
      %v1465 = vadd.f32 0.0, %v1464
      %v1466 = vpop.f32.mrb[0].mxu0
      %v1467 = vadd.f32 0.0, %v1466
      %1468 = vmatprep.mubr.bf16.mxu0 %v748
      %1469 = vmatmul.mubr.bf16.gmra.mrb[0].mxu0 %v747
      %v1470 = vpop.f32.mrb[0].mxu0
      %v1471 = vadd.f32 0.0, %v1470
      %v1472 = vpop.f32.mrb[0].mxu0
      %v1473 = vadd.f32 0.0, %v1472
      %v1474 = vpop.f32.mrb[0].mxu0
      %v1475 = vadd.f32 0.0, %v1474
      %v1476 = vpop.f32.mrb[0].mxu0
      %v1477 = vadd.f32 0.0, %v1476
      %1478 = vmatprep.mubr.bf16.mxu0 %v750
      %1479 = vmatmul.mubr.bf16.gmra.mrb[0].mxu0 %v749
      %v1480 = vpop.f32.mrb[0].mxu0
      %v1481 = vadd.f32 0.0, %v1480
      %v1482 = vpop.f32.mrb[0].mxu0
      %v1483 = vadd.f32 0.0, %v1482
      %v1484 = vpop.f32.mrb[0].mxu0
      %v1485 = vadd.f32 0.0, %v1484
      %v1486 = vpop.f32.mrb[0].mxu0
      %v1487 = vadd.f32 0.0, %v1486
      %1488 = vmatprep.mubr.bf16.mxu0 %v752
      %1489 = vmatmul.mubr.bf16.gmra.mrb[0].mxu0 %v751
      %v1490 = vpop.f32.mrb[0].mxu0
      %v1491 = vadd.f32 0.0, %v1490
      %v1492 = vpop.f32.mrb[0].mxu0
      %v1493 = vadd.f32 0.0, %v1492
      %v1494 = vpop.f32.mrb[0].mxu0
      %v1495 = vadd.f32 0.0, %v1494
      %v1496 = vpop.f32.mrb[0].mxu0
      %v1497 = vadd.f32 0.0, %v1496
      %1498 = vmatprep.mubr.bf16.mxu0 %v754
      %1499 = vmatmul.mubr.bf16.gmra.mrb[0].mxu0 %v753
      %v1500 = vpop.f32.mrb[0].mxu0
      %v1501 = vadd.f32 0.0, %v1500
      %v1502 = vpop.f32.mrb[0].mxu0
      %v1503 = vadd.f32 0.0, %v1502
      %v1504 = vpop.f32.mrb[0].mxu0
      %v1505 = vadd.f32 0.0, %v1504
      %v1506 = vpop.f32.mrb[0].mxu0
      %v1507 = vadd.f32 0.0, %v1506
      %1508 = vmatprep.mubr.bf16.mxu0 %v756
      %1509 = vmatmul.mubr.bf16.gmra.mrb[0].mxu0 %v755
      %v1510 = vpop.f32.mrb[0].mxu0
      %v1511 = vadd.f32 0.0, %v1510
      %v1512 = vpop.f32.mrb[0].mxu0
      %v1513 = vadd.f32 0.0, %v1512
      %v1514 = vpop.f32.mrb[0].mxu0
      %v1515 = vadd.f32 0.0, %v1514
      %v1516 = vpop.f32.mrb[0].mxu0
      %v1517 = vadd.f32 0.0, %v1516
      %1518 = vmatprep.mubr.bf16.mxu0 %v758
      %1519 = vmatmul.mubr.bf16.gmra.mrb[0].mxu0 %v757
      %v1520 = vpop.f32.mrb[0].mxu0
      %v1521 = vadd.f32 0.0, %v1520
      %v1522 = vpop.f32.mrb[0].mxu0
      %v1523 = vadd.f32 0.0, %v1522
      %v1524 = vpop.f32.mrb[0].mxu0
      %v1525 = vadd.f32 0.0, %v1524
      %v1526 = vpop.f32.mrb[0].mxu0
      %v1527 = vadd.f32 0.0, %v1526
      %1528 = vdwg.mxu0
      %v1657 = vunpack.c.l.b16 %v535
      %v1658 = vunpack.c.h.b16 %v535
      %v1659 = vunpack.c.l.b16 %v536
      %v1660 = vunpack.c.h.b16 %v536
      %v1661 = vunpack.c.l.b16 %v537
      %v1662 = vunpack.c.h.b16 %v537
      %v1663 = vunpack.c.l.b16 %v538
      %v1664 = vunpack.c.h.b16 %v538
      %v1665 = vunpack.c.l.b16 %v539
      %v1666 = vunpack.c.h.b16 %v539
      %v1667 = vunpack.c.l.b16 %v540
      %v1668 = vunpack.c.h.b16 %v540
      %v1669 = vunpack.c.l.b16 %v541
      %v1670 = vunpack.c.h.b16 %v541
      %v1671 = vunpack.c.l.b16 %v542
      %v1672 = vunpack.c.h.b16 %v542
      %v1673 = vunpack.c.l.b16 %v543
      %v1674 = vunpack.c.h.b16 %v543
      %v1675 = vunpack.c.l.b16 %v544
      %v1676 = vunpack.c.h.b16 %v544
      %v1677 = vunpack.c.l.b16 %v545
      %v1678 = vunpack.c.h.b16 %v545
      %v1679 = vunpack.c.l.b16 %v546
      %v1680 = vunpack.c.h.b16 %v546
      %v1681 = vunpack.c.l.b16 %v547
      %v1682 = vunpack.c.h.b16 %v547
      %v1683 = vunpack.c.l.b16 %v548
      %v1684 = vunpack.c.h.b16 %v548
      %v1685 = vunpack.c.l.b16 %v549
      %v1686 = vunpack.c.h.b16 %v549
      %v1687 = vunpack.c.l.b16 %v550
      %v1688 = vunpack.c.h.b16 %v550
      %v1689 = vunpack.c.l.b16 %v551
      %v1690 = vunpack.c.h.b16 %v551
      %v1691 = vunpack.c.l.b16 %v552
      %v1692 = vunpack.c.h.b16 %v552
      %v1693 = vunpack.c.l.b16 %v553
      %v1694 = vunpack.c.h.b16 %v553
      %v1695 = vunpack.c.l.b16 %v554
      %v1696 = vunpack.c.h.b16 %v554
      %v1697 = vunpack.c.l.b16 %v555
      %v1698 = vunpack.c.h.b16 %v555
      %v1699 = vunpack.c.l.b16 %v556
      %v1700 = vunpack.c.h.b16 %v556
      %v1701 = vunpack.c.l.b16 %v557
      %v1702 = vunpack.c.h.b16 %v557
      %v1703 = vunpack.c.l.b16 %v558
      %v1704 = vunpack.c.h.b16 %v558
      %v1705 = vunpack.c.l.b16 %v559
      %v1706 = vunpack.c.h.b16 %v559
      %v1707 = vunpack.c.l.b16 %v560
      %v1708 = vunpack.c.h.b16 %v560
      %v1709 = vunpack.c.l.b16 %v561
      %v1710 = vunpack.c.h.b16 %v561
      %v1711 = vunpack.c.l.b16 %v562
      %v1712 = vunpack.c.h.b16 %v562
      %v1713 = vunpack.c.l.b16 %v563
      %v1714 = vunpack.c.h.b16 %v563
      %v1715 = vunpack.c.l.b16 %v564
      %v1716 = vunpack.c.h.b16 %v564
      %v1717 = vunpack.c.l.b16 %v565
      %v1718 = vunpack.c.h.b16 %v565
      %v1719 = vunpack.c.l.b16 %v566
      %v1720 = vunpack.c.h.b16 %v566
      %v1721 = vunpack.c.l.b16 %v567
      %v1722 = vunpack.c.h.b16 %v567
      %v1723 = vunpack.c.l.b16 %v568
      %v1724 = vunpack.c.h.b16 %v568
      %v1725 = vunpack.c.l.b16 %v569
      %v1726 = vunpack.c.h.b16 %v569
      %v1727 = vunpack.c.l.b16 %v570
      %v1728 = vunpack.c.h.b16 %v570
      %v1729 = vunpack.c.l.b16 %v571
      %v1730 = vunpack.c.h.b16 %v571
      %v1731 = vunpack.c.l.b16 %v572
      %v1732 = vunpack.c.h.b16 %v572
      %v1733 = vunpack.c.l.b16 %v573
      %v1734 = vunpack.c.h.b16 %v573
      %v1735 = vunpack.c.l.b16 %v574
      %v1736 = vunpack.c.h.b16 %v574
      %v1737 = vunpack.c.l.b16 %v575
      %v1738 = vunpack.c.h.b16 %v575
      %v1739 = vunpack.c.l.b16 %v576
      %v1740 = vunpack.c.h.b16 %v576
      %v1741 = vunpack.c.l.b16 %v577
      %v1742 = vunpack.c.h.b16 %v577
      %v1743 = vunpack.c.l.b16 %v578
      %v1744 = vunpack.c.h.b16 %v578
      %v1745 = vunpack.c.l.b16 %v579
      %v1746 = vunpack.c.h.b16 %v579
      %v1747 = vunpack.c.l.b16 %v580
      %v1748 = vunpack.c.h.b16 %v580
      %v1749 = vunpack.c.l.b16 %v581
      %v1750 = vunpack.c.h.b16 %v581
      %v1751 = vunpack.c.l.b16 %v582
      %v1752 = vunpack.c.h.b16 %v582
      %v1753 = vunpack.c.l.b16 %v583
      %v1754 = vunpack.c.h.b16 %v583
      %v1755 = vunpack.c.l.b16 %v584
      %v1756 = vunpack.c.h.b16 %v584
      %v1757 = vunpack.c.l.b16 %v585
      %v1758 = vunpack.c.h.b16 %v585
      %v1759 = vunpack.c.l.b16 %v586
      %v1760 = vunpack.c.h.b16 %v586
      %v1761 = vunpack.c.l.b16 %v587
      %v1762 = vunpack.c.h.b16 %v587
      %v1763 = vunpack.c.l.b16 %v588
      %v1764 = vunpack.c.h.b16 %v588
      %v1765 = vunpack.c.l.b16 %v589
      %v1766 = vunpack.c.h.b16 %v589
      %v1767 = vunpack.c.l.b16 %v590
      %v1768 = vunpack.c.h.b16 %v590
      %v1769 = vunpack.c.l.b16 %v591
      %v1770 = vunpack.c.h.b16 %v591
      %v1771 = vunpack.c.l.b16 %v592
      %v1772 = vunpack.c.h.b16 %v592
      %v1773 = vunpack.c.l.b16 %v593
      %v1774 = vunpack.c.h.b16 %v593
      %v1775 = vunpack.c.l.b16 %v594
      %v1776 = vunpack.c.h.b16 %v594
      %v1777 = vunpack.c.l.b16 %v595
      %v1778 = vunpack.c.h.b16 %v595
      %v1779 = vunpack.c.l.b16 %v596
      %v1780 = vunpack.c.h.b16 %v596
      %v1781 = vunpack.c.l.b16 %v597
      %v1782 = vunpack.c.h.b16 %v597
      %v1783 = vunpack.c.l.b16 %v598
      %v1784 = vunpack.c.h.b16 %v598
      %v1785 = vunpack.c.l.b16 %v599
      %v1786 = vunpack.c.h.b16 %v599
      %v1787 = vunpack.c.l.b16 %v600
      %v1788 = vunpack.c.h.b16 %v600
      %v1789 = vunpack.c.l.b16 %v601
      %v1790 = vunpack.c.h.b16 %v601
      %v1791 = vunpack.c.l.b16 %v602
      %v1792 = vunpack.c.h.b16 %v602
      %v1793 = vunpack.c.l.b16 %v603
      %v1794 = vunpack.c.h.b16 %v603
      %v1795 = vunpack.c.l.b16 %v604
      %v1796 = vunpack.c.h.b16 %v604
      %v1797 = vunpack.c.l.b16 %v605
      %v1798 = vunpack.c.h.b16 %v605
      %v1799 = vunpack.c.l.b16 %v606
      %v1800 = vunpack.c.h.b16 %v606
      %v1801 = vunpack.c.l.b16 %v607
      %v1802 = vunpack.c.h.b16 %v607
      %v1803 = vunpack.c.l.b16 %v608
      %v1804 = vunpack.c.h.b16 %v608
      %v1805 = vunpack.c.l.b16 %v609
      %v1806 = vunpack.c.h.b16 %v609
      %v1807 = vunpack.c.l.b16 %v610
      %v1808 = vunpack.c.h.b16 %v610
      %v1809 = vunpack.c.l.b16 %v611
      %v1810 = vunpack.c.h.b16 %v611
      %v1811 = vunpack.c.l.b16 %v612
      %v1812 = vunpack.c.h.b16 %v612
      %v1813 = vunpack.c.l.b16 %v613
      %v1814 = vunpack.c.h.b16 %v613
      %v1815 = vunpack.c.l.b16 %v614
      %v1816 = vunpack.c.h.b16 %v614
      %v1817 = vunpack.c.l.b16 %v615
      %v1818 = vunpack.c.h.b16 %v615
      %v1819 = vunpack.c.l.b16 %v616
      %v1820 = vunpack.c.h.b16 %v616
      %v1821 = vunpack.c.l.b16 %v617
      %v1822 = vunpack.c.h.b16 %v617
      %v1823 = vunpack.c.l.b16 %v618
      %v1824 = vunpack.c.h.b16 %v618
      %v1825 = vunpack.c.l.b16 %v619
      %v1826 = vunpack.c.h.b16 %v619
      %v1827 = vunpack.c.l.b16 %v620
      %v1828 = vunpack.c.h.b16 %v620
      %v1829 = vunpack.c.l.b16 %v621
      %v1830 = vunpack.c.h.b16 %v621
      %v1831 = vunpack.c.l.b16 %v622
      %v1832 = vunpack.c.h.b16 %v622
      %v1833 = vunpack.c.l.b16 %v623
      %v1834 = vunpack.c.h.b16 %v623
      %v1835 = vunpack.c.l.b16 %v624
      %v1836 = vunpack.c.h.b16 %v624
      %v1837 = vunpack.c.l.b16 %v625
      %v1838 = vunpack.c.h.b16 %v625
      %v1839 = vunpack.c.l.b16 %v626
      %v1840 = vunpack.c.h.b16 %v626
      %v1841 = vunpack.c.l.b16 %v627
      %v1842 = vunpack.c.h.b16 %v627
      %v1843 = vunpack.c.l.b16 %v628
      %v1844 = vunpack.c.h.b16 %v628
      %v1845 = vunpack.c.l.b16 %v629
      %v1846 = vunpack.c.h.b16 %v629
      %v1847 = vunpack.c.l.b16 %v630
      %v1848 = vunpack.c.h.b16 %v630
      %v1849 = vunpack.c.l.b16 %v631
      %v1850 = vunpack.c.h.b16 %v631
      %v1851 = vunpack.c.l.b16 %v632
      %v1852 = vunpack.c.h.b16 %v632
      %v1853 = vunpack.c.l.b16 %v633
      %v1854 = vunpack.c.h.b16 %v633
      %v1855 = vunpack.c.l.b16 %v634
      %v1856 = vunpack.c.h.b16 %v634
      %v1857 = vunpack.c.l.b16 %v635
      %v1858 = vunpack.c.h.b16 %v635
      %v1859 = vunpack.c.l.b16 %v636
      %v1860 = vunpack.c.h.b16 %v636
      %v1861 = vunpack.c.l.b16 %v637
      %v1862 = vunpack.c.h.b16 %v637
      %v1863 = vunpack.c.l.b16 %v638
      %v1864 = vunpack.c.h.b16 %v638
      %v1865 = vunpack.c.l.b16 %v639
      %v1866 = vunpack.c.h.b16 %v639
      %v1867 = vunpack.c.l.b16 %v640
      %v1868 = vunpack.c.h.b16 %v640
      %v1869 = vunpack.c.l.b16 %v641
      %v1870 = vunpack.c.h.b16 %v641
      %v1871 = vunpack.c.l.b16 %v642
      %v1872 = vunpack.c.h.b16 %v642
      %v1873 = vunpack.c.l.b16 %v643
      %v1874 = vunpack.c.h.b16 %v643
      %v1875 = vunpack.c.l.b16 %v644
      %v1876 = vunpack.c.h.b16 %v644
      %v1877 = vunpack.c.l.b16 %v645
      %v1878 = vunpack.c.h.b16 %v645
      %v1879 = vunpack.c.l.b16 %v646
      %v1880 = vunpack.c.h.b16 %v646
      %v1881 = vunpack.c.l.b16 %v647
      %v1882 = vunpack.c.h.b16 %v647
      %v1883 = vunpack.c.l.b16 %v648
      %v1884 = vunpack.c.h.b16 %v648
      %v1885 = vunpack.c.l.b16 %v649
      %v1886 = vunpack.c.h.b16 %v649
      %v1887 = vunpack.c.l.b16 %v650
      %v1888 = vunpack.c.h.b16 %v650
      %v1889 = vunpack.c.l.b16 %v651
      %v1890 = vunpack.c.h.b16 %v651
      %v1891 = vunpack.c.l.b16 %v652
      %v1892 = vunpack.c.h.b16 %v652
      %v1893 = vunpack.c.l.b16 %v653
      %v1894 = vunpack.c.h.b16 %v653
      %v1895 = vunpack.c.l.b16 %v654
      %v1896 = vunpack.c.h.b16 %v654
      %v1897 = vunpack.c.l.b16 %v655
      %v1898 = vunpack.c.h.b16 %v655
      %v1899 = vunpack.c.l.b16 %v656
      %v1900 = vunpack.c.h.b16 %v656
      %v1901 = vunpack.c.l.b16 %v657
      %v1902 = vunpack.c.h.b16 %v657
      %v1903 = vunpack.c.l.b16 %v658
      %v1904 = vunpack.c.h.b16 %v658
      %v1905 = vunpack.c.l.b16 %v659
      %v1906 = vunpack.c.h.b16 %v659
      %v1907 = vunpack.c.l.b16 %v660
      %v1908 = vunpack.c.h.b16 %v660
      %v1909 = vunpack.c.l.b16 %v661
      %v1910 = vunpack.c.h.b16 %v661
      %v1911 = vunpack.c.l.b16 %v662
      %v1912 = vunpack.c.h.b16 %v662
      %v1913 = vpack.c.b16 %v1661, %v1657
      %v1914 = vpack.c.b16 %v1662, %v1658
      %v1915 = vpack.c.b16 %v1663, %v1659
      %v1916 = vpack.c.b16 %v1664, %v1660
      %v1917 = vpack.c.b16 %v1669, %v1665
      %v1918 = vpack.c.b16 %v1670, %v1666
      %v1919 = vpack.c.b16 %v1671, %v1667
      %v1920 = vpack.c.b16 %v1672, %v1668
      %v1921 = vpack.c.b16 %v1677, %v1673
      %v1922 = vpack.c.b16 %v1678, %v1674
      %v1923 = vpack.c.b16 %v1679, %v1675
      %v1924 = vpack.c.b16 %v1680, %v1676
      %v1925 = vpack.c.b16 %v1685, %v1681
      %v1926 = vpack.c.b16 %v1686, %v1682
      %v1927 = vpack.c.b16 %v1687, %v1683
      %v1928 = vpack.c.b16 %v1688, %v1684
      %v1929 = vpack.c.b16 %v1693, %v1689
      %v1930 = vpack.c.b16 %v1694, %v1690
      %v1931 = vpack.c.b16 %v1695, %v1691
      %v1932 = vpack.c.b16 %v1696, %v1692
      %v1933 = vpack.c.b16 %v1701, %v1697
      %v1934 = vpack.c.b16 %v1702, %v1698
      %v1935 = vpack.c.b16 %v1703, %v1699
      %v1936 = vpack.c.b16 %v1704, %v1700
      %v1937 = vpack.c.b16 %v1709, %v1705
      %v1938 = vpack.c.b16 %v1710, %v1706
      %v1939 = vpack.c.b16 %v1711, %v1707
      %v1940 = vpack.c.b16 %v1712, %v1708
      %v1941 = vpack.c.b16 %v1717, %v1713
      %v1942 = vpack.c.b16 %v1718, %v1714
      %v1943 = vpack.c.b16 %v1719, %v1715
      %v1944 = vpack.c.b16 %v1720, %v1716
      %v1945 = vpack.c.b16 %v1725, %v1721
      %v1946 = vpack.c.b16 %v1726, %v1722
      %v1947 = vpack.c.b16 %v1727, %v1723
      %v1948 = vpack.c.b16 %v1728, %v1724
      %v1949 = vpack.c.b16 %v1733, %v1729
      %v1950 = vpack.c.b16 %v1734, %v1730
      %v1951 = vpack.c.b16 %v1735, %v1731
      %v1952 = vpack.c.b16 %v1736, %v1732
      %v1953 = vpack.c.b16 %v1741, %v1737
      %v1954 = vpack.c.b16 %v1742, %v1738
      %v1955 = vpack.c.b16 %v1743, %v1739
      %v1956 = vpack.c.b16 %v1744, %v1740
      %v1957 = vpack.c.b16 %v1749, %v1745
      %v1958 = vpack.c.b16 %v1750, %v1746
      %v1959 = vpack.c.b16 %v1751, %v1747
      %v1960 = vpack.c.b16 %v1752, %v1748
      %v1961 = vpack.c.b16 %v1757, %v1753
      %v1962 = vpack.c.b16 %v1758, %v1754
      %v1963 = vpack.c.b16 %v1759, %v1755
      %v1964 = vpack.c.b16 %v1760, %v1756
      %v1965 = vpack.c.b16 %v1765, %v1761
      %v1966 = vpack.c.b16 %v1766, %v1762
      %v1967 = vpack.c.b16 %v1767, %v1763
      %v1968 = vpack.c.b16 %v1768, %v1764
      %v1969 = vpack.c.b16 %v1773, %v1769
      %v1970 = vpack.c.b16 %v1774, %v1770
      %v1971 = vpack.c.b16 %v1775, %v1771
      %v1972 = vpack.c.b16 %v1776, %v1772
      %v1973 = vpack.c.b16 %v1781, %v1777
      %v1974 = vpack.c.b16 %v1782, %v1778
      %v1975 = vpack.c.b16 %v1783, %v1779
      %v1976 = vpack.c.b16 %v1784, %v1780
      %v1977 = vpack.c.b16 %v1789, %v1785
      %v1978 = vpack.c.b16 %v1790, %v1786
      %v1979 = vpack.c.b16 %v1791, %v1787
      %v1980 = vpack.c.b16 %v1792, %v1788
      %v1981 = vpack.c.b16 %v1797, %v1793
      %v1982 = vpack.c.b16 %v1798, %v1794
      %v1983 = vpack.c.b16 %v1799, %v1795
      %v1984 = vpack.c.b16 %v1800, %v1796
      %v1985 = vpack.c.b16 %v1805, %v1801
      %v1986 = vpack.c.b16 %v1806, %v1802
      %v1987 = vpack.c.b16 %v1807, %v1803
      %v1988 = vpack.c.b16 %v1808, %v1804
      %v1989 = vpack.c.b16 %v1813, %v1809
      %v1990 = vpack.c.b16 %v1814, %v1810
      %v1991 = vpack.c.b16 %v1815, %v1811
      %v1992 = vpack.c.b16 %v1816, %v1812
      %v1993 = vpack.c.b16 %v1821, %v1817
      %v1994 = vpack.c.b16 %v1822, %v1818
      %v1995 = vpack.c.b16 %v1823, %v1819
      %v1996 = vpack.c.b16 %v1824, %v1820
      %v1997 = vpack.c.b16 %v1829, %v1825
      %v1998 = vpack.c.b16 %v1830, %v1826
      %v1999 = vpack.c.b16 %v1831, %v1827
      %v2000 = vpack.c.b16 %v1832, %v1828
      %v2001 = vpack.c.b16 %v1837, %v1833
      %v2002 = vpack.c.b16 %v1838, %v1834
      %v2003 = vpack.c.b16 %v1839, %v1835
      %v2004 = vpack.c.b16 %v1840, %v1836
      %v2005 = vpack.c.b16 %v1845, %v1841
      %v2006 = vpack.c.b16 %v1846, %v1842
      %v2007 = vpack.c.b16 %v1847, %v1843
      %v2008 = vpack.c.b16 %v1848, %v1844
      %v2009 = vpack.c.b16 %v1853, %v1849
      %v2010 = vpack.c.b16 %v1854, %v1850
      %v2011 = vpack.c.b16 %v1855, %v1851
      %v2012 = vpack.c.b16 %v1856, %v1852
      %v2013 = vpack.c.b16 %v1861, %v1857
      %v2014 = vpack.c.b16 %v1862, %v1858
      %v2015 = vpack.c.b16 %v1863, %v1859
      %v2016 = vpack.c.b16 %v1864, %v1860
      %v2017 = vpack.c.b16 %v1869, %v1865
      %v2018 = vpack.c.b16 %v1870, %v1866
      %v2019 = vpack.c.b16 %v1871, %v1867
      %v2020 = vpack.c.b16 %v1872, %v1868
      %v2021 = vpack.c.b16 %v1877, %v1873
      %v2022 = vpack.c.b16 %v1878, %v1874
      %v2023 = vpack.c.b16 %v1879, %v1875
      %v2024 = vpack.c.b16 %v1880, %v1876
      %v2025 = vpack.c.b16 %v1885, %v1881
      %v2026 = vpack.c.b16 %v1886, %v1882
      %v2027 = vpack.c.b16 %v1887, %v1883
      %v2028 = vpack.c.b16 %v1888, %v1884
      %v2029 = vpack.c.b16 %v1893, %v1889
      %v2030 = vpack.c.b16 %v1894, %v1890
      %v2031 = vpack.c.b16 %v1895, %v1891
      %v2032 = vpack.c.b16 %v1896, %v1892
      %v2033 = vpack.c.b16 %v1901, %v1897
      %v2034 = vpack.c.b16 %v1902, %v1898
      %v2035 = vpack.c.b16 %v1903, %v1899
      %v2036 = vpack.c.b16 %v1904, %v1900
      %v2037 = vpack.c.b16 %v1909, %v1905
      %v2038 = vpack.c.b16 %v1910, %v1906
      %v2039 = vpack.c.b16 %v1911, %v1907
      %v2040 = vpack.c.b16 %v1912, %v1908
      %2169 = vmatprep.subr.bf16.mxu0 %v1914
      %2170 = vmatpush1.bf16.msra.mxu0 %v1913
      %2171 = vmatprep.subr.bf16.mxu0 %v1918
      %2172 = vmatpush1.bf16.msra.mxu0 %v1917
      %2173 = vmatprep.subr.bf16.mxu0 %v1922
      %2174 = vmatpush1.bf16.msra.mxu0 %v1921
      %2175 = vmatprep.subr.bf16.mxu0 %v1926
      %2176 = vmatpush1.bf16.msra.mxu0 %v1925
      %2177 = vmatprep.subr.bf16.mxu0 %v1930
      %2178 = vmatpush1.bf16.msra.mxu0 %v1929
      %2179 = vmatprep.subr.bf16.mxu0 %v1934
      %2180 = vmatpush1.bf16.msra.mxu0 %v1933
      %2181 = vmatprep.subr.bf16.mxu0 %v1938
      %2182 = vmatpush1.bf16.msra.mxu0 %v1937
      %2183 = vmatprep.subr.bf16.mxu0 %v1942
      %2184 = vmatpush1.bf16.msra.mxu0 %v1941
      %2185 = vmatprep.subr.bf16.mxu0 %v1946
      %2186 = vmatpush1.bf16.msra.mxu0 %v1945
      %2187 = vmatprep.subr.bf16.mxu0 %v1950
      %2188 = vmatpush1.bf16.msra.mxu0 %v1949
      %2189 = vmatprep.subr.bf16.mxu0 %v1954
      %2190 = vmatpush1.bf16.msra.mxu0 %v1953
      %2191 = vmatprep.subr.bf16.mxu0 %v1958
      %2192 = vmatpush1.bf16.msra.mxu0 %v1957
      %2193 = vmatprep.subr.bf16.mxu0 %v1962
      %2194 = vmatpush1.bf16.msra.mxu0 %v1961
      %2195 = vmatprep.subr.bf16.mxu0 %v1966
      %2196 = vmatpush1.bf16.msra.mxu0 %v1965
      %2197 = vmatprep.subr.bf16.mxu0 %v1970
      %2198 = vmatpush1.bf16.msra.mxu0 %v1969
      %2199 = vmatprep.subr.bf16.mxu0 %v1974
      %2200 = vmatpush1.bf16.msra.mxu0 %v1973
      %2201 = vmatprep.mubr.bf16.mxu0 %v472
      %2202 = vmatmul.mubr.bf16.gmra.mrb[0].mxu0 %v471
      %v2203 = vpop.f32.mrb[0].mxu0
      %v2204 = vadd.f32 %v1178, %v2203
      %v2205 = vpop.f32.mrb[0].mxu0
      %v2206 = vadd.f32 %v1180, %v2205
      %v2207 = vpop.f32.mrb[0].mxu0
      %v2208 = vadd.f32 %v1182, %v2207
      %v2209 = vpop.f32.mrb[0].mxu0
      %v2210 = vadd.f32 %v1184, %v2209
      %2211 = vmatprep.mubr.bf16.mxu0 %v476
      %2212 = vmatmul.mubr.bf16.gmra.mrb[0].mxu0 %v475
      %v2213 = vpop.f32.mrb[0].mxu0
      %v2214 = vadd.f32 %v1188, %v2213
      %v2215 = vpop.f32.mrb[0].mxu0
      %v2216 = vadd.f32 %v1190, %v2215
      %v2217 = vpop.f32.mrb[0].mxu0
      %v2218 = vadd.f32 %v1192, %v2217
      %v2219 = vpop.f32.mrb[0].mxu0
      %v2220 = vadd.f32 %v1194, %v2219
      %2221 = vmatprep.mubr.bf16.mxu0 %v480
      %2222 = vmatmul.mubr.bf16.gmra.mrb[0].mxu0 %v479
      %v2223 = vpop.f32.mrb[0].mxu0
      %v2224 = vadd.f32 %v1198, %v2223
      %v2225 = vpop.f32.mrb[0].mxu0
      %v2226 = vadd.f32 %v1200, %v2225
      %v2227 = vpop.f32.mrb[0].mxu0
      %v2228 = vadd.f32 %v1202, %v2227
      %v2229 = vpop.f32.mrb[0].mxu0
      %v2230 = vadd.f32 %v1204, %v2229
      %2231 = vmatprep.mubr.bf16.mxu0 %v484
      %2232 = vmatmul.mubr.bf16.gmra.mrb[0].mxu0 %v483
      %v2233 = vpop.f32.mrb[0].mxu0
      %v2234 = vadd.f32 %v1208, %v2233
      %v2235 = vpop.f32.mrb[0].mxu0
      %v2236 = vadd.f32 %v1210, %v2235
      %v2237 = vpop.f32.mrb[0].mxu0
      %v2238 = vadd.f32 %v1212, %v2237
      %v2239 = vpop.f32.mrb[0].mxu0
      %v2240 = vadd.f32 %v1214, %v2239
      %2241 = vmatprep.mubr.bf16.mxu0 %v488
      %2242 = vmatmul.mubr.bf16.gmra.mrb[0].mxu0 %v487
      %v2243 = vpop.f32.mrb[0].mxu0
      %v2244 = vadd.f32 %v1218, %v2243
      %v2245 = vpop.f32.mrb[0].mxu0
      %v2246 = vadd.f32 %v1220, %v2245
      %v2247 = vpop.f32.mrb[0].mxu0
      %v2248 = vadd.f32 %v1222, %v2247
      %v2249 = vpop.f32.mrb[0].mxu0
      %v2250 = vadd.f32 %v1224, %v2249
      %2251 = vmatprep.mubr.bf16.mxu0 %v492
      %2252 = vmatmul.mubr.bf16.gmra.mrb[0].mxu0 %v491
      %v2253 = vpop.f32.mrb[0].mxu0
      %v2254 = vadd.f32 %v1228, %v2253
      %v2255 = vpop.f32.mrb[0].mxu0
      %v2256 = vadd.f32 %v1230, %v2255
      %v2257 = vpop.f32.mrb[0].mxu0
      %v2258 = vadd.f32 %v1232, %v2257
      %v2259 = vpop.f32.mrb[0].mxu0
      %v2260 = vadd.f32 %v1234, %v2259
      %2261 = vmatprep.mubr.bf16.mxu0 %v496
      %2262 = vmatmul.mubr.bf16.gmra.mrb[0].mxu0 %v495
      %v2263 = vpop.f32.mrb[0].mxu0
      %v2264 = vadd.f32 %v1238, %v2263
      %v2265 = vpop.f32.mrb[0].mxu0
      %v2266 = vadd.f32 %v1240, %v2265
      %v2267 = vpop.f32.mrb[0].mxu0
      %v2268 = vadd.f32 %v1242, %v2267
      %v2269 = vpop.f32.mrb[0].mxu0
      %v2270 = vadd.f32 %v1244, %v2269
      %2271 = vmatprep.mubr.bf16.mxu0 %v500
      %2272 = vmatmul.mubr.bf16.gmra.mrb[0].mxu0 %v499
      %v2273 = vpop.f32.mrb[0].mxu0
      %v2274 = vadd.f32 %v1248, %v2273
      %v2275 = vpop.f32.mrb[0].mxu0
      %v2276 = vadd.f32 %v1250, %v2275
      %v2277 = vpop.f32.mrb[0].mxu0
      %v2278 = vadd.f32 %v1252, %v2277
      %v2279 = vpop.f32.mrb[0].mxu0
      %v2280 = vadd.f32 %v1254, %v2279
      %2281 = vmatprep.mubr.bf16.mxu0 %v504
      %2282 = vmatmul.mubr.bf16.gmra.mrb[0].mxu0 %v503
      %v2283 = vpop.f32.mrb[0].mxu0
      %v2284 = vadd.f32 %v1258, %v2283
      %v2285 = vpop.f32.mrb[0].mxu0
      %v2286 = vadd.f32 %v1260, %v2285
      %v2287 = vpop.f32.mrb[0].mxu0
      %v2288 = vadd.f32 %v1262, %v2287
      %v2289 = vpop.f32.mrb[0].mxu0
      %v2290 = vadd.f32 %v1264, %v2289
      %2291 = vmatprep.mubr.bf16.mxu0 %v508
      %2292 = vmatmul.mubr.bf16.gmra.mrb[0].mxu0 %v507
      %v2293 = vpop.f32.mrb[0].mxu0
      %v2294 = vadd.f32 %v1268, %v2293
      %v2295 = vpop.f32.mrb[0].mxu0
      %v2296 = vadd.f32 %v1270, %v2295
      %v2297 = vpop.f32.mrb[0].mxu0
      %v2298 = vadd.f32 %v1272, %v2297
      %v2299 = vpop.f32.mrb[0].mxu0
      %v2300 = vadd.f32 %v1274, %v2299
      %2301 = vmatprep.mubr.bf16.mxu0 %v512
      %2302 = vmatmul.mubr.bf16.gmra.mrb[0].mxu0 %v511
      %v2303 = vpop.f32.mrb[0].mxu0
      %v2304 = vadd.f32 %v1278, %v2303
      %v2305 = vpop.f32.mrb[0].mxu0
      %v2306 = vadd.f32 %v1280, %v2305
      %v2307 = vpop.f32.mrb[0].mxu0
      %v2308 = vadd.f32 %v1282, %v2307
      %v2309 = vpop.f32.mrb[0].mxu0
      %v2310 = vadd.f32 %v1284, %v2309
      %2311 = vmatprep.mubr.bf16.mxu0 %v516
      %2312 = vmatmul.mubr.bf16.gmra.mrb[0].mxu0 %v515
      %v2313 = vpop.f32.mrb[0].mxu0
      %v2314 = vadd.f32 %v1288, %v2313
      %v2315 = vpop.f32.mrb[0].mxu0
      %v2316 = vadd.f32 %v1290, %v2315
      %v2317 = vpop.f32.mrb[0].mxu0
      %v2318 = vadd.f32 %v1292, %v2317
      %v2319 = vpop.f32.mrb[0].mxu0
      %v2320 = vadd.f32 %v1294, %v2319
      %2321 = vmatprep.mubr.bf16.mxu0 %v520
      %2322 = vmatmul.mubr.bf16.gmra.mrb[0].mxu0 %v519
      %v2323 = vpop.f32.mrb[0].mxu0
      %v2324 = vadd.f32 %v1298, %v2323
      %v2325 = vpop.f32.mrb[0].mxu0
      %v2326 = vadd.f32 %v1300, %v2325
      %v2327 = vpop.f32.mrb[0].mxu0
      %v2328 = vadd.f32 %v1302, %v2327
      %v2329 = vpop.f32.mrb[0].mxu0
      %v2330 = vadd.f32 %v1304, %v2329
      %2331 = vmatprep.mubr.bf16.mxu0 %v524
      %2332 = vmatmul.mubr.bf16.gmra.mrb[0].mxu0 %v523
      %v2333 = vpop.f32.mrb[0].mxu0
      %v2334 = vadd.f32 %v1308, %v2333
      %v2335 = vpop.f32.mrb[0].mxu0
      %v2336 = vadd.f32 %v1310, %v2335
      %v2337 = vpop.f32.mrb[0].mxu0
      %v2338 = vadd.f32 %v1312, %v2337
      %v2339 = vpop.f32.mrb[0].mxu0
      %v2340 = vadd.f32 %v1314, %v2339
      %2341 = vmatprep.mubr.bf16.mxu0 %v528
      %2342 = vmatmul.mubr.bf16.gmra.mrb[0].mxu0 %v527
      %v2343 = vpop.f32.mrb[0].mxu0
      %v2344 = vadd.f32 %v1318, %v2343
      %v2345 = vpop.f32.mrb[0].mxu0
      %v2346 = vadd.f32 %v1320, %v2345
      %v2347 = vpop.f32.mrb[0].mxu0
      %v2348 = vadd.f32 %v1322, %v2347
      %v2349 = vpop.f32.mrb[0].mxu0
      %v2350 = vadd.f32 %v1324, %v2349
      %2351 = vmatprep.mubr.bf16.mxu0 %v532
      %2352 = vmatmul.mubr.bf16.gmra.mrb[0].mxu0 %v531
      %v2353 = vpop.f32.mrb[0].mxu0
      %v2354 = vadd.f32 %v1328, %v2353
      %v2355 = vpop.f32.mrb[0].mxu0
      %v2356 = vadd.f32 %v1330, %v2355
      %v2357 = vpop.f32.mrb[0].mxu0
      %v2358 = vadd.f32 %v1332, %v2357
      %v2359 = vpop.f32.mrb[0].mxu0
      %v2360 = vadd.f32 %v1334, %v2359
      %2361 = vdwg.mxu0
      %2362 = vmatprep.subr.bf16.mxu0 %v1978
      %2363 = vmatpush1.bf16.msra.mxu0 %v1977
      %2364 = vmatprep.subr.bf16.mxu0 %v1982
      %2365 = vmatpush1.bf16.msra.mxu0 %v1981
      %2366 = vmatprep.subr.bf16.mxu0 %v1986
      %2367 = vmatpush1.bf16.msra.mxu0 %v1985
      %2368 = vmatprep.subr.bf16.mxu0 %v1990
      %2369 = vmatpush1.bf16.msra.mxu0 %v1989
      %2370 = vmatprep.subr.bf16.mxu0 %v1994
      %2371 = vmatpush1.bf16.msra.mxu0 %v1993
      %2372 = vmatprep.subr.bf16.mxu0 %v1998
      %2373 = vmatpush1.bf16.msra.mxu0 %v1997
      %2374 = vmatprep.subr.bf16.mxu0 %v2002
      %2375 = vmatpush1.bf16.msra.mxu0 %v2001
      %2376 = vmatprep.subr.bf16.mxu0 %v2006
      %2377 = vmatpush1.bf16.msra.mxu0 %v2005
      %2378 = vmatprep.subr.bf16.mxu0 %v2010
      %2379 = vmatpush1.bf16.msra.mxu0 %v2009
      %2380 = vmatprep.subr.bf16.mxu0 %v2014
      %2381 = vmatpush1.bf16.msra.mxu0 %v2013
      %2382 = vmatprep.subr.bf16.mxu0 %v2018
      %2383 = vmatpush1.bf16.msra.mxu0 %v2017
      %2384 = vmatprep.subr.bf16.mxu0 %v2022
      %2385 = vmatpush1.bf16.msra.mxu0 %v2021
      %2386 = vmatprep.subr.bf16.mxu0 %v2026
      %2387 = vmatpush1.bf16.msra.mxu0 %v2025
      %2388 = vmatprep.subr.bf16.mxu0 %v2030
      %2389 = vmatpush1.bf16.msra.mxu0 %v2029
      %2390 = vmatprep.subr.bf16.mxu0 %v2034
      %2391 = vmatpush1.bf16.msra.mxu0 %v2033
      %2392 = vmatprep.subr.bf16.mxu0 %v2038
      %2393 = vmatpush1.bf16.msra.mxu0 %v2037
      %2394 = vmatprep.mubr.bf16.mxu0 %v474
      %2395 = vmatmul.mubr.bf16.gmra.mrb[0].mxu0 %v473
      %v2396 = vpop.f32.mrb[0].mxu0
      %v2397 = vadd.f32 %v2204, %v2396
      %v2398 = vpop.f32.mrb[0].mxu0
      %v2399 = vadd.f32 %v2206, %v2398
      %v2400 = vpop.f32.mrb[0].mxu0
      %v2401 = vadd.f32 %v2208, %v2400
      %v2402 = vpop.f32.mrb[0].mxu0
      %v2403 = vadd.f32 %v2210, %v2402
      %2404 = vmatprep.mubr.bf16.mxu0 %v478
      %2405 = vmatmul.mubr.bf16.gmra.mrb[0].mxu0 %v477
      %v2406 = vpop.f32.mrb[0].mxu0
      %v2407 = vadd.f32 %v2214, %v2406
      %v2408 = vpop.f32.mrb[0].mxu0
      %v2409 = vadd.f32 %v2216, %v2408
      %v2410 = vpop.f32.mrb[0].mxu0
      %v2411 = vadd.f32 %v2218, %v2410
      %v2412 = vpop.f32.mrb[0].mxu0
      %v2413 = vadd.f32 %v2220, %v2412
      %2414 = vmatprep.mubr.bf16.mxu0 %v482
      %2415 = vmatmul.mubr.bf16.gmra.mrb[0].mxu0 %v481
      %v2416 = vpop.f32.mrb[0].mxu0
      %v2417 = vadd.f32 %v2224, %v2416
      %v2418 = vpop.f32.mrb[0].mxu0
      %v2419 = vadd.f32 %v2226, %v2418
      %v2420 = vpop.f32.mrb[0].mxu0
      %v2421 = vadd.f32 %v2228, %v2420
      %v2422 = vpop.f32.mrb[0].mxu0
      %v2423 = vadd.f32 %v2230, %v2422
      %2424 = vmatprep.mubr.bf16.mxu0 %v486
      %2425 = vmatmul.mubr.bf16.gmra.mrb[0].mxu0 %v485
      %v2426 = vpop.f32.mrb[0].mxu0
      %v2427 = vadd.f32 %v2234, %v2426
      %v2428 = vpop.f32.mrb[0].mxu0
      %v2429 = vadd.f32 %v2236, %v2428
      %v2430 = vpop.f32.mrb[0].mxu0
      %v2431 = vadd.f32 %v2238, %v2430
      %v2432 = vpop.f32.mrb[0].mxu0
      %v2433 = vadd.f32 %v2240, %v2432
      %2434 = vmatprep.mubr.bf16.mxu0 %v490
      %2435 = vmatmul.mubr.bf16.gmra.mrb[0].mxu0 %v489
      %v2436 = vpop.f32.mrb[0].mxu0
      %v2437 = vadd.f32 %v2244, %v2436
      %v2438 = vpop.f32.mrb[0].mxu0
      %v2439 = vadd.f32 %v2246, %v2438
      %v2440 = vpop.f32.mrb[0].mxu0
      %v2441 = vadd.f32 %v2248, %v2440
      %v2442 = vpop.f32.mrb[0].mxu0
      %v2443 = vadd.f32 %v2250, %v2442
      %2444 = vmatprep.mubr.bf16.mxu0 %v494
      %2445 = vmatmul.mubr.bf16.gmra.mrb[0].mxu0 %v493
      %v2446 = vpop.f32.mrb[0].mxu0
      %v2447 = vadd.f32 %v2254, %v2446
      %v2448 = vpop.f32.mrb[0].mxu0
      %v2449 = vadd.f32 %v2256, %v2448
      %v2450 = vpop.f32.mrb[0].mxu0
      %v2451 = vadd.f32 %v2258, %v2450
      %v2452 = vpop.f32.mrb[0].mxu0
      %v2453 = vadd.f32 %v2260, %v2452
      %2454 = vmatprep.mubr.bf16.mxu0 %v498
      %2455 = vmatmul.mubr.bf16.gmra.mrb[0].mxu0 %v497
      %v2456 = vpop.f32.mrb[0].mxu0
      %v2457 = vadd.f32 %v2264, %v2456
      %v2458 = vpop.f32.mrb[0].mxu0
      %v2459 = vadd.f32 %v2266, %v2458
      %v2460 = vpop.f32.mrb[0].mxu0
      %v2461 = vadd.f32 %v2268, %v2460
      %v2462 = vpop.f32.mrb[0].mxu0
      %v2463 = vadd.f32 %v2270, %v2462
      %2464 = vmatprep.mubr.bf16.mxu0 %v502
      %2465 = vmatmul.mubr.bf16.gmra.mrb[0].mxu0 %v501
      %v2466 = vpop.f32.mrb[0].mxu0
      %v2467 = vadd.f32 %v2274, %v2466
      %v2468 = vpop.f32.mrb[0].mxu0
      %v2469 = vadd.f32 %v2276, %v2468
      %v2470 = vpop.f32.mrb[0].mxu0
      %v2471 = vadd.f32 %v2278, %v2470
      %v2472 = vpop.f32.mrb[0].mxu0
      %v2473 = vadd.f32 %v2280, %v2472
      %2474 = vmatprep.mubr.bf16.mxu0 %v506
      %2475 = vmatmul.mubr.bf16.gmra.mrb[0].mxu0 %v505
      %v2476 = vpop.f32.mrb[0].mxu0
      %v2477 = vadd.f32 %v2284, %v2476
      %v2478 = vpop.f32.mrb[0].mxu0
      %v2479 = vadd.f32 %v2286, %v2478
      %v2480 = vpop.f32.mrb[0].mxu0
      %v2481 = vadd.f32 %v2288, %v2480
      %v2482 = vpop.f32.mrb[0].mxu0
      %v2483 = vadd.f32 %v2290, %v2482
      %2484 = vmatprep.mubr.bf16.mxu0 %v510
      %2485 = vmatmul.mubr.bf16.gmra.mrb[0].mxu0 %v509
      %v2486 = vpop.f32.mrb[0].mxu0
      %v2487 = vadd.f32 %v2294, %v2486
      %v2488 = vpop.f32.mrb[0].mxu0
      %v2489 = vadd.f32 %v2296, %v2488
      %v2490 = vpop.f32.mrb[0].mxu0
      %v2491 = vadd.f32 %v2298, %v2490
      %v2492 = vpop.f32.mrb[0].mxu0
      %v2493 = vadd.f32 %v2300, %v2492
      %2494 = vmatprep.mubr.bf16.mxu0 %v514
      %2495 = vmatmul.mubr.bf16.gmra.mrb[0].mxu0 %v513
      %v2496 = vpop.f32.mrb[0].mxu0
      %v2497 = vadd.f32 %v2304, %v2496
      %v2498 = vpop.f32.mrb[0].mxu0
      %v2499 = vadd.f32 %v2306, %v2498
      %v2500 = vpop.f32.mrb[0].mxu0
      %v2501 = vadd.f32 %v2308, %v2500
      %v2502 = vpop.f32.mrb[0].mxu0
      %v2503 = vadd.f32 %v2310, %v2502
      %2504 = vmatprep.mubr.bf16.mxu0 %v518
      %2505 = vmatmul.mubr.bf16.gmra.mrb[0].mxu0 %v517
      %v2506 = vpop.f32.mrb[0].mxu0
      %v2507 = vadd.f32 %v2314, %v2506
      %v2508 = vpop.f32.mrb[0].mxu0
      %v2509 = vadd.f32 %v2316, %v2508
      %v2510 = vpop.f32.mrb[0].mxu0
      %v2511 = vadd.f32 %v2318, %v2510
      %v2512 = vpop.f32.mrb[0].mxu0
      %v2513 = vadd.f32 %v2320, %v2512
      %2514 = vmatprep.mubr.bf16.mxu0 %v522
      %2515 = vmatmul.mubr.bf16.gmra.mrb[0].mxu0 %v521
      %v2516 = vpop.f32.mrb[0].mxu0
      %v2517 = vadd.f32 %v2324, %v2516
      %v2518 = vpop.f32.mrb[0].mxu0
      %v2519 = vadd.f32 %v2326, %v2518
      %v2520 = vpop.f32.mrb[0].mxu0
      %v2521 = vadd.f32 %v2328, %v2520
      %v2522 = vpop.f32.mrb[0].mxu0
      %v2523 = vadd.f32 %v2330, %v2522
      %2524 = vmatprep.mubr.bf16.mxu0 %v526
      %2525 = vmatmul.mubr.bf16.gmra.mrb[0].mxu0 %v525
      %v2526 = vpop.f32.mrb[0].mxu0
      %v2527 = vadd.f32 %v2334, %v2526
      %v2528 = vpop.f32.mrb[0].mxu0
      %v2529 = vadd.f32 %v2336, %v2528
      %v2530 = vpop.f32.mrb[0].mxu0
      %v2531 = vadd.f32 %v2338, %v2530
      %v2532 = vpop.f32.mrb[0].mxu0
      %v2533 = vadd.f32 %v2340, %v2532
      %2534 = vmatprep.mubr.bf16.mxu0 %v530
      %2535 = vmatmul.mubr.bf16.gmra.mrb[0].mxu0 %v529
      %v2536 = vpop.f32.mrb[0].mxu0
      %v2537 = vadd.f32 %v2344, %v2536
      %v2538 = vpop.f32.mrb[0].mxu0
      %v2539 = vadd.f32 %v2346, %v2538
      %v2540 = vpop.f32.mrb[0].mxu0
      %v2541 = vadd.f32 %v2348, %v2540
      %v2542 = vpop.f32.mrb[0].mxu0
      %v2543 = vadd.f32 %v2350, %v2542
      %2544 = vmatprep.mubr.bf16.mxu0 %v534
      %2545 = vmatmul.mubr.bf16.gmra.mrb[0].mxu0 %v533
      %v2546 = vpop.f32.mrb[0].mxu0
      %v2547 = vadd.f32 %v2354, %v2546
      %v2548 = vpop.f32.mrb[0].mxu0
      %v2549 = vadd.f32 %v2356, %v2548
      %v2550 = vpop.f32.mrb[0].mxu0
      %v2551 = vadd.f32 %v2358, %v2550
      %v2552 = vpop.f32.mrb[0].mxu0
      %v2553 = vadd.f32 %v2360, %v2552
      %2554 = vdwg.mxu0
      %2555 = vmatprep.subr.bf16.mxu0 %v1916
      %2556 = vmatpush1.bf16.msra.mxu0 %v1915
      %2557 = vmatprep.subr.bf16.mxu0 %v1920
      %2558 = vmatpush1.bf16.msra.mxu0 %v1919
      %2559 = vmatprep.subr.bf16.mxu0 %v1924
      %2560 = vmatpush1.bf16.msra.mxu0 %v1923
      %2561 = vmatprep.subr.bf16.mxu0 %v1928
      %2562 = vmatpush1.bf16.msra.mxu0 %v1927
      %2563 = vmatprep.subr.bf16.mxu0 %v1932
      %2564 = vmatpush1.bf16.msra.mxu0 %v1931
      %2565 = vmatprep.subr.bf16.mxu0 %v1936
      %2566 = vmatpush1.bf16.msra.mxu0 %v1935
      %2567 = vmatprep.subr.bf16.mxu0 %v1940
      %2568 = vmatpush1.bf16.msra.mxu0 %v1939
      %2569 = vmatprep.subr.bf16.mxu0 %v1944
      %2570 = vmatpush1.bf16.msra.mxu0 %v1943
      %2571 = vmatprep.subr.bf16.mxu0 %v1948
      %2572 = vmatpush1.bf16.msra.mxu0 %v1947
      %2573 = vmatprep.subr.bf16.mxu0 %v1952
      %2574 = vmatpush1.bf16.msra.mxu0 %v1951
      %2575 = vmatprep.subr.bf16.mxu0 %v1956
      %2576 = vmatpush1.bf16.msra.mxu0 %v1955
      %2577 = vmatprep.subr.bf16.mxu0 %v1960
      %2578 = vmatpush1.bf16.msra.mxu0 %v1959
      %2579 = vmatprep.subr.bf16.mxu0 %v1964
      %2580 = vmatpush1.bf16.msra.mxu0 %v1963
      %2581 = vmatprep.subr.bf16.mxu0 %v1968
      %2582 = vmatpush1.bf16.msra.mxu0 %v1967
      %2583 = vmatprep.subr.bf16.mxu0 %v1972
      %2584 = vmatpush1.bf16.msra.mxu0 %v1971
      %2585 = vmatprep.subr.bf16.mxu0 %v1976
      %2586 = vmatpush1.bf16.msra.mxu0 %v1975
      %2587 = vmatprep.mubr.bf16.mxu0 %v472
      %2588 = vmatmul.mubr.bf16.gmra.mrb[0].mxu0 %v471
      %v2589 = vpop.f32.mrb[0].mxu0
      %v2590 = vadd.f32 %v1371, %v2589
      %v2591 = vpop.f32.mrb[0].mxu0
      %v2592 = vadd.f32 %v1373, %v2591
      %v2593 = vpop.f32.mrb[0].mxu0
      %v2594 = vadd.f32 %v1375, %v2593
      %v2595 = vpop.f32.mrb[0].mxu0
      %v2596 = vadd.f32 %v1377, %v2595
      %2597 = vmatprep.mubr.bf16.mxu0 %v476
      %2598 = vmatmul.mubr.bf16.gmra.mrb[0].mxu0 %v475
      %v2599 = vpop.f32.mrb[0].mxu0
      %v2600 = vadd.f32 %v1381, %v2599
      %v2601 = vpop.f32.mrb[0].mxu0
      %v2602 = vadd.f32 %v1383, %v2601
      %v2603 = vpop.f32.mrb[0].mxu0
      %v2604 = vadd.f32 %v1385, %v2603
      %v2605 = vpop.f32.mrb[0].mxu0
      %v2606 = vadd.f32 %v1387, %v2605
      %2607 = vmatprep.mubr.bf16.mxu0 %v480
      %2608 = vmatmul.mubr.bf16.gmra.mrb[0].mxu0 %v479
      %v2609 = vpop.f32.mrb[0].mxu0
      %v2610 = vadd.f32 %v1391, %v2609
      %v2611 = vpop.f32.mrb[0].mxu0
      %v2612 = vadd.f32 %v1393, %v2611
      %v2613 = vpop.f32.mrb[0].mxu0
      %v2614 = vadd.f32 %v1395, %v2613
      %v2615 = vpop.f32.mrb[0].mxu0
      %v2616 = vadd.f32 %v1397, %v2615
      %2617 = vmatprep.mubr.bf16.mxu0 %v484
      %2618 = vmatmul.mubr.bf16.gmra.mrb[0].mxu0 %v483
      %v2619 = vpop.f32.mrb[0].mxu0
      %v2620 = vadd.f32 %v1401, %v2619
      %v2621 = vpop.f32.mrb[0].mxu0
      %v2622 = vadd.f32 %v1403, %v2621
      %v2623 = vpop.f32.mrb[0].mxu0
      %v2624 = vadd.f32 %v1405, %v2623
      %v2625 = vpop.f32.mrb[0].mxu0
      %v2626 = vadd.f32 %v1407, %v2625
      %2627 = vmatprep.mubr.bf16.mxu0 %v488
      %2628 = vmatmul.mubr.bf16.gmra.mrb[0].mxu0 %v487
      %v2629 = vpop.f32.mrb[0].mxu0
      %v2630 = vadd.f32 %v1411, %v2629
      %v2631 = vpop.f32.mrb[0].mxu0
      %v2632 = vadd.f32 %v1413, %v2631
      %v2633 = vpop.f32.mrb[0].mxu0
      %v2634 = vadd.f32 %v1415, %v2633
      %v2635 = vpop.f32.mrb[0].mxu0
      %v2636 = vadd.f32 %v1417, %v2635
      %2637 = vmatprep.mubr.bf16.mxu0 %v492
      %2638 = vmatmul.mubr.bf16.gmra.mrb[0].mxu0 %v491
      %v2639 = vpop.f32.mrb[0].mxu0
      %v2640 = vadd.f32 %v1421, %v2639
      %v2641 = vpop.f32.mrb[0].mxu0
      %v2642 = vadd.f32 %v1423, %v2641
      %v2643 = vpop.f32.mrb[0].mxu0
      %v2644 = vadd.f32 %v1425, %v2643
      %v2645 = vpop.f32.mrb[0].mxu0
      %v2646 = vadd.f32 %v1427, %v2645
      %2647 = vmatprep.mubr.bf16.mxu0 %v496
      %2648 = vmatmul.mubr.bf16.gmra.mrb[0].mxu0 %v495
      %v2649 = vpop.f32.mrb[0].mxu0
      %v2650 = vadd.f32 %v1431, %v2649
      %v2651 = vpop.f32.mrb[0].mxu0
      %v2652 = vadd.f32 %v1433, %v2651
      %v2653 = vpop.f32.mrb[0].mxu0
      %v2654 = vadd.f32 %v1435, %v2653
      %v2655 = vpop.f32.mrb[0].mxu0
      %v2656 = vadd.f32 %v1437, %v2655
      %2657 = vmatprep.mubr.bf16.mxu0 %v500
      %2658 = vmatmul.mubr.bf16.gmra.mrb[0].mxu0 %v499
      %v2659 = vpop.f32.mrb[0].mxu0
      %v2660 = vadd.f32 %v1441, %v2659
      %v2661 = vpop.f32.mrb[0].mxu0
      %v2662 = vadd.f32 %v1443, %v2661
      %v2663 = vpop.f32.mrb[0].mxu0
      %v2664 = vadd.f32 %v1445, %v2663
      %v2665 = vpop.f32.mrb[0].mxu0
      %v2666 = vadd.f32 %v1447, %v2665
      %2667 = vmatprep.mubr.bf16.mxu0 %v504
      %2668 = vmatmul.mubr.bf16.gmra.mrb[0].mxu0 %v503
      %v2669 = vpop.f32.mrb[0].mxu0
      %v2670 = vadd.f32 %v1451, %v2669
      %v2671 = vpop.f32.mrb[0].mxu0
      %v2672 = vadd.f32 %v1453, %v2671
      %v2673 = vpop.f32.mrb[0].mxu0
      %v2674 = vadd.f32 %v1455, %v2673
      %v2675 = vpop.f32.mrb[0].mxu0
      %v2676 = vadd.f32 %v1457, %v2675
      %2677 = vmatprep.mubr.bf16.mxu0 %v508
      %2678 = vmatmul.mubr.bf16.gmra.mrb[0].mxu0 %v507
      %v2679 = vpop.f32.mrb[0].mxu0
      %v2680 = vadd.f32 %v1461, %v2679
      %v2681 = vpop.f32.mrb[0].mxu0
      %v2682 = vadd.f32 %v1463, %v2681
      %v2683 = vpop.f32.mrb[0].mxu0
      %v2684 = vadd.f32 %v1465, %v2683
      %v2685 = vpop.f32.mrb[0].mxu0
      %v2686 = vadd.f32 %v1467, %v2685
      %2687 = vmatprep.mubr.bf16.mxu0 %v512
      %2688 = vmatmul.mubr.bf16.gmra.mrb[0].mxu0 %v511
      %v2689 = vpop.f32.mrb[0].mxu0
      %v2690 = vadd.f32 %v1471, %v2689
      %v2691 = vpop.f32.mrb[0].mxu0
      %v2692 = vadd.f32 %v1473, %v2691
      %v2693 = vpop.f32.mrb[0].mxu0
      %v2694 = vadd.f32 %v1475, %v2693
      %v2695 = vpop.f32.mrb[0].mxu0
      %v2696 = vadd.f32 %v1477, %v2695
      %2697 = vmatprep.mubr.bf16.mxu0 %v516
      %2698 = vmatmul.mubr.bf16.gmra.mrb[0].mxu0 %v515
      %v2699 = vpop.f32.mrb[0].mxu0
      %v2700 = vadd.f32 %v1481, %v2699
      %v2701 = vpop.f32.mrb[0].mxu0
      %v2702 = vadd.f32 %v1483, %v2701
      %v2703 = vpop.f32.mrb[0].mxu0
      %v2704 = vadd.f32 %v1485, %v2703
      %v2705 = vpop.f32.mrb[0].mxu0
      %v2706 = vadd.f32 %v1487, %v2705
      %2707 = vmatprep.mubr.bf16.mxu0 %v520
      %2708 = vmatmul.mubr.bf16.gmra.mrb[0].mxu0 %v519
      %v2709 = vpop.f32.mrb[0].mxu0
      %v2710 = vadd.f32 %v1491, %v2709
      %v2711 = vpop.f32.mrb[0].mxu0
      %v2712 = vadd.f32 %v1493, %v2711
      %v2713 = vpop.f32.mrb[0].mxu0
      %v2714 = vadd.f32 %v1495, %v2713
      %v2715 = vpop.f32.mrb[0].mxu0
      %v2716 = vadd.f32 %v1497, %v2715
      %2717 = vmatprep.mubr.bf16.mxu0 %v524
      %2718 = vmatmul.mubr.bf16.gmra.mrb[0].mxu0 %v523
      %v2719 = vpop.f32.mrb[0].mxu0
      %v2720 = vadd.f32 %v1501, %v2719
      %v2721 = vpop.f32.mrb[0].mxu0
      %v2722 = vadd.f32 %v1503, %v2721
      %v2723 = vpop.f32.mrb[0].mxu0
      %v2724 = vadd.f32 %v1505, %v2723
      %v2725 = vpop.f32.mrb[0].mxu0
      %v2726 = vadd.f32 %v1507, %v2725
      %2727 = vmatprep.mubr.bf16.mxu0 %v528
      %2728 = vmatmul.mubr.bf16.gmra.mrb[0].mxu0 %v527
      %v2729 = vpop.f32.mrb[0].mxu0
      %v2730 = vadd.f32 %v1511, %v2729
      %v2731 = vpop.f32.mrb[0].mxu0
      %v2732 = vadd.f32 %v1513, %v2731
      %v2733 = vpop.f32.mrb[0].mxu0
      %v2734 = vadd.f32 %v1515, %v2733
      %v2735 = vpop.f32.mrb[0].mxu0
      %v2736 = vadd.f32 %v1517, %v2735
      %2737 = vmatprep.mubr.bf16.mxu0 %v532
      %2738 = vmatmul.mubr.bf16.gmra.mrb[0].mxu0 %v531
      %v2739 = vpop.f32.mrb[0].mxu0
      %v2740 = vadd.f32 %v1521, %v2739
      %v2741 = vpop.f32.mrb[0].mxu0
      %v2742 = vadd.f32 %v1523, %v2741
      %v2743 = vpop.f32.mrb[0].mxu0
      %v2744 = vadd.f32 %v1525, %v2743
      %v2745 = vpop.f32.mrb[0].mxu0
      %v2746 = vadd.f32 %v1527, %v2745
      %2747 = vdwg.mxu0
      %2748 = vmatprep.subr.bf16.mxu0 %v1980
      %2749 = vmatpush1.bf16.msra.mxu0 %v1979
      %2750 = vmatprep.subr.bf16.mxu0 %v1984
      %2751 = vmatpush1.bf16.msra.mxu0 %v1983
      %2752 = vmatprep.subr.bf16.mxu0 %v1988
      %2753 = vmatpush1.bf16.msra.mxu0 %v1987
      %2754 = vmatprep.subr.bf16.mxu0 %v1992
      %2755 = vmatpush1.bf16.msra.mxu0 %v1991
      %2756 = vmatprep.subr.bf16.mxu0 %v1996
      %2757 = vmatpush1.bf16.msra.mxu0 %v1995
      %2758 = vmatprep.subr.bf16.mxu0 %v2000
      %2759 = vmatpush1.bf16.msra.mxu0 %v1999
      %2760 = vmatprep.subr.bf16.mxu0 %v2004
      %2761 = vmatpush1.bf16.msra.mxu0 %v2003
      %2762 = vmatprep.subr.bf16.mxu0 %v2008
      %2763 = vmatpush1.bf16.msra.mxu0 %v2007
      %2764 = vmatprep.subr.bf16.mxu0 %v2012
      %2765 = vmatpush1.bf16.msra.mxu0 %v2011
      %2766 = vmatprep.subr.bf16.mxu0 %v2016
      %2767 = vmatpush1.bf16.msra.mxu0 %v2015
      %2768 = vmatprep.subr.bf16.mxu0 %v2020
      %2769 = vmatpush1.bf16.msra.mxu0 %v2019
      %2770 = vmatprep.subr.bf16.mxu0 %v2024
      %2771 = vmatpush1.bf16.msra.mxu0 %v2023
      %2772 = vmatprep.subr.bf16.mxu0 %v2028
      %2773 = vmatpush1.bf16.msra.mxu0 %v2027
      %2774 = vmatprep.subr.bf16.mxu0 %v2032
      %2775 = vmatpush1.bf16.msra.mxu0 %v2031
      %2776 = vmatprep.subr.bf16.mxu0 %v2036
      %2777 = vmatpush1.bf16.msra.mxu0 %v2035
      %2778 = vmatprep.subr.bf16.mxu0 %v2040
      %2779 = vmatpush1.bf16.msra.mxu0 %v2039
      %2780 = vmatprep.mubr.bf16.mxu0 %v474
      %2781 = vmatmul.mubr.bf16.gmra.mrb[0].mxu0 %v473
      %v2782 = vpop.f32.mrb[0].mxu0
      %v2783 = vadd.f32 %v2590, %v2782
      %v2784 = vpop.f32.mrb[0].mxu0
      %v2785 = vadd.f32 %v2592, %v2784
      %v2786 = vpop.f32.mrb[0].mxu0
      %v2787 = vadd.f32 %v2594, %v2786
      %v2788 = vpop.f32.mrb[0].mxu0
      %v2789 = vadd.f32 %v2596, %v2788
      %2790 = vmatprep.mubr.bf16.mxu0 %v478
      %2791 = vmatmul.mubr.bf16.gmra.mrb[0].mxu0 %v477
      %v2792 = vpop.f32.mrb[0].mxu0
      %v2793 = vadd.f32 %v2600, %v2792
      %v2794 = vpop.f32.mrb[0].mxu0
      %v2795 = vadd.f32 %v2602, %v2794
      %v2796 = vpop.f32.mrb[0].mxu0
      %v2797 = vadd.f32 %v2604, %v2796
      %v2798 = vpop.f32.mrb[0].mxu0
      %v2799 = vadd.f32 %v2606, %v2798
      %2800 = vmatprep.mubr.bf16.mxu0 %v482
      %2801 = vmatmul.mubr.bf16.gmra.mrb[0].mxu0 %v481
      %v2802 = vpop.f32.mrb[0].mxu0
      %v2803 = vadd.f32 %v2610, %v2802
      %v2804 = vpop.f32.mrb[0].mxu0
      %v2805 = vadd.f32 %v2612, %v2804
      %v2806 = vpop.f32.mrb[0].mxu0
      %v2807 = vadd.f32 %v2614, %v2806
      %v2808 = vpop.f32.mrb[0].mxu0
      %v2809 = vadd.f32 %v2616, %v2808
      %2810 = vmatprep.mubr.bf16.mxu0 %v486
      %2811 = vmatmul.mubr.bf16.gmra.mrb[0].mxu0 %v485
      %v2812 = vpop.f32.mrb[0].mxu0
      %v2813 = vadd.f32 %v2620, %v2812
      %v2814 = vpop.f32.mrb[0].mxu0
      %v2815 = vadd.f32 %v2622, %v2814
      %v2816 = vpop.f32.mrb[0].mxu0
      %v2817 = vadd.f32 %v2624, %v2816
      %v2818 = vpop.f32.mrb[0].mxu0
      %v2819 = vadd.f32 %v2626, %v2818
      %2820 = vmatprep.mubr.bf16.mxu0 %v490
      %2821 = vmatmul.mubr.bf16.gmra.mrb[0].mxu0 %v489
      %v2822 = vpop.f32.mrb[0].mxu0
      %v2823 = vadd.f32 %v2630, %v2822
      %v2824 = vpop.f32.mrb[0].mxu0
      %v2825 = vadd.f32 %v2632, %v2824
      %v2826 = vpop.f32.mrb[0].mxu0
      %v2827 = vadd.f32 %v2634, %v2826
      %v2828 = vpop.f32.mrb[0].mxu0
      %v2829 = vadd.f32 %v2636, %v2828
      %2830 = vmatprep.mubr.bf16.mxu0 %v494
      %2831 = vmatmul.mubr.bf16.gmra.mrb[0].mxu0 %v493
      %v2832 = vpop.f32.mrb[0].mxu0
      %v2833 = vadd.f32 %v2640, %v2832
      %v2834 = vpop.f32.mrb[0].mxu0
      %v2835 = vadd.f32 %v2642, %v2834
      %v2836 = vpop.f32.mrb[0].mxu0
      %v2837 = vadd.f32 %v2644, %v2836
      %v2838 = vpop.f32.mrb[0].mxu0
      %v2839 = vadd.f32 %v2646, %v2838
      %2840 = vmatprep.mubr.bf16.mxu0 %v498
      %2841 = vmatmul.mubr.bf16.gmra.mrb[0].mxu0 %v497
      %v2842 = vpop.f32.mrb[0].mxu0
      %v2843 = vadd.f32 %v2650, %v2842
      %v2844 = vpop.f32.mrb[0].mxu0
      %v2845 = vadd.f32 %v2652, %v2844
      %v2846 = vpop.f32.mrb[0].mxu0
      %v2847 = vadd.f32 %v2654, %v2846
      %v2848 = vpop.f32.mrb[0].mxu0
      %v2849 = vadd.f32 %v2656, %v2848
      %2850 = vmatprep.mubr.bf16.mxu0 %v502
      %2851 = vmatmul.mubr.bf16.gmra.mrb[0].mxu0 %v501
      %v2852 = vpop.f32.mrb[0].mxu0
      %v2853 = vadd.f32 %v2660, %v2852
      %v2854 = vpop.f32.mrb[0].mxu0
      %v2855 = vadd.f32 %v2662, %v2854
      %v2856 = vpop.f32.mrb[0].mxu0
      %v2857 = vadd.f32 %v2664, %v2856
      %v2858 = vpop.f32.mrb[0].mxu0
      %v2859 = vadd.f32 %v2666, %v2858
      %2860 = vmatprep.mubr.bf16.mxu0 %v506
      %2861 = vmatmul.mubr.bf16.gmra.mrb[0].mxu0 %v505
      %v2862 = vpop.f32.mrb[0].mxu0
      %v2863 = vadd.f32 %v2670, %v2862
      %v2864 = vpop.f32.mrb[0].mxu0
      %v2865 = vadd.f32 %v2672, %v2864
      %v2866 = vpop.f32.mrb[0].mxu0
      %v2867 = vadd.f32 %v2674, %v2866
      %v2868 = vpop.f32.mrb[0].mxu0
      %v2869 = vadd.f32 %v2676, %v2868
      %2870 = vmatprep.mubr.bf16.mxu0 %v510
      %2871 = vmatmul.mubr.bf16.gmra.mrb[0].mxu0 %v509
      %v2872 = vpop.f32.mrb[0].mxu0
      %v2873 = vadd.f32 %v2680, %v2872
      %v2874 = vpop.f32.mrb[0].mxu0
      %v2875 = vadd.f32 %v2682, %v2874
      %v2876 = vpop.f32.mrb[0].mxu0
      %v2877 = vadd.f32 %v2684, %v2876
      %v2878 = vpop.f32.mrb[0].mxu0
      %v2879 = vadd.f32 %v2686, %v2878
      %2880 = vmatprep.mubr.bf16.mxu0 %v514
      %2881 = vmatmul.mubr.bf16.gmra.mrb[0].mxu0 %v513
      %v2882 = vpop.f32.mrb[0].mxu0
      %v2883 = vadd.f32 %v2690, %v2882
      %v2884 = vpop.f32.mrb[0].mxu0
      %v2885 = vadd.f32 %v2692, %v2884
      %v2886 = vpop.f32.mrb[0].mxu0
      %v2887 = vadd.f32 %v2694, %v2886
      %v2888 = vpop.f32.mrb[0].mxu0
      %v2889 = vadd.f32 %v2696, %v2888
      %2890 = vmatprep.mubr.bf16.mxu0 %v518
      %2891 = vmatmul.mubr.bf16.gmra.mrb[0].mxu0 %v517
      %v2892 = vpop.f32.mrb[0].mxu0
      %v2893 = vadd.f32 %v2700, %v2892
      %v2894 = vpop.f32.mrb[0].mxu0
      %v2895 = vadd.f32 %v2702, %v2894
      %v2896 = vpop.f32.mrb[0].mxu0
      %v2897 = vadd.f32 %v2704, %v2896
      %v2898 = vpop.f32.mrb[0].mxu0
      %v2899 = vadd.f32 %v2706, %v2898
      %2900 = vmatprep.mubr.bf16.mxu0 %v522
      %2901 = vmatmul.mubr.bf16.gmra.mrb[0].mxu0 %v521
      %v2902 = vpop.f32.mrb[0].mxu0
      %v2903 = vadd.f32 %v2710, %v2902
      %v2904 = vpop.f32.mrb[0].mxu0
      %v2905 = vadd.f32 %v2712, %v2904
      %v2906 = vpop.f32.mrb[0].mxu0
      %v2907 = vadd.f32 %v2714, %v2906
      %v2908 = vpop.f32.mrb[0].mxu0
      %v2909 = vadd.f32 %v2716, %v2908
      %2910 = vmatprep.mubr.bf16.mxu0 %v526
      %2911 = vmatmul.mubr.bf16.gmra.mrb[0].mxu0 %v525
      %v2912 = vpop.f32.mrb[0].mxu0
      %v2913 = vadd.f32 %v2720, %v2912
      %v2914 = vpop.f32.mrb[0].mxu0
      %v2915 = vadd.f32 %v2722, %v2914
      %v2916 = vpop.f32.mrb[0].mxu0
      %v2917 = vadd.f32 %v2724, %v2916
      %v2918 = vpop.f32.mrb[0].mxu0
      %v2919 = vadd.f32 %v2726, %v2918
      %2920 = vmatprep.mubr.bf16.mxu0 %v530
      %2921 = vmatmul.mubr.bf16.gmra.mrb[0].mxu0 %v529
      %v2922 = vpop.f32.mrb[0].mxu0
      %v2923 = vadd.f32 %v2730, %v2922
      %v2924 = vpop.f32.mrb[0].mxu0
      %v2925 = vadd.f32 %v2732, %v2924
      %v2926 = vpop.f32.mrb[0].mxu0
      %v2927 = vadd.f32 %v2734, %v2926
      %v2928 = vpop.f32.mrb[0].mxu0
      %v2929 = vadd.f32 %v2736, %v2928
      %2930 = vmatprep.mubr.bf16.mxu0 %v534
      %2931 = vmatmul.mubr.bf16.gmra.mrb[0].mxu0 %v533
      %v2932 = vpop.f32.mrb[0].mxu0
      %v2933 = vadd.f32 %v2740, %v2932
      %v2934 = vpop.f32.mrb[0].mxu0
      %v2935 = vadd.f32 %v2742, %v2934
      %v2936 = vpop.f32.mrb[0].mxu0
      %v2937 = vadd.f32 %v2744, %v2936
      %v2938 = vpop.f32.mrb[0].mxu0
      %v2939 = vadd.f32 %v2746, %v2938
      %2940 = vdwg.mxu0
      %v2941 = vld [vmem:[%s334] sm:$0xf]
      %v2943 = vlaneseq
      %v2944 = vshrl.u32 %v2943, 7
      %v2945 = vsub.s32 0, %v2944
      %v2946 = vrot.slane %v2941, %v2945
      %v2947 = vlaneseq
      %v2948 = vshrl.u32 %v2947, 7
      %v2949 = vsub.s32 1, %v2948
      %v2950 = vrot.slane %v2941, %v2949
      %v2951 = vlaneseq
      %v2952 = vshrl.u32 %v2951, 7
      %v2953 = vsub.s32 2, %v2952
      %v2954 = vrot.slane %v2941, %v2953
      %v2955 = vlaneseq
      %v2956 = vshrl.u32 %v2955, 7
      %v2957 = vsub.s32 3, %v2956
      %v2958 = vrot.slane %v2941, %v2957
      %v2963 = vadd.f32 %v2397, %v2946
      %v2964 = vadd.f32 %v2399, %v2950
      %v2965 = vadd.f32 %v2783, %v2954
      %v2966 = vadd.f32 %v2785, %v2958
      %v2967 = vadd.f32 %v2401, %v2946
      %v2968 = vadd.f32 %v2403, %v2950
      %v2969 = vadd.f32 %v2787, %v2954
      %v2970 = vadd.f32 %v2789, %v2958
      %v2971 = vadd.f32 %v2407, %v2946
      %v2972 = vadd.f32 %v2409, %v2950
      %v2973 = vadd.f32 %v2793, %v2954
      %v2974 = vadd.f32 %v2795, %v2958
      %v2975 = vadd.f32 %v2411, %v2946
      %v2976 = vadd.f32 %v2413, %v2950
      %v2977 = vadd.f32 %v2797, %v2954
      %v2978 = vadd.f32 %v2799, %v2958
      %v2979 = vadd.f32 %v2417, %v2946
      %v2980 = vadd.f32 %v2419, %v2950
      %v2981 = vadd.f32 %v2803, %v2954
      %v2982 = vadd.f32 %v2805, %v2958
      %v2983 = vadd.f32 %v2421, %v2946
      %v2984 = vadd.f32 %v2423, %v2950
      %v2985 = vadd.f32 %v2807, %v2954
      %v2986 = vadd.f32 %v2809, %v2958
      %v2987 = vadd.f32 %v2427, %v2946
      %v2988 = vadd.f32 %v2429, %v2950
      %v2989 = vadd.f32 %v2813, %v2954
      %v2990 = vadd.f32 %v2815, %v2958
      %v2991 = vadd.f32 %v2431, %v2946
      %v2992 = vadd.f32 %v2433, %v2950
      %v2993 = vadd.f32 %v2817, %v2954
      %v2994 = vadd.f32 %v2819, %v2958
      %v2995 = vadd.f32 %v2437, %v2946
      %v2996 = vadd.f32 %v2439, %v2950
      %v2997 = vadd.f32 %v2823, %v2954
      %v2998 = vadd.f32 %v2825, %v2958
      %v2999 = vadd.f32 %v2441, %v2946
      %v3000 = vadd.f32 %v2443, %v2950
      %v3001 = vadd.f32 %v2827, %v2954
      %v3002 = vadd.f32 %v2829, %v2958
      %v3003 = vadd.f32 %v2447, %v2946
      %v3004 = vadd.f32 %v2449, %v2950
      %v3005 = vadd.f32 %v2833, %v2954
      %v3006 = vadd.f32 %v2835, %v2958
      %v3007 = vadd.f32 %v2451, %v2946
      %v3008 = vadd.f32 %v2453, %v2950
      %v3009 = vadd.f32 %v2837, %v2954
      %v3010 = vadd.f32 %v2839, %v2958
      %v3011 = vadd.f32 %v2457, %v2946
      %v3012 = vadd.f32 %v2459, %v2950
      %v3013 = vadd.f32 %v2843, %v2954
      %v3014 = vadd.f32 %v2845, %v2958
      %v3015 = vadd.f32 %v2461, %v2946
      %v3016 = vadd.f32 %v2463, %v2950
      %v3017 = vadd.f32 %v2847, %v2954
      %v3018 = vadd.f32 %v2849, %v2958
      %v3019 = vadd.f32 %v2467, %v2946
      %v3020 = vadd.f32 %v2469, %v2950
      %v3021 = vadd.f32 %v2853, %v2954
      %v3022 = vadd.f32 %v2855, %v2958
      %v3023 = vadd.f32 %v2471, %v2946
      %v3024 = vadd.f32 %v2473, %v2950
      %v3025 = vadd.f32 %v2857, %v2954
      %v3026 = vadd.f32 %v2859, %v2958
      %v3027 = vadd.f32 %v2477, %v2946
      %v3028 = vadd.f32 %v2479, %v2950
      %v3029 = vadd.f32 %v2863, %v2954
      %v3030 = vadd.f32 %v2865, %v2958
      %v3031 = vadd.f32 %v2481, %v2946
      %v3032 = vadd.f32 %v2483, %v2950
      %v3033 = vadd.f32 %v2867, %v2954
      %v3034 = vadd.f32 %v2869, %v2958
      %v3035 = vadd.f32 %v2487, %v2946
      %v3036 = vadd.f32 %v2489, %v2950
      %v3037 = vadd.f32 %v2873, %v2954
      %v3038 = vadd.f32 %v2875, %v2958
      %v3039 = vadd.f32 %v2491, %v2946
      %v3040 = vadd.f32 %v2493, %v2950
      %v3041 = vadd.f32 %v2877, %v2954
      %v3042 = vadd.f32 %v2879, %v2958
      %v3043 = vadd.f32 %v2497, %v2946
      %v3044 = vadd.f32 %v2499, %v2950
      %v3045 = vadd.f32 %v2883, %v2954
      %v3046 = vadd.f32 %v2885, %v2958
      %v3047 = vadd.f32 %v2501, %v2946
      %v3048 = vadd.f32 %v2503, %v2950
      %v3049 = vadd.f32 %v2887, %v2954
      %v3050 = vadd.f32 %v2889, %v2958
      %v3051 = vadd.f32 %v2507, %v2946
      %v3052 = vadd.f32 %v2509, %v2950
      %v3053 = vadd.f32 %v2893, %v2954
      %v3054 = vadd.f32 %v2895, %v2958
      %v3055 = vadd.f32 %v2511, %v2946
      %v3056 = vadd.f32 %v2513, %v2950
      %v3057 = vadd.f32 %v2897, %v2954
      %v3058 = vadd.f32 %v2899, %v2958
      %v3059 = vadd.f32 %v2517, %v2946
      %v3060 = vadd.f32 %v2519, %v2950
      %v3061 = vadd.f32 %v2903, %v2954
      %v3062 = vadd.f32 %v2905, %v2958
      %v3063 = vadd.f32 %v2521, %v2946
      %v3064 = vadd.f32 %v2523, %v2950
      %v3065 = vadd.f32 %v2907, %v2954
      %v3066 = vadd.f32 %v2909, %v2958
      %v3067 = vadd.f32 %v2527, %v2946
      %v3068 = vadd.f32 %v2529, %v2950
      %v3069 = vadd.f32 %v2913, %v2954
      %v3070 = vadd.f32 %v2915, %v2958
      %v3071 = vadd.f32 %v2531, %v2946
      %v3072 = vadd.f32 %v2533, %v2950
      %v3073 = vadd.f32 %v2917, %v2954
      %v3074 = vadd.f32 %v2919, %v2958
      %v3075 = vadd.f32 %v2537, %v2946
      %v3076 = vadd.f32 %v2539, %v2950
      %v3077 = vadd.f32 %v2923, %v2954
      %v3078 = vadd.f32 %v2925, %v2958
      %v3079 = vadd.f32 %v2541, %v2946
      %v3080 = vadd.f32 %v2543, %v2950
      %v3081 = vadd.f32 %v2927, %v2954
      %v3082 = vadd.f32 %v2929, %v2958
      %v3083 = vadd.f32 %v2547, %v2946
      %v3084 = vadd.f32 %v2549, %v2950
      %v3085 = vadd.f32 %v2933, %v2954
      %v3086 = vadd.f32 %v2935, %v2958
      %v3087 = vadd.f32 %v2551, %v2946
      %v3088 = vadd.f32 %v2553, %v2950
      %v3089 = vadd.f32 %v2937, %v2954
      %v3090 = vadd.f32 %v2939, %v2958
      %v3091 = vxor.u32 %v2963, 2147483648
      %v3092 = vxor.u32 %v2964, 2147483648
      %v3093 = vxor.u32 %v2965, 2147483648
      %v3094 = vxor.u32 %v2966, 2147483648
      %v3095 = vxor.u32 %v2967, 2147483648
      %v3096 = vxor.u32 %v2968, 2147483648
      %v3097 = vxor.u32 %v2969, 2147483648
      %v3098 = vxor.u32 %v2970, 2147483648
      %v3099 = vxor.u32 %v2971, 2147483648
      %v3100 = vxor.u32 %v2972, 2147483648
      %v3101 = vxor.u32 %v2973, 2147483648
      %v3102 = vxor.u32 %v2974, 2147483648
      %v3103 = vxor.u32 %v2975, 2147483648
      %v3104 = vxor.u32 %v2976, 2147483648
      %v3105 = vxor.u32 %v2977, 2147483648
      %v3106 = vxor.u32 %v2978, 2147483648
      %v3107 = vxor.u32 %v2979, 2147483648
      %v3108 = vxor.u32 %v2980, 2147483648
      %v3109 = vxor.u32 %v2981, 2147483648
      %v3110 = vxor.u32 %v2982, 2147483648
      %v3111 = vxor.u32 %v2983, 2147483648
      %v3112 = vxor.u32 %v2984, 2147483648
      %v3113 = vxor.u32 %v2985, 2147483648
      %v3114 = vxor.u32 %v2986, 2147483648
      %v3115 = vxor.u32 %v2987, 2147483648
      %v3116 = vxor.u32 %v2988, 2147483648
      %v3117 = vxor.u32 %v2989, 2147483648
      %v3118 = vxor.u32 %v2990, 2147483648
      %v3119 = vxor.u32 %v2991, 2147483648
      %v3120 = vxor.u32 %v2992, 2147483648
      %v3121 = vxor.u32 %v2993, 2147483648
      %v3122 = vxor.u32 %v2994, 2147483648
      %v3123 = vxor.u32 %v2995, 2147483648
      %v3124 = vxor.u32 %v2996, 2147483648
      %v3125 = vxor.u32 %v2997, 2147483648
      %v3126 = vxor.u32 %v2998, 2147483648
      %v3127 = vxor.u32 %v2999, 2147483648
      %v3128 = vxor.u32 %v3000, 2147483648
      %v3129 = vxor.u32 %v3001, 2147483648
      %v3130 = vxor.u32 %v3002, 2147483648
      %v3131 = vxor.u32 %v3003, 2147483648
      %v3132 = vxor.u32 %v3004, 2147483648
      %v3133 = vxor.u32 %v3005, 2147483648
      %v3134 = vxor.u32 %v3006, 2147483648
      %v3135 = vxor.u32 %v3007, 2147483648
      %v3136 = vxor.u32 %v3008, 2147483648
      %v3137 = vxor.u32 %v3009, 2147483648
      %v3138 = vxor.u32 %v3010, 2147483648
      %v3139 = vxor.u32 %v3011, 2147483648
      %v3140 = vxor.u32 %v3012, 2147483648
      %v3141 = vxor.u32 %v3013, 2147483648
      %v3142 = vxor.u32 %v3014, 2147483648
      %v3143 = vxor.u32 %v3015, 2147483648
      %v3144 = vxor.u32 %v3016, 2147483648
      %v3145 = vxor.u32 %v3017, 2147483648
      %v3146 = vxor.u32 %v3018, 2147483648
      %v3147 = vxor.u32 %v3019, 2147483648
      %v3148 = vxor.u32 %v3020, 2147483648
      %v3149 = vxor.u32 %v3021, 2147483648
      %v3150 = vxor.u32 %v3022, 2147483648
      %v3151 = vxor.u32 %v3023, 2147483648
      %v3152 = vxor.u32 %v3024, 2147483648
      %v3153 = vxor.u32 %v3025, 2147483648
      %v3154 = vxor.u32 %v3026, 2147483648
      %v3155 = vxor.u32 %v3027, 2147483648
      %v3156 = vxor.u32 %v3028, 2147483648
      %v3157 = vxor.u32 %v3029, 2147483648
      %v3158 = vxor.u32 %v3030, 2147483648
      %v3159 = vxor.u32 %v3031, 2147483648
      %v3160 = vxor.u32 %v3032, 2147483648
      %v3161 = vxor.u32 %v3033, 2147483648
      %v3162 = vxor.u32 %v3034, 2147483648
      %v3163 = vxor.u32 %v3035, 2147483648
      %v3164 = vxor.u32 %v3036, 2147483648
      %v3165 = vxor.u32 %v3037, 2147483648
      %v3166 = vxor.u32 %v3038, 2147483648
      %v3167 = vxor.u32 %v3039, 2147483648
      %v3168 = vxor.u32 %v3040, 2147483648
      %v3169 = vxor.u32 %v3041, 2147483648
      %v3170 = vxor.u32 %v3042, 2147483648
      %v3171 = vxor.u32 %v3043, 2147483648
      %v3172 = vxor.u32 %v3044, 2147483648
      %v3173 = vxor.u32 %v3045, 2147483648
      %v3174 = vxor.u32 %v3046, 2147483648
      %v3175 = vxor.u32 %v3047, 2147483648
      %v3176 = vxor.u32 %v3048, 2147483648
      %v3177 = vxor.u32 %v3049, 2147483648
      %v3178 = vxor.u32 %v3050, 2147483648
      %v3179 = vxor.u32 %v3051, 2147483648
      %v3180 = vxor.u32 %v3052, 2147483648
      %v3181 = vxor.u32 %v3053, 2147483648
      %v3182 = vxor.u32 %v3054, 2147483648
      %v3183 = vxor.u32 %v3055, 2147483648
      %v3184 = vxor.u32 %v3056, 2147483648
      %v3185 = vxor.u32 %v3057, 2147483648
      %v3186 = vxor.u32 %v3058, 2147483648
      %v3187 = vxor.u32 %v3059, 2147483648
      %v3188 = vxor.u32 %v3060, 2147483648
      %v3189 = vxor.u32 %v3061, 2147483648
      %v3190 = vxor.u32 %v3062, 2147483648
      %v3191 = vxor.u32 %v3063, 2147483648
      %v3192 = vxor.u32 %v3064, 2147483648
      %v3193 = vxor.u32 %v3065, 2147483648
      %v3194 = vxor.u32 %v3066, 2147483648
      %v3195 = vxor.u32 %v3067, 2147483648
      %v3196 = vxor.u32 %v3068, 2147483648
      %v3197 = vxor.u32 %v3069, 2147483648
      %v3198 = vxor.u32 %v3070, 2147483648
      %v3199 = vxor.u32 %v3071, 2147483648
      %v3200 = vxor.u32 %v3072, 2147483648
      %v3201 = vxor.u32 %v3073, 2147483648
      %v3202 = vxor.u32 %v3074, 2147483648
      %v3203 = vxor.u32 %v3075, 2147483648
      %v3204 = vxor.u32 %v3076, 2147483648
      %v3205 = vxor.u32 %v3077, 2147483648
      %v3206 = vxor.u32 %v3078, 2147483648
      %v3207 = vxor.u32 %v3079, 2147483648
      %v3208 = vxor.u32 %v3080, 2147483648
      %v3209 = vxor.u32 %v3081, 2147483648
      %v3210 = vxor.u32 %v3082, 2147483648
      %v3211 = vxor.u32 %v3083, 2147483648
      %v3212 = vxor.u32 %v3084, 2147483648
      %v3213 = vxor.u32 %v3085, 2147483648
      %v3214 = vxor.u32 %v3086, 2147483648
      %v3215 = vxor.u32 %v3087, 2147483648
      %v3216 = vxor.u32 %v3088, 2147483648
      %v3217 = vxor.u32 %v3089, 2147483648
      %v3218 = vxor.u32 %v3090, 2147483648
      %v3219 = vmul.f32 %v3091, 1.442695
      %v3220 = vpow.pop %v3219
      %v3221 = vmul.f32 %v3092, 1.442695
      %v3222 = vpow.pop %v3221
      %v3223 = vmul.f32 %v3093, 1.442695
      %v3224 = vpow.pop %v3223
      %v3225 = vmul.f32 %v3094, 1.442695
      %v3226 = vpow.pop %v3225
      %v3227 = vmul.f32 %v3095, 1.442695
      %v3228 = vpow.pop %v3227
      %v3229 = vmul.f32 %v3096, 1.442695
      %v3230 = vpow.pop %v3229
      %v3231 = vmul.f32 %v3097, 1.442695
      %v3232 = vpow.pop %v3231
      %v3233 = vmul.f32 %v3098, 1.442695
      %v3234 = vpow.pop %v3233
      %v3235 = vmul.f32 %v3099, 1.442695
      %v3236 = vpow.pop %v3235
      %v3237 = vmul.f32 %v3100, 1.442695
      %v3238 = vpow.pop %v3237
      %v3239 = vmul.f32 %v3101, 1.442695
      %v3240 = vpow.pop %v3239
      %v3241 = vmul.f32 %v3102, 1.442695
      %v3242 = vpow.pop %v3241
      %v3243 = vmul.f32 %v3103, 1.442695
      %v3244 = vpow.pop %v3243
      %v3245 = vmul.f32 %v3104, 1.442695
      %v3246 = vpow.pop %v3245
      %v3247 = vmul.f32 %v3105, 1.442695
      %v3248 = vpow.pop %v3247
      %v3249 = vmul.f32 %v3106, 1.442695
      %v3250 = vpow.pop %v3249
      %v3251 = vmul.f32 %v3107, 1.442695
      %v3252 = vpow.pop %v3251
      %v3253 = vmul.f32 %v3108, 1.442695
      %v3254 = vpow.pop %v3253
      %v3255 = vmul.f32 %v3109, 1.442695
      %v3256 = vpow.pop %v3255
      %v3257 = vmul.f32 %v3110, 1.442695
      %v3258 = vpow.pop %v3257
      %v3259 = vmul.f32 %v3111, 1.442695
      %v3260 = vpow.pop %v3259
      %v3261 = vmul.f32 %v3112, 1.442695
      %v3262 = vpow.pop %v3261
      %v3263 = vmul.f32 %v3113, 1.442695
      %v3264 = vpow.pop %v3263
      %v3265 = vmul.f32 %v3114, 1.442695
      %v3266 = vpow.pop %v3265
      %v3267 = vmul.f32 %v3115, 1.442695
      %v3268 = vpow.pop %v3267
      %v3269 = vmul.f32 %v3116, 1.442695
      %v3270 = vpow.pop %v3269
      %v3271 = vmul.f32 %v3117, 1.442695
      %v3272 = vpow.pop %v3271
      %v3273 = vmul.f32 %v3118, 1.442695
      %v3274 = vpow.pop %v3273
      %v3275 = vmul.f32 %v3119, 1.442695
      %v3276 = vpow.pop %v3275
      %v3277 = vmul.f32 %v3120, 1.442695
      %v3278 = vpow.pop %v3277
      %v3279 = vmul.f32 %v3121, 1.442695
      %v3280 = vpow.pop %v3279
      %v3281 = vmul.f32 %v3122, 1.442695
      %v3282 = vpow.pop %v3281
      %v3283 = vmul.f32 %v3123, 1.442695
      %v3284 = vpow.pop %v3283
      %v3285 = vmul.f32 %v3124, 1.442695
      %v3286 = vpow.pop %v3285
      %v3287 = vmul.f32 %v3125, 1.442695
      %v3288 = vpow.pop %v3287
      %v3289 = vmul.f32 %v3126, 1.442695
      %v3290 = vpow.pop %v3289
      %v3291 = vmul.f32 %v3127, 1.442695
      %v3292 = vpow.pop %v3291
      %v3293 = vmul.f32 %v3128, 1.442695
      %v3294 = vpow.pop %v3293
      %v3295 = vmul.f32 %v3129, 1.442695
      %v3296 = vpow.pop %v3295
      %v3297 = vmul.f32 %v3130, 1.442695
      %v3298 = vpow.pop %v3297
      %v3299 = vmul.f32 %v3131, 1.442695
      %v3300 = vpow.pop %v3299
      %v3301 = vmul.f32 %v3132, 1.442695
      %v3302 = vpow.pop %v3301
      %v3303 = vmul.f32 %v3133, 1.442695
      %v3304 = vpow.pop %v3303
      %v3305 = vmul.f32 %v3134, 1.442695
      %v3306 = vpow.pop %v3305
      %v3307 = vmul.f32 %v3135, 1.442695
      %v3308 = vpow.pop %v3307
      %v3309 = vmul.f32 %v3136, 1.442695
      %v3310 = vpow.pop %v3309
      %v3311 = vmul.f32 %v3137, 1.442695
      %v3312 = vpow.pop %v3311
      %v3313 = vmul.f32 %v3138, 1.442695
      %v3314 = vpow.pop %v3313
      %v3315 = vmul.f32 %v3139, 1.442695
      %v3316 = vpow.pop %v3315
      %v3317 = vmul.f32 %v3140, 1.442695
      %v3318 = vpow.pop %v3317
      %v3319 = vmul.f32 %v3141, 1.442695
      %v3320 = vpow.pop %v3319
      %v3321 = vmul.f32 %v3142, 1.442695
      %v3322 = vpow.pop %v3321
      %v3323 = vmul.f32 %v3143, 1.442695
      %v3324 = vpow.pop %v3323
      %v3325 = vmul.f32 %v3144, 1.442695
      %v3326 = vpow.pop %v3325
      %v3327 = vmul.f32 %v3145, 1.442695
      %v3328 = vpow.pop %v3327
      %v3329 = vmul.f32 %v3146, 1.442695
      %v3330 = vpow.pop %v3329
      %v3331 = vmul.f32 %v3147, 1.442695
      %v3332 = vpow.pop %v3331
      %v3333 = vmul.f32 %v3148, 1.442695
      %v3334 = vpow.pop %v3333
      %v3335 = vmul.f32 %v3149, 1.442695
      %v3336 = vpow.pop %v3335
      %v3337 = vmul.f32 %v3150, 1.442695
      %v3338 = vpow.pop %v3337
      %v3339 = vmul.f32 %v3151, 1.442695
      %v3340 = vpow.pop %v3339
      %v3341 = vmul.f32 %v3152, 1.442695
      %v3342 = vpow.pop %v3341
      %v3343 = vmul.f32 %v3153, 1.442695
      %v3344 = vpow.pop %v3343
      %v3345 = vmul.f32 %v3154, 1.442695
      %v3346 = vpow.pop %v3345
      %v3347 = vmul.f32 %v3155, 1.442695
      %v3348 = vpow.pop %v3347
      %v3349 = vmul.f32 %v3156, 1.442695
      %v3350 = vpow.pop %v3349
      %v3351 = vmul.f32 %v3157, 1.442695
      %v3352 = vpow.pop %v3351
      %v3353 = vmul.f32 %v3158, 1.442695
      %v3354 = vpow.pop %v3353
      %v3355 = vmul.f32 %v3159, 1.442695
      %v3356 = vpow.pop %v3355
      %v3357 = vmul.f32 %v3160, 1.442695
      %v3358 = vpow.pop %v3357
      %v3359 = vmul.f32 %v3161, 1.442695
      %v3360 = vpow.pop %v3359
      %v3361 = vmul.f32 %v3162, 1.442695
      %v3362 = vpow.pop %v3361
      %v3363 = vmul.f32 %v3163, 1.442695
      %v3364 = vpow.pop %v3363
      %v3365 = vmul.f32 %v3164, 1.442695
      %v3366 = vpow.pop %v3365
      %v3367 = vmul.f32 %v3165, 1.442695
      %v3368 = vpow.pop %v3367
      %v3369 = vmul.f32 %v3166, 1.442695
      %v3370 = vpow.pop %v3369
      %v3371 = vmul.f32 %v3167, 1.442695
      %v3372 = vpow.pop %v3371
      %v3373 = vmul.f32 %v3168, 1.442695
      %v3374 = vpow.pop %v3373
      %v3375 = vmul.f32 %v3169, 1.442695
      %v3376 = vpow.pop %v3375
      %v3377 = vmul.f32 %v3170, 1.442695
      %v3378 = vpow.pop %v3377
      %v3379 = vmul.f32 %v3171, 1.442695
      %v3380 = vpow.pop %v3379
      %v3381 = vmul.f32 %v3172, 1.442695
      %v3382 = vpow.pop %v3381
      %v3383 = vmul.f32 %v3173, 1.442695
      %v3384 = vpow.pop %v3383
      %v3385 = vmul.f32 %v3174, 1.442695
      %v3386 = vpow.pop %v3385
      %v3387 = vmul.f32 %v3175, 1.442695
      %v3388 = vpow.pop %v3387
      %v3389 = vmul.f32 %v3176, 1.442695
      %v3390 = vpow.pop %v3389
      %v3391 = vmul.f32 %v3177, 1.442695
      %v3392 = vpow.pop %v3391
      %v3393 = vmul.f32 %v3178, 1.442695
      %v3394 = vpow.pop %v3393
      %v3395 = vmul.f32 %v3179, 1.442695
      %v3396 = vpow.pop %v3395
      %v3397 = vmul.f32 %v3180, 1.442695
      %v3398 = vpow.pop %v3397
      %v3399 = vmul.f32 %v3181, 1.442695
      %v3400 = vpow.pop %v3399
      %v3401 = vmul.f32 %v3182, 1.442695
      %v3402 = vpow.pop %v3401
      %v3403 = vmul.f32 %v3183, 1.442695
      %v3404 = vpow.pop %v3403
      %v3405 = vmul.f32 %v3184, 1.442695
      %v3406 = vpow.pop %v3405
      %v3407 = vmul.f32 %v3185, 1.442695
      %v3408 = vpow.pop %v3407
      %v3409 = vmul.f32 %v3186, 1.442695
      %v3410 = vpow.pop %v3409
      %v3411 = vmul.f32 %v3187, 1.442695
      %v3412 = vpow.pop %v3411
      %v3413 = vmul.f32 %v3188, 1.442695
      %v3414 = vpow.pop %v3413
      %v3415 = vmul.f32 %v3189, 1.442695
      %v3416 = vpow.pop %v3415
      %v3417 = vmul.f32 %v3190, 1.442695
      %v3418 = vpow.pop %v3417
      %v3419 = vmul.f32 %v3191, 1.442695
      %v3420 = vpow.pop %v3419
      %v3421 = vmul.f32 %v3192, 1.442695
      %v3422 = vpow.pop %v3421
      %v3423 = vmul.f32 %v3193, 1.442695
      %v3424 = vpow.pop %v3423
      %v3425 = vmul.f32 %v3194, 1.442695
      %v3426 = vpow.pop %v3425
      %v3427 = vmul.f32 %v3195, 1.442695
      %v3428 = vpow.pop %v3427
      %v3429 = vmul.f32 %v3196, 1.442695
      %v3430 = vpow.pop %v3429
      %v3431 = vmul.f32 %v3197, 1.442695
      %v3432 = vpow.pop %v3431
      %v3433 = vmul.f32 %v3198, 1.442695
      %v3434 = vpow.pop %v3433
      %v3435 = vmul.f32 %v3199, 1.442695
      %v3436 = vpow.pop %v3435
      %v3437 = vmul.f32 %v3200, 1.442695
      %v3438 = vpow.pop %v3437
      %v3439 = vmul.f32 %v3201, 1.442695
      %v3440 = vpow.pop %v3439
      %v3441 = vmul.f32 %v3202, 1.442695
      %v3442 = vpow.pop %v3441
      %v3443 = vmul.f32 %v3203, 1.442695
      %v3444 = vpow.pop %v3443
      %v3445 = vmul.f32 %v3204, 1.442695
      %v3446 = vpow.pop %v3445
      %v3447 = vmul.f32 %v3205, 1.442695
      %v3448 = vpow.pop %v3447
      %v3449 = vmul.f32 %v3206, 1.442695
      %v3450 = vpow.pop %v3449
      %v3451 = vmul.f32 %v3207, 1.442695
      %v3452 = vpow.pop %v3451
      %v3453 = vmul.f32 %v3208, 1.442695
      %v3454 = vpow.pop %v3453
      %v3455 = vmul.f32 %v3209, 1.442695
      %v3456 = vpow.pop %v3455
      %v3457 = vmul.f32 %v3210, 1.442695
      %v3458 = vpow.pop %v3457
      %v3459 = vmul.f32 %v3211, 1.442695
      %v3460 = vpow.pop %v3459
      %v3461 = vmul.f32 %v3212, 1.442695
      %v3462 = vpow.pop %v3461
      %v3463 = vmul.f32 %v3213, 1.442695
      %v3464 = vpow.pop %v3463
      %v3465 = vmul.f32 %v3214, 1.442695
      %v3466 = vpow.pop %v3465
      %v3467 = vmul.f32 %v3215, 1.442695
      %v3468 = vpow.pop %v3467
      %v3469 = vmul.f32 %v3216, 1.442695
      %v3470 = vpow.pop %v3469
      %v3471 = vmul.f32 %v3217, 1.442695
      %v3472 = vpow.pop %v3471
      %v3473 = vmul.f32 %v3218, 1.442695
      %v3474 = vpow.pop %v3473
      %v3475 = vadd.f32 %v3220, 1.0
      %v3476 = vadd.f32 %v3222, 1.0
      %v3477 = vadd.f32 %v3224, 1.0
      %v3478 = vadd.f32 %v3226, 1.0
      %v3479 = vadd.f32 %v3228, 1.0
      %v3480 = vadd.f32 %v3230, 1.0
      %v3481 = vadd.f32 %v3232, 1.0
      %v3482 = vadd.f32 %v3234, 1.0
      %v3483 = vadd.f32 %v3236, 1.0
      %v3484 = vadd.f32 %v3238, 1.0
      %v3485 = vadd.f32 %v3240, 1.0
      %v3486 = vadd.f32 %v3242, 1.0
      %v3487 = vadd.f32 %v3244, 1.0
      %v3488 = vadd.f32 %v3246, 1.0
      %v3489 = vadd.f32 %v3248, 1.0
      %v3490 = vadd.f32 %v3250, 1.0
      %v3491 = vadd.f32 %v3252, 1.0
      %v3492 = vadd.f32 %v3254, 1.0
      %v3493 = vadd.f32 %v3256, 1.0
      %v3494 = vadd.f32 %v3258, 1.0
      %v3495 = vadd.f32 %v3260, 1.0
      %v3496 = vadd.f32 %v3262, 1.0
      %v3497 = vadd.f32 %v3264, 1.0
      %v3498 = vadd.f32 %v3266, 1.0
      %v3499 = vadd.f32 %v3268, 1.0
      %v3500 = vadd.f32 %v3270, 1.0
      %v3501 = vadd.f32 %v3272, 1.0
      %v3502 = vadd.f32 %v3274, 1.0
      %v3503 = vadd.f32 %v3276, 1.0
      %v3504 = vadd.f32 %v3278, 1.0
      %v3505 = vadd.f32 %v3280, 1.0
      %v3506 = vadd.f32 %v3282, 1.0
      %v3507 = vadd.f32 %v3284, 1.0
      %v3508 = vadd.f32 %v3286, 1.0
      %v3509 = vadd.f32 %v3288, 1.0
      %v3510 = vadd.f32 %v3290, 1.0
      %v3511 = vadd.f32 %v3292, 1.0
      %v3512 = vadd.f32 %v3294, 1.0
      %v3513 = vadd.f32 %v3296, 1.0
      %v3514 = vadd.f32 %v3298, 1.0
      %v3515 = vadd.f32 %v3300, 1.0
      %v3516 = vadd.f32 %v3302, 1.0
      %v3517 = vadd.f32 %v3304, 1.0
      %v3518 = vadd.f32 %v3306, 1.0
      %v3519 = vadd.f32 %v3308, 1.0
      %v3520 = vadd.f32 %v3310, 1.0
      %v3521 = vadd.f32 %v3312, 1.0
      %v3522 = vadd.f32 %v3314, 1.0
      %v3523 = vadd.f32 %v3316, 1.0
      %v3524 = vadd.f32 %v3318, 1.0
      %v3525 = vadd.f32 %v3320, 1.0
      %v3526 = vadd.f32 %v3322, 1.0
      %v3527 = vadd.f32 %v3324, 1.0
      %v3528 = vadd.f32 %v3326, 1.0
      %v3529 = vadd.f32 %v3328, 1.0
      %v3530 = vadd.f32 %v3330, 1.0
      %v3531 = vadd.f32 %v3332, 1.0
      %v3532 = vadd.f32 %v3334, 1.0
      %v3533 = vadd.f32 %v3336, 1.0
      %v3534 = vadd.f32 %v3338, 1.0
      %v3535 = vadd.f32 %v3340, 1.0
      %v3536 = vadd.f32 %v3342, 1.0
      %v3537 = vadd.f32 %v3344, 1.0
      %v3538 = vadd.f32 %v3346, 1.0
      %v3539 = vadd.f32 %v3348, 1.0
      %v3540 = vadd.f32 %v3350, 1.0
      %v3541 = vadd.f32 %v3352, 1.0
      %v3542 = vadd.f32 %v3354, 1.0
      %v3543 = vadd.f32 %v3356, 1.0
      %v3544 = vadd.f32 %v3358, 1.0
      %v3545 = vadd.f32 %v3360, 1.0
      %v3546 = vadd.f32 %v3362, 1.0
      %v3547 = vadd.f32 %v3364, 1.0
      %v3548 = vadd.f32 %v3366, 1.0
      %v3549 = vadd.f32 %v3368, 1.0
      %v3550 = vadd.f32 %v3370, 1.0
      %v3551 = vadd.f32 %v3372, 1.0
      %v3552 = vadd.f32 %v3374, 1.0
      %v3553 = vadd.f32 %v3376, 1.0
      %v3554 = vadd.f32 %v3378, 1.0
      %v3555 = vadd.f32 %v3380, 1.0
      %v3556 = vadd.f32 %v3382, 1.0
      %v3557 = vadd.f32 %v3384, 1.0
      %v3558 = vadd.f32 %v3386, 1.0
      %v3559 = vadd.f32 %v3388, 1.0
      %v3560 = vadd.f32 %v3390, 1.0
      %v3561 = vadd.f32 %v3392, 1.0
      %v3562 = vadd.f32 %v3394, 1.0
      %v3563 = vadd.f32 %v3396, 1.0
      %v3564 = vadd.f32 %v3398, 1.0
      %v3565 = vadd.f32 %v3400, 1.0
      %v3566 = vadd.f32 %v3402, 1.0
      %v3567 = vadd.f32 %v3404, 1.0
      %v3568 = vadd.f32 %v3406, 1.0
      %v3569 = vadd.f32 %v3408, 1.0
      %v3570 = vadd.f32 %v3410, 1.0
      %v3571 = vadd.f32 %v3412, 1.0
      %v3572 = vadd.f32 %v3414, 1.0
      %v3573 = vadd.f32 %v3416, 1.0
      %v3574 = vadd.f32 %v3418, 1.0
      %v3575 = vadd.f32 %v3420, 1.0
      %v3576 = vadd.f32 %v3422, 1.0
      %v3577 = vadd.f32 %v3424, 1.0
      %v3578 = vadd.f32 %v3426, 1.0
      %v3579 = vadd.f32 %v3428, 1.0
      %v3580 = vadd.f32 %v3430, 1.0
      %v3581 = vadd.f32 %v3432, 1.0
      %v3582 = vadd.f32 %v3434, 1.0
      %v3583 = vadd.f32 %v3436, 1.0
      %v3584 = vadd.f32 %v3438, 1.0
      %v3585 = vadd.f32 %v3440, 1.0
      %v3586 = vadd.f32 %v3442, 1.0
      %v3587 = vadd.f32 %v3444, 1.0
      %v3588 = vadd.f32 %v3446, 1.0
      %v3589 = vadd.f32 %v3448, 1.0
      %v3590 = vadd.f32 %v3450, 1.0
      %v3591 = vadd.f32 %v3452, 1.0
      %v3592 = vadd.f32 %v3454, 1.0
      %v3593 = vadd.f32 %v3456, 1.0
      %v3594 = vadd.f32 %v3458, 1.0
      %v3595 = vadd.f32 %v3460, 1.0
      %v3596 = vadd.f32 %v3462, 1.0
      %v3597 = vadd.f32 %v3464, 1.0
      %v3598 = vadd.f32 %v3466, 1.0
      %v3599 = vadd.f32 %v3468, 1.0
      %v3600 = vadd.f32 %v3470, 1.0
      %v3601 = vadd.f32 %v3472, 1.0
      %v3602 = vadd.f32 %v3474, 1.0
      %v3603 = vrcp.pop %v3475
      %v3604 = vmul.f32 1.0, %v3603
      %v3605 = vrcp.pop %v3476
      %v3606 = vmul.f32 1.0, %v3605
      %v3607 = vrcp.pop %v3477
      %v3608 = vmul.f32 1.0, %v3607
      %v3609 = vrcp.pop %v3478
      %v3610 = vmul.f32 1.0, %v3609
      %v3611 = vrcp.pop %v3479
      %v3612 = vmul.f32 1.0, %v3611
      %v3613 = vrcp.pop %v3480
      %v3614 = vmul.f32 1.0, %v3613
      %v3615 = vrcp.pop %v3481
      %v3616 = vmul.f32 1.0, %v3615
      %v3617 = vrcp.pop %v3482
      %v3618 = vmul.f32 1.0, %v3617
      %v3619 = vrcp.pop %v3483
      %v3620 = vmul.f32 1.0, %v3619
      %v3621 = vrcp.pop %v3484
      %v3622 = vmul.f32 1.0, %v3621
      %v3623 = vrcp.pop %v3485
      %v3624 = vmul.f32 1.0, %v3623
      %v3625 = vrcp.pop %v3486
      %v3626 = vmul.f32 1.0, %v3625
      %v3627 = vrcp.pop %v3487
      %v3628 = vmul.f32 1.0, %v3627
      %v3629 = vrcp.pop %v3488
      %v3630 = vmul.f32 1.0, %v3629
      %v3631 = vrcp.pop %v3489
      %v3632 = vmul.f32 1.0, %v3631
      %v3633 = vrcp.pop %v3490
      %v3634 = vmul.f32 1.0, %v3633
      %v3635 = vrcp.pop %v3491
      %v3636 = vmul.f32 1.0, %v3635
      %v3637 = vrcp.pop %v3492
      %v3638 = vmul.f32 1.0, %v3637
      %v3639 = vrcp.pop %v3493
      %v3640 = vmul.f32 1.0, %v3639
      %v3641 = vrcp.pop %v3494
      %v3642 = vmul.f32 1.0, %v3641
      %v3643 = vrcp.pop %v3495
      %v3644 = vmul.f32 1.0, %v3643
      %v3645 = vrcp.pop %v3496
      %v3646 = vmul.f32 1.0, %v3645
      %v3647 = vrcp.pop %v3497
      %v3648 = vmul.f32 1.0, %v3647
      %v3649 = vrcp.pop %v3498
      %v3650 = vmul.f32 1.0, %v3649
      %v3651 = vrcp.pop %v3499
      %v3652 = vmul.f32 1.0, %v3651
      %v3653 = vrcp.pop %v3500
      %v3654 = vmul.f32 1.0, %v3653
      %v3655 = vrcp.pop %v3501
      %v3656 = vmul.f32 1.0, %v3655
      %v3657 = vrcp.pop %v3502
      %v3658 = vmul.f32 1.0, %v3657
      %v3659 = vrcp.pop %v3503
      %v3660 = vmul.f32 1.0, %v3659
      %v3661 = vrcp.pop %v3504
      %v3662 = vmul.f32 1.0, %v3661
      %v3663 = vrcp.pop %v3505
      %v3664 = vmul.f32 1.0, %v3663
      %v3665 = vrcp.pop %v3506
      %v3666 = vmul.f32 1.0, %v3665
      %v3667 = vrcp.pop %v3507
      %v3668 = vmul.f32 1.0, %v3667
      %v3669 = vrcp.pop %v3508
      %v3670 = vmul.f32 1.0, %v3669
      %v3671 = vrcp.pop %v3509
      %v3672 = vmul.f32 1.0, %v3671
      %v3673 = vrcp.pop %v3510
      %v3674 = vmul.f32 1.0, %v3673
      %v3675 = vrcp.pop %v3511
      %v3676 = vmul.f32 1.0, %v3675
      %v3677 = vrcp.pop %v3512
      %v3678 = vmul.f32 1.0, %v3677
      %v3679 = vrcp.pop %v3513
      %v3680 = vmul.f32 1.0, %v3679
      %v3681 = vrcp.pop %v3514
      %v3682 = vmul.f32 1.0, %v3681
      %v3683 = vrcp.pop %v3515
      %v3684 = vmul.f32 1.0, %v3683
      %v3685 = vrcp.pop %v3516
      %v3686 = vmul.f32 1.0, %v3685
      %v3687 = vrcp.pop %v3517
      %v3688 = vmul.f32 1.0, %v3687
      %v3689 = vrcp.pop %v3518
      %v3690 = vmul.f32 1.0, %v3689
      %v3691 = vrcp.pop %v3519
      %v3692 = vmul.f32 1.0, %v3691
      %v3693 = vrcp.pop %v3520
      %v3694 = vmul.f32 1.0, %v3693
      %v3695 = vrcp.pop %v3521
      %v3696 = vmul.f32 1.0, %v3695
      %v3697 = vrcp.pop %v3522
      %v3698 = vmul.f32 1.0, %v3697
      %v3699 = vrcp.pop %v3523
      %v3700 = vmul.f32 1.0, %v3699
      %v3701 = vrcp.pop %v3524
      %v3702 = vmul.f32 1.0, %v3701
      %v3703 = vrcp.pop %v3525
      %v3704 = vmul.f32 1.0, %v3703
      %v3705 = vrcp.pop %v3526
      %v3706 = vmul.f32 1.0, %v3705
      %v3707 = vrcp.pop %v3527
      %v3708 = vmul.f32 1.0, %v3707
      %v3709 = vrcp.pop %v3528
      %v3710 = vmul.f32 1.0, %v3709
      %v3711 = vrcp.pop %v3529
      %v3712 = vmul.f32 1.0, %v3711
      %v3713 = vrcp.pop %v3530
      %v3714 = vmul.f32 1.0, %v3713
      %v3715 = vrcp.pop %v3531
      %v3716 = vmul.f32 1.0, %v3715
      %v3717 = vrcp.pop %v3532
      %v3718 = vmul.f32 1.0, %v3717
      %v3719 = vrcp.pop %v3533
      %v3720 = vmul.f32 1.0, %v3719
      %v3721 = vrcp.pop %v3534
      %v3722 = vmul.f32 1.0, %v3721
      %v3723 = vrcp.pop %v3535
      %v3724 = vmul.f32 1.0, %v3723
      %v3725 = vrcp.pop %v3536
      %v3726 = vmul.f32 1.0, %v3725
      %v3727 = vrcp.pop %v3537
      %v3728 = vmul.f32 1.0, %v3727
      %v3729 = vrcp.pop %v3538
      %v3730 = vmul.f32 1.0, %v3729
      %v3731 = vrcp.pop %v3539
      %v3732 = vmul.f32 1.0, %v3731
      %v3733 = vrcp.pop %v3540
      %v3734 = vmul.f32 1.0, %v3733
      %v3735 = vrcp.pop %v3541
      %v3736 = vmul.f32 1.0, %v3735
      %v3737 = vrcp.pop %v3542
      %v3738 = vmul.f32 1.0, %v3737
      %v3739 = vrcp.pop %v3543
      %v3740 = vmul.f32 1.0, %v3739
      %v3741 = vrcp.pop %v3544
      %v3742 = vmul.f32 1.0, %v3741
      %v3743 = vrcp.pop %v3545
      %v3744 = vmul.f32 1.0, %v3743
      %v3745 = vrcp.pop %v3546
      %v3746 = vmul.f32 1.0, %v3745
      %v3747 = vrcp.pop %v3547
      %v3748 = vmul.f32 1.0, %v3747
      %v3749 = vrcp.pop %v3548
      %v3750 = vmul.f32 1.0, %v3749
      %v3751 = vrcp.pop %v3549
      %v3752 = vmul.f32 1.0, %v3751
      %v3753 = vrcp.pop %v3550
      %v3754 = vmul.f32 1.0, %v3753
      %v3755 = vrcp.pop %v3551
      %v3756 = vmul.f32 1.0, %v3755
      %v3757 = vrcp.pop %v3552
      %v3758 = vmul.f32 1.0, %v3757
      %v3759 = vrcp.pop %v3553
      %v3760 = vmul.f32 1.0, %v3759
      %v3761 = vrcp.pop %v3554
      %v3762 = vmul.f32 1.0, %v3761
      %v3763 = vrcp.pop %v3555
      %v3764 = vmul.f32 1.0, %v3763
      %v3765 = vrcp.pop %v3556
      %v3766 = vmul.f32 1.0, %v3765
      %v3767 = vrcp.pop %v3557
      %v3768 = vmul.f32 1.0, %v3767
      %v3769 = vrcp.pop %v3558
      %v3770 = vmul.f32 1.0, %v3769
      %v3771 = vrcp.pop %v3559
      %v3772 = vmul.f32 1.0, %v3771
      %v3773 = vrcp.pop %v3560
      %v3774 = vmul.f32 1.0, %v3773
      %v3775 = vrcp.pop %v3561
      %v3776 = vmul.f32 1.0, %v3775
      %v3777 = vrcp.pop %v3562
      %v3778 = vmul.f32 1.0, %v3777
      %v3779 = vrcp.pop %v3563
      %v3780 = vmul.f32 1.0, %v3779
      %v3781 = vrcp.pop %v3564
      %v3782 = vmul.f32 1.0, %v3781
      %v3783 = vrcp.pop %v3565
      %v3784 = vmul.f32 1.0, %v3783
      %v3785 = vrcp.pop %v3566
      %v3786 = vmul.f32 1.0, %v3785
      %v3787 = vrcp.pop %v3567
      %v3788 = vmul.f32 1.0, %v3787
      %v3789 = vrcp.pop %v3568
      %v3790 = vmul.f32 1.0, %v3789
      %v3791 = vrcp.pop %v3569
      %v3792 = vmul.f32 1.0, %v3791
      %v3793 = vrcp.pop %v3570
      %v3794 = vmul.f32 1.0, %v3793
      %v3795 = vrcp.pop %v3571
      %v3796 = vmul.f32 1.0, %v3795
      %v3797 = vrcp.pop %v3572
      %v3798 = vmul.f32 1.0, %v3797
      %v3799 = vrcp.pop %v3573
      %v3800 = vmul.f32 1.0, %v3799
      %v3801 = vrcp.pop %v3574
      %v3802 = vmul.f32 1.0, %v3801
      %v3803 = vrcp.pop %v3575
      %v3804 = vmul.f32 1.0, %v3803
      %v3805 = vrcp.pop %v3576
      %v3806 = vmul.f32 1.0, %v3805
      %v3807 = vrcp.pop %v3577
      %v3808 = vmul.f32 1.0, %v3807
      %v3809 = vrcp.pop %v3578
      %v3810 = vmul.f32 1.0, %v3809
      %v3811 = vrcp.pop %v3579
      %v3812 = vmul.f32 1.0, %v3811
      %v3813 = vrcp.pop %v3580
      %v3814 = vmul.f32 1.0, %v3813
      %v3815 = vrcp.pop %v3581
      %v3816 = vmul.f32 1.0, %v3815
      %v3817 = vrcp.pop %v3582
      %v3818 = vmul.f32 1.0, %v3817
      %v3819 = vrcp.pop %v3583
      %v3820 = vmul.f32 1.0, %v3819
      %v3821 = vrcp.pop %v3584
      %v3822 = vmul.f32 1.0, %v3821
      %v3823 = vrcp.pop %v3585
      %v3824 = vmul.f32 1.0, %v3823
      %v3825 = vrcp.pop %v3586
      %v3826 = vmul.f32 1.0, %v3825
      %v3827 = vrcp.pop %v3587
      %v3828 = vmul.f32 1.0, %v3827
      %v3829 = vrcp.pop %v3588
      %v3830 = vmul.f32 1.0, %v3829
      %v3831 = vrcp.pop %v3589
      %v3832 = vmul.f32 1.0, %v3831
      %v3833 = vrcp.pop %v3590
      %v3834 = vmul.f32 1.0, %v3833
      %v3835 = vrcp.pop %v3591
      %v3836 = vmul.f32 1.0, %v3835
      %v3837 = vrcp.pop %v3592
      %v3838 = vmul.f32 1.0, %v3837
      %v3839 = vrcp.pop %v3593
      %v3840 = vmul.f32 1.0, %v3839
      %v3841 = vrcp.pop %v3594
      %v3842 = vmul.f32 1.0, %v3841
      %v3843 = vrcp.pop %v3595
      %v3844 = vmul.f32 1.0, %v3843
      %v3845 = vrcp.pop %v3596
      %v3846 = vmul.f32 1.0, %v3845
      %v3847 = vrcp.pop %v3597
      %v3848 = vmul.f32 1.0, %v3847
      %v3849 = vrcp.pop %v3598
      %v3850 = vmul.f32 1.0, %v3849
      %v3851 = vrcp.pop %v3599
      %v3852 = vmul.f32 1.0, %v3851
      %v3853 = vrcp.pop %v3600
      %v3854 = vmul.f32 1.0, %v3853
      %v3855 = vrcp.pop %v3601
      %v3856 = vmul.f32 1.0, %v3855
      %v3857 = vrcp.pop %v3602
      %v3858 = vmul.f32 1.0, %v3857
      %v3859 = vmul.f32 %v2963, %v3604
      %v3860 = vmul.f32 %v2964, %v3606
      %v3861 = vmul.f32 %v2965, %v3608
      %v3862 = vmul.f32 %v2966, %v3610
      %v3863 = vmul.f32 %v2967, %v3612
      %v3864 = vmul.f32 %v2968, %v3614
      %v3865 = vmul.f32 %v2969, %v3616
      %v3866 = vmul.f32 %v2970, %v3618
      %v3867 = vmul.f32 %v2971, %v3620
      %v3868 = vmul.f32 %v2972, %v3622
      %v3869 = vmul.f32 %v2973, %v3624
      %v3870 = vmul.f32 %v2974, %v3626
      %v3871 = vmul.f32 %v2975, %v3628
      %v3872 = vmul.f32 %v2976, %v3630
      %v3873 = vmul.f32 %v2977, %v3632
      %v3874 = vmul.f32 %v2978, %v3634
      %v3875 = vmul.f32 %v2979, %v3636
      %v3876 = vmul.f32 %v2980, %v3638
      %v3877 = vmul.f32 %v2981, %v3640
      %v3878 = vmul.f32 %v2982, %v3642
      %v3879 = vmul.f32 %v2983, %v3644
      %v3880 = vmul.f32 %v2984, %v3646
      %v3881 = vmul.f32 %v2985, %v3648
      %v3882 = vmul.f32 %v2986, %v3650
      %v3883 = vmul.f32 %v2987, %v3652
      %v3884 = vmul.f32 %v2988, %v3654
      %v3885 = vmul.f32 %v2989, %v3656
      %v3886 = vmul.f32 %v2990, %v3658
      %v3887 = vmul.f32 %v2991, %v3660
      %v3888 = vmul.f32 %v2992, %v3662
      %v3889 = vmul.f32 %v2993, %v3664
      %v3890 = vmul.f32 %v2994, %v3666
      %v3891 = vmul.f32 %v2995, %v3668
      %v3892 = vmul.f32 %v2996, %v3670
      %v3893 = vmul.f32 %v2997, %v3672
      %v3894 = vmul.f32 %v2998, %v3674
      %v3895 = vmul.f32 %v2999, %v3676
      %v3896 = vmul.f32 %v3000, %v3678
      %v3897 = vmul.f32 %v3001, %v3680
      %v3898 = vmul.f32 %v3002, %v3682
      %v3899 = vmul.f32 %v3003, %v3684
      %v3900 = vmul.f32 %v3004, %v3686
      %v3901 = vmul.f32 %v3005, %v3688
      %v3902 = vmul.f32 %v3006, %v3690
      %v3903 = vmul.f32 %v3007, %v3692
      %v3904 = vmul.f32 %v3008, %v3694
      %v3905 = vmul.f32 %v3009, %v3696
      %v3906 = vmul.f32 %v3010, %v3698
      %v3907 = vmul.f32 %v3011, %v3700
      %v3908 = vmul.f32 %v3012, %v3702
      %v3909 = vmul.f32 %v3013, %v3704
      %v3910 = vmul.f32 %v3014, %v3706
      %v3911 = vmul.f32 %v3015, %v3708
      %v3912 = vmul.f32 %v3016, %v3710
      %v3913 = vmul.f32 %v3017, %v3712
      %v3914 = vmul.f32 %v3018, %v3714
      %v3915 = vmul.f32 %v3019, %v3716
      %v3916 = vmul.f32 %v3020, %v3718
      %v3917 = vmul.f32 %v3021, %v3720
      %v3918 = vmul.f32 %v3022, %v3722
      %v3919 = vmul.f32 %v3023, %v3724
      %v3920 = vmul.f32 %v3024, %v3726
      %v3921 = vmul.f32 %v3025, %v3728
      %v3922 = vmul.f32 %v3026, %v3730
      %v3923 = vmul.f32 %v3027, %v3732
      %v3924 = vmul.f32 %v3028, %v3734
      %v3925 = vmul.f32 %v3029, %v3736
      %v3926 = vmul.f32 %v3030, %v3738
      %v3927 = vmul.f32 %v3031, %v3740
      %v3928 = vmul.f32 %v3032, %v3742
      %v3929 = vmul.f32 %v3033, %v3744
      %v3930 = vmul.f32 %v3034, %v3746
      %v3931 = vmul.f32 %v3035, %v3748
      %v3932 = vmul.f32 %v3036, %v3750
      %v3933 = vmul.f32 %v3037, %v3752
      %v3934 = vmul.f32 %v3038, %v3754
      %v3935 = vmul.f32 %v3039, %v3756
      %v3936 = vmul.f32 %v3040, %v3758
      %v3937 = vmul.f32 %v3041, %v3760
      %v3938 = vmul.f32 %v3042, %v3762
      %v3939 = vmul.f32 %v3043, %v3764
      %v3940 = vmul.f32 %v3044, %v3766
      %v3941 = vmul.f32 %v3045, %v3768
      %v3942 = vmul.f32 %v3046, %v3770
      %v3943 = vmul.f32 %v3047, %v3772
      %v3944 = vmul.f32 %v3048, %v3774
      %v3945 = vmul.f32 %v3049, %v3776
      %v3946 = vmul.f32 %v3050, %v3778
      %v3947 = vmul.f32 %v3051, %v3780
      %v3948 = vmul.f32 %v3052, %v3782
      %v3949 = vmul.f32 %v3053, %v3784
      %v3950 = vmul.f32 %v3054, %v3786
      %v3951 = vmul.f32 %v3055, %v3788
      %v3952 = vmul.f32 %v3056, %v3790
      %v3953 = vmul.f32 %v3057, %v3792
      %v3954 = vmul.f32 %v3058, %v3794
      %v3955 = vmul.f32 %v3059, %v3796
      %v3956 = vmul.f32 %v3060, %v3798
      %v3957 = vmul.f32 %v3061, %v3800
      %v3958 = vmul.f32 %v3062, %v3802
      %v3959 = vmul.f32 %v3063, %v3804
      %v3960 = vmul.f32 %v3064, %v3806
      %v3961 = vmul.f32 %v3065, %v3808
      %v3962 = vmul.f32 %v3066, %v3810
      %v3963 = vmul.f32 %v3067, %v3812
      %v3964 = vmul.f32 %v3068, %v3814
      %v3965 = vmul.f32 %v3069, %v3816
      %v3966 = vmul.f32 %v3070, %v3818
      %v3967 = vmul.f32 %v3071, %v3820
      %v3968 = vmul.f32 %v3072, %v3822
      %v3969 = vmul.f32 %v3073, %v3824
      %v3970 = vmul.f32 %v3074, %v3826
      %v3971 = vmul.f32 %v3075, %v3828
      %v3972 = vmul.f32 %v3076, %v3830
      %v3973 = vmul.f32 %v3077, %v3832
      %v3974 = vmul.f32 %v3078, %v3834
      %v3975 = vmul.f32 %v3079, %v3836
      %v3976 = vmul.f32 %v3080, %v3838
      %v3977 = vmul.f32 %v3081, %v3840
      %v3978 = vmul.f32 %v3082, %v3842
      %v3979 = vmul.f32 %v3083, %v3844
      %v3980 = vmul.f32 %v3084, %v3846
      %v3981 = vmul.f32 %v3085, %v3848
      %v3982 = vmul.f32 %v3086, %v3850
      %v3983 = vmul.f32 %v3087, %v3852
      %v3984 = vmul.f32 %v3088, %v3854
      %v3985 = vmul.f32 %v3089, %v3856
      %v3986 = vmul.f32 %v3090, %v3858
      %v3987 = vadd.f32 %v3859, %v343
      %v3988 = vadd.f32 %v3860, %v344
      %v3989 = vadd.f32 %v3861, %v345
      %v3990 = vadd.f32 %v3862, %v346
      %v3991 = vadd.f32 %v3863, %v347
      %v3992 = vadd.f32 %v3864, %v348
      %v3993 = vadd.f32 %v3865, %v349
      %v3994 = vadd.f32 %v3866, %v350
      %v3995 = vadd.f32 %v3867, %v351
      %v3996 = vadd.f32 %v3868, %v352
      %v3997 = vadd.f32 %v3869, %v353
      %v3998 = vadd.f32 %v3870, %v354
      %v3999 = vadd.f32 %v3871, %v355
      %v4000 = vadd.f32 %v3872, %v356
      %v4001 = vadd.f32 %v3873, %v357
      %v4002 = vadd.f32 %v3874, %v358
      %v4003 = vadd.f32 %v3875, %v359
      %v4004 = vadd.f32 %v3876, %v360
      %v4005 = vadd.f32 %v3877, %v361
      %v4006 = vadd.f32 %v3878, %v362
      %v4007 = vadd.f32 %v3879, %v363
      %v4008 = vadd.f32 %v3880, %v364
      %v4009 = vadd.f32 %v3881, %v365
      %v4010 = vadd.f32 %v3882, %v366
      %v4011 = vadd.f32 %v3883, %v367
      %v4012 = vadd.f32 %v3884, %v368
      %v4013 = vadd.f32 %v3885, %v369
      %v4014 = vadd.f32 %v3886, %v370
      %v4015 = vadd.f32 %v3887, %v371
      %v4016 = vadd.f32 %v3888, %v372
      %v4017 = vadd.f32 %v3889, %v373
      %v4018 = vadd.f32 %v3890, %v374
      %v4019 = vadd.f32 %v3891, %v375
      %v4020 = vadd.f32 %v3892, %v376
      %v4021 = vadd.f32 %v3893, %v377
      %v4022 = vadd.f32 %v3894, %v378
      %v4023 = vadd.f32 %v3895, %v379
      %v4024 = vadd.f32 %v3896, %v380
      %v4025 = vadd.f32 %v3897, %v381
      %v4026 = vadd.f32 %v3898, %v382
      %v4027 = vadd.f32 %v3899, %v383
      %v4028 = vadd.f32 %v3900, %v384
      %v4029 = vadd.f32 %v3901, %v385
      %v4030 = vadd.f32 %v3902, %v386
      %v4031 = vadd.f32 %v3903, %v387
      %v4032 = vadd.f32 %v3904, %v388
      %v4033 = vadd.f32 %v3905, %v389
      %v4034 = vadd.f32 %v3906, %v390
      %v4035 = vadd.f32 %v3907, %v391
      %v4036 = vadd.f32 %v3908, %v392
      %v4037 = vadd.f32 %v3909, %v393
      %v4038 = vadd.f32 %v3910, %v394
      %v4039 = vadd.f32 %v3911, %v395
      %v4040 = vadd.f32 %v3912, %v396
      %v4041 = vadd.f32 %v3913, %v397
      %v4042 = vadd.f32 %v3914, %v398
      %v4043 = vadd.f32 %v3915, %v399
      %v4044 = vadd.f32 %v3916, %v400
      %v4045 = vadd.f32 %v3917, %v401
      %v4046 = vadd.f32 %v3918, %v402
      %v4047 = vadd.f32 %v3919, %v403
      %v4048 = vadd.f32 %v3920, %v404
      %v4049 = vadd.f32 %v3921, %v405
      %v4050 = vadd.f32 %v3922, %v406
      %v4051 = vadd.f32 %v3923, %v407
      %v4052 = vadd.f32 %v3924, %v408
      %v4053 = vadd.f32 %v3925, %v409
      %v4054 = vadd.f32 %v3926, %v410
      %v4055 = vadd.f32 %v3927, %v411
      %v4056 = vadd.f32 %v3928, %v412
      %v4057 = vadd.f32 %v3929, %v413
      %v4058 = vadd.f32 %v3930, %v414
      %v4059 = vadd.f32 %v3931, %v415
      %v4060 = vadd.f32 %v3932, %v416
      %v4061 = vadd.f32 %v3933, %v417
      %v4062 = vadd.f32 %v3934, %v418
      %v4063 = vadd.f32 %v3935, %v419
      %v4064 = vadd.f32 %v3936, %v420
      %v4065 = vadd.f32 %v3937, %v421
      %v4066 = vadd.f32 %v3938, %v422
      %v4067 = vadd.f32 %v3939, %v423
      %v4068 = vadd.f32 %v3940, %v424
      %v4069 = vadd.f32 %v3941, %v425
      %v4070 = vadd.f32 %v3942, %v426
      %v4071 = vadd.f32 %v3943, %v427
      %v4072 = vadd.f32 %v3944, %v428
      %v4073 = vadd.f32 %v3945, %v429
      %v4074 = vadd.f32 %v3946, %v430
      %v4075 = vadd.f32 %v3947, %v431
      %v4076 = vadd.f32 %v3948, %v432
      %v4077 = vadd.f32 %v3949, %v433
      %v4078 = vadd.f32 %v3950, %v434
      %v4079 = vadd.f32 %v3951, %v435
      %v4080 = vadd.f32 %v3952, %v436
      %v4081 = vadd.f32 %v3953, %v437
      %v4082 = vadd.f32 %v3954, %v438
      %v4083 = vadd.f32 %v3955, %v439
      %v4084 = vadd.f32 %v3956, %v440
      %v4085 = vadd.f32 %v3957, %v441
      %v4086 = vadd.f32 %v3958, %v442
      %v4087 = vadd.f32 %v3959, %v443
      %v4088 = vadd.f32 %v3960, %v444
      %v4089 = vadd.f32 %v3961, %v445
      %v4090 = vadd.f32 %v3962, %v446
      %v4091 = vadd.f32 %v3963, %v447
      %v4092 = vadd.f32 %v3964, %v448
      %v4093 = vadd.f32 %v3965, %v449
      %v4094 = vadd.f32 %v3966, %v450
      %v4095 = vadd.f32 %v3967, %v451
      %v4096 = vadd.f32 %v3968, %v452
      %v4097 = vadd.f32 %v3969, %v453
      %v4098 = vadd.f32 %v3970, %v454
      %v4099 = vadd.f32 %v3971, %v455
      %v4100 = vadd.f32 %v3972, %v456
      %v4101 = vadd.f32 %v3973, %v457
      %v4102 = vadd.f32 %v3974, %v458
      %v4103 = vadd.f32 %v3975, %v459
      %v4104 = vadd.f32 %v3976, %v460
      %v4105 = vadd.f32 %v3977, %v461
      %v4106 = vadd.f32 %v3978, %v462
      %v4107 = vadd.f32 %v3979, %v463
      %v4108 = vadd.f32 %v3980, %v464
      %v4109 = vadd.f32 %v3981, %v465
      %v4110 = vadd.f32 %v3982, %v466
      %v4111 = vadd.f32 %v3983, %v467
      %v4112 = vadd.f32 %v3984, %v468
      %v4113 = vadd.f32 %v3985, %v469
      %v4114 = vadd.f32 %v3986, %v470
      %4115 = vst [vmem:[%s341] sm:$0xff] %v3987
      %4116 = vst [vmem:[%s341 + $0x8] sm:$0xff] %v3988
      %4117 = vst [vmem:[%s341 + $0x10] sm:$0xff] %v3989
      %4118 = vst [vmem:[%s341 + $0x18] sm:$0xff] %v3990
      %4119 = vst [vmem:[%s341 + $0x20] sm:$0xff] %v3991
      %4120 = vst [vmem:[%s341 + $0x28] sm:$0xff] %v3992
      %4121 = vst [vmem:[%s341 + $0x30] sm:$0xff] %v3993
      %4122 = vst [vmem:[%s341 + $0x38] sm:$0xff] %v3994
      %4123 = vst [vmem:[%s341 + $0x40] sm:$0xff] %v3995
      %4124 = vst [vmem:[%s341 + $0x48] sm:$0xff] %v3996
      %4125 = vst [vmem:[%s341 + $0x50] sm:$0xff] %v3997
      %4126 = vst [vmem:[%s341 + $0x58] sm:$0xff] %v3998
      %4127 = vst [vmem:[%s341 + $0x60] sm:$0xff] %v3999
      %4128 = vst [vmem:[%s341 + $0x68] sm:$0xff] %v4000
      %4129 = vst [vmem:[%s341 + $0x70] sm:$0xff] %v4001
      %4130 = vst [vmem:[%s341 + $0x78] sm:$0xff] %v4002
      %4131 = vst [vmem:[%s341 + $0x80] sm:$0xff] %v4003
      %4132 = vst [vmem:[%s341 + $0x88] sm:$0xff] %v4004
      %4133 = vst [vmem:[%s341 + $0x90] sm:$0xff] %v4005
      %4134 = vst [vmem:[%s341 + $0x98] sm:$0xff] %v4006
      %4135 = vst [vmem:[%s341 + $0xa0] sm:$0xff] %v4007
      %4136 = vst [vmem:[%s341 + $0xa8] sm:$0xff] %v4008
      %4137 = vst [vmem:[%s341 + $0xb0] sm:$0xff] %v4009
      %4138 = vst [vmem:[%s341 + $0xb8] sm:$0xff] %v4010
      %4139 = vst [vmem:[%s341 + $0xc0] sm:$0xff] %v4011
      %4140 = vst [vmem:[%s341 + $0xc8] sm:$0xff] %v4012
      %4141 = vst [vmem:[%s341 + $0xd0] sm:$0xff] %v4013
      %4142 = vst [vmem:[%s341 + $0xd8] sm:$0xff] %v4014
      %4143 = vst [vmem:[%s341 + $0xe0] sm:$0xff] %v4015
      %4144 = vst [vmem:[%s341 + $0xe8] sm:$0xff] %v4016
      %4145 = vst [vmem:[%s341 + $0xf0] sm:$0xff] %v4017
      %4146 = vst [vmem:[%s341 + $0xf8] sm:$0xff] %v4018
      %4147 = vst [vmem:[%s341 + $0x100] sm:$0xff] %v4019
      %4148 = vst [vmem:[%s341 + $0x108] sm:$0xff] %v4020
      %4149 = vst [vmem:[%s341 + $0x110] sm:$0xff] %v4021
      %4150 = vst [vmem:[%s341 + $0x118] sm:$0xff] %v4022
      %4151 = vst [vmem:[%s341 + $0x120] sm:$0xff] %v4023
      %4152 = vst [vmem:[%s341 + $0x128] sm:$0xff] %v4024
      %4153 = vst [vmem:[%s341 + $0x130] sm:$0xff] %v4025
      %4154 = vst [vmem:[%s341 + $0x138] sm:$0xff] %v4026
      %4155 = vst [vmem:[%s341 + $0x140] sm:$0xff] %v4027
      %4156 = vst [vmem:[%s341 + $0x148] sm:$0xff] %v4028
      %4157 = vst [vmem:[%s341 + $0x150] sm:$0xff] %v4029
      %4158 = vst [vmem:[%s341 + $0x158] sm:$0xff] %v4030
      %4159 = vst [vmem:[%s341 + $0x160] sm:$0xff] %v4031
      %4160 = vst [vmem:[%s341 + $0x168] sm:$0xff] %v4032
      %4161 = vst [vmem:[%s341 + $0x170] sm:$0xff] %v4033
      %4162 = vst [vmem:[%s341 + $0x178] sm:$0xff] %v4034
      %4163 = vst [vmem:[%s341 + $0x180] sm:$0xff] %v4035
      %4164 = vst [vmem:[%s341 + $0x188] sm:$0xff] %v4036
      %4165 = vst [vmem:[%s341 + $0x190] sm:$0xff] %v4037
      %4166 = vst [vmem:[%s341 + $0x198] sm:$0xff] %v4038
      %4167 = vst [vmem:[%s341 + $0x1a0] sm:$0xff] %v4039
      %4168 = vst [vmem:[%s341 + $0x1a8] sm:$0xff] %v4040
      %4169 = vst [vmem:[%s341 + $0x1b0] sm:$0xff] %v4041
      %4170 = vst [vmem:[%s341 + $0x1b8] sm:$0xff] %v4042
      %4171 = vst [vmem:[%s341 + $0x1c0] sm:$0xff] %v4043
      %4172 = vst [vmem:[%s341 + $0x1c8] sm:$0xff] %v4044
      %4173 = vst [vmem:[%s341 + $0x1d0] sm:$0xff] %v4045
      %4174 = vst [vmem:[%s341 + $0x1d8] sm:$0xff] %v4046
      %4175 = vst [vmem:[%s341 + $0x1e0] sm:$0xff] %v4047
      %4176 = vst [vmem:[%s341 + $0x1e8] sm:$0xff] %v4048
      %4177 = vst [vmem:[%s341 + $0x1f0] sm:$0xff] %v4049
      %4178 = vst [vmem:[%s341 + $0x1f8] sm:$0xff] %v4050
      %4179 = vst [vmem:[%s341 + $0x200] sm:$0xff] %v4051
      %4180 = vst [vmem:[%s341 + $0x208] sm:$0xff] %v4052
      %4181 = vst [vmem:[%s341 + $0x210] sm:$0xff] %v4053
      %4182 = vst [vmem:[%s341 + $0x218] sm:$0xff] %v4054
      %4183 = vst [vmem:[%s341 + $0x220] sm:$0xff] %v4055
      %4184 = vst [vmem:[%s341 + $0x228] sm:$0xff] %v4056
      %4185 = vst [vmem:[%s341 + $0x230] sm:$0xff] %v4057
      %4186 = vst [vmem:[%s341 + $0x238] sm:$0xff] %v4058
      %4187 = vst [vmem:[%s341 + $0x240] sm:$0xff] %v4059
      %4188 = vst [vmem:[%s341 + $0x248] sm:$0xff] %v4060
      %4189 = vst [vmem:[%s341 + $0x250] sm:$0xff] %v4061
      %4190 = vst [vmem:[%s341 + $0x258] sm:$0xff] %v4062
      %4191 = vst [vmem:[%s341 + $0x260] sm:$0xff] %v4063
      %4192 = vst [vmem:[%s341 + $0x268] sm:$0xff] %v4064
      %4193 = vst [vmem:[%s341 + $0x270] sm:$0xff] %v4065
      %4194 = vst [vmem:[%s341 + $0x278] sm:$0xff] %v4066
      %4195 = vst [vmem:[%s341 + $0x280] sm:$0xff] %v4067
      %4196 = vst [vmem:[%s341 + $0x288] sm:$0xff] %v4068
      %4197 = vst [vmem:[%s341 + $0x290] sm:$0xff] %v4069
      %4198 = vst [vmem:[%s341 + $0x298] sm:$0xff] %v4070
      %4199 = vst [vmem:[%s341 + $0x2a0] sm:$0xff] %v4071
      %4200 = vst [vmem:[%s341 + $0x2a8] sm:$0xff] %v4072
      %4201 = vst [vmem:[%s341 + $0x2b0] sm:$0xff] %v4073
      %4202 = vst [vmem:[%s341 + $0x2b8] sm:$0xff] %v4074
      %4203 = vst [vmem:[%s341 + $0x2c0] sm:$0xff] %v4075
      %4204 = vst [vmem:[%s341 + $0x2c8] sm:$0xff] %v4076
      %4205 = vst [vmem:[%s341 + $0x2d0] sm:$0xff] %v4077
      %4206 = vst [vmem:[%s341 + $0x2d8] sm:$0xff] %v4078
      %4207 = vst [vmem:[%s341 + $0x2e0] sm:$0xff] %v4079
      %4208 = vst [vmem:[%s341 + $0x2e8] sm:$0xff] %v4080
      %4209 = vst [vmem:[%s341 + $0x2f0] sm:$0xff] %v4081
      %4210 = vst [vmem:[%s341 + $0x2f8] sm:$0xff] %v4082
      %4211 = vst [vmem:[%s341 + $0x300] sm:$0xff] %v4083
      %4212 = vst [vmem:[%s341 + $0x308] sm:$0xff] %v4084
      %4213 = vst [vmem:[%s341 + $0x310] sm:$0xff] %v4085
      %4214 = vst [vmem:[%s341 + $0x318] sm:$0xff] %v4086
      %4215 = vst [vmem:[%s341 + $0x320] sm:$0xff] %v4087
      %4216 = vst [vmem:[%s341 + $0x328] sm:$0xff] %v4088
      %4217 = vst [vmem:[%s341 + $0x330] sm:$0xff] %v4089
      %4218 = vst [vmem:[%s341 + $0x338] sm:$0xff] %v4090
      %4219 = vst [vmem:[%s341 + $0x340] sm:$0xff] %v4091
      %4220 = vst [vmem:[%s341 + $0x348] sm:$0xff] %v4092
      %4221 = vst [vmem:[%s341 + $0x350] sm:$0xff] %v4093
      %4222 = vst [vmem:[%s341 + $0x358] sm:$0xff] %v4094
      %4223 = vst [vmem:[%s341 + $0x360] sm:$0xff] %v4095
      %4224 = vst [vmem:[%s341 + $0x368] sm:$0xff] %v4096
      %4225 = vst [vmem:[%s341 + $0x370] sm:$0xff] %v4097
      %4226 = vst [vmem:[%s341 + $0x378] sm:$0xff] %v4098
      %4227 = vst [vmem:[%s341 + $0x380] sm:$0xff] %v4099
      %4228 = vst [vmem:[%s341 + $0x388] sm:$0xff] %v4100
      %4229 = vst [vmem:[%s341 + $0x390] sm:$0xff] %v4101
      %4230 = vst [vmem:[%s341 + $0x398] sm:$0xff] %v4102
      %4231 = vst [vmem:[%s341 + $0x3a0] sm:$0xff] %v4103
      %4232 = vst [vmem:[%s341 + $0x3a8] sm:$0xff] %v4104
      %4233 = vst [vmem:[%s341 + $0x3b0] sm:$0xff] %v4105
      %4234 = vst [vmem:[%s341 + $0x3b8] sm:$0xff] %v4106
      %4235 = vst [vmem:[%s341 + $0x3c0] sm:$0xff] %v4107
      %4236 = vst [vmem:[%s341 + $0x3c8] sm:$0xff] %v4108
      %4237 = vst [vmem:[%s341 + $0x3d0] sm:$0xff] %v4109
      %4238 = vst [vmem:[%s341 + $0x3d8] sm:$0xff] %v4110
      %4239 = vst [vmem:[%s341 + $0x3e0] sm:$0xff] %v4111
      %4240 = vst [vmem:[%s341 + $0x3e8] sm:$0xff] %v4112
      %4241 = vst [vmem:[%s341 + $0x3f0] sm:$0xff] %v4113
      %4242 = vst [vmem:[%s341 + $0x3f8] sm:$0xff] %v4114
      %s4243 = smul.u32 32, %s23
      %p4244 = scmp.lt.s32.totalorder %s4243, 127
      %s4245 = scalar_select %p4244, %s4243, 127
      %s4246 = smul.addr %s4245, 4
      %s4247 = smul.addr %s4246, 8
      %s4248 = scalar_lea.vmem %s6, %s4247
      // Predicated region
      $region41: #{_forward.1} parent=39 // pred_check
        %p4249 = pneg %p177
      $region42: #{_forward.1} parent=39 // pred_check_branch
        %4251 = sbr.rel (%p4249) target = $region44
      $region43: #{_forward.1} parent=39 // pred_region
        %s4252 = smul.u32 32, %s23
      $region44: #{_forward.1} parent=39 // pred_fallthru
        _
    $region40: #{_forward.1} parent=5 // pred_fallthru
      _
    %p4253 = scmp.le.s32.totalorder 2, %s18
    // Predicated region
    $region45: #{_forward.1} parent=5 // pred_check
      %p4254 = pneg %p4253
    $region46: #{_forward.1} parent=5 // pred_check_branch
      %4256 = sbr.rel (%p4254) target = $region48
    $region47: #{_forward.1} parent=5 // pred_region
      %s4257 = ssub.s32 %s18, 2
      // Predicated region
      $region49: #{_forward.1} parent=47 // pred_check
        %p4258 = pneg %p183
      $region50: #{_forward.1} parent=47 // pred_check_branch
        %4260 = sbr.rel (%p4258) target = $region52
      $region51: #{_forward.1} parent=47 // pred_region
        %s4261 = smul.u32 32, %s24
        %p4262 = scmp.lt.s32.totalorder %s4261, 127
        %s4263 = scalar_select %p4262, %s4261, 127
        %s4264 = smul.addr %s4263, 4
        %s4265 = smul.addr %s4264, 8
        %s4266 = scalar_lea.vmem %s6, %s4265
      $region52: #{_forward.1} parent=47 // pred_fallthru
        _
    $region48: #{_forward.1} parent=5 // pred_fallthru
      _
  $region6: #{_forward.1} parent=0 // loop_footer
    %s22 = sadd.s32 1, %s18
  $region7: #{_forward.1} parent=0 // loop_footer_branch
    %17 = sbr.rel target = $region3
  $region8: #{_forward.1} parent=0 // loop_exit
    _

</llo_original>
